<compile_context>
chip_gen: v7x
topology: tpu7x:2x2x1
jax: 0.10.0
libtpu: 0.0.40
codegen_flags: <defaults>
</compile_context>

<pallas_src>
import functools

import jax
import jax.numpy as jnp
from jax import lax
from jax.experimental import pallas as pl
from jax.experimental.pallas import tpu as pltpu

LEAKY_SLOPE = 0.2
BN_EPS = 1e-5

_LANE_TILE_CAP = 8192           # max lanes (M columns) per output tile
_TILE_VMEM_BUDGET = 24 << 20    # conservative per-kernel VMEM budget (v7x-safe)
_VMEM_LIMIT_FLOOR = 12 << 20
_VMEM_LIMIT_CEIL = 48 << 20


# ----------------------------------------------------------------------------
# Capability probe / tiling helpers
# ----------------------------------------------------------------------------
@functools.lru_cache(maxsize=None)
def _single_buffer_supported():
    """Probe once whether pipeline_mode=pl.Buffered(1) works on this install.

    Single-buffering the constant-index weight block reclaims VMEM (its index
    never changes, so double-buffering it is pure waste); fall back silently
    if the installed Pallas rejects it.
    """
    if not hasattr(pl, "Buffered"):
        return False
    try:
        def _probe_kernel(x_ref, o_ref):
            o_ref[...] = x_ref[...] + 1.0

        out = pl.pallas_call(
            _probe_kernel,
            out_shape=jax.ShapeDtypeStruct((8, 128), jnp.float32),
            grid=(2,),
            in_specs=[pl.BlockSpec((8, 128), lambda i: (0, 0),
                                   pipeline_mode=pl.Buffered(buffer_count=1))],
            out_specs=pl.BlockSpec((8, 128), lambda i: (0, 0)),
        )(jnp.zeros((8, 128), jnp.float32))
        jax.block_until_ready(out)
        return True
    except Exception:   # pragma: no cover - depends on jax / libtpu version
        return False


def _const_block_spec(shape, index_map):
    """BlockSpec for a block whose index never changes (resident weights)."""
    if _single_buffer_supported():
        return pl.BlockSpec(shape, index_map,
                            pipeline_mode=pl.Buffered(buffer_count=1))
    return pl.BlockSpec(shape, index_map)


def _pick_tile(m, lane_bytes, fixed_bytes,
               budget=_TILE_VMEM_BUDGET, cap=_LANE_TILE_CAP):
    """Largest lane tile tm with tm | m and lane_bytes*tm within the budget.

    `lane_bytes` must already include double-buffering factors.  Prefers
    128-aligned tiles (unmasked lane-dense stores); falls back to the largest
    plain divisor of m instead of one huge unpipelined block.
    """
    lane_bytes = max(int(lane_bytes), 1)
    avail = max(budget - int(fixed_bytes), 128 * lane_bytes)
    limit = int(min(cap, max(avail // lane_bytes, 1)))
    if m <= limit:
        return m                              # whole M as one full-array block
    t = (limit // 128) * 128
    while t >= 128:                           # 128-aligned divisor of m
        if m % t == 0:
            return t
        t -= 128
    for t in range(min(limit, m), 0, -1):     # unaligned fallback (still 2-deep)
        if m % t == 0:
            return t
    return m


def _vmem_limit(fixed_bytes, lane_bytes, tm):
    """Explicit scoped-VMEM limit: actual footprint + headroom, clamped so we
    never request more than every TPU generation can provide."""
    need = int(fixed_bytes + lane_bytes * tm)
    return int(min(max(int(need * 1.3) + (4 << 20), _VMEM_LIMIT_FLOOR),
                   _VMEM_LIMIT_CEIL))


# ----------------------------------------------------------------------------
# Pallas kernels
# ----------------------------------------------------------------------------
def _gemm_act_kernel(w_ref, p_ref, o_ref, *, act):
    """(C, K) @ (K, tm) -> (C, tm), lane-dense output, fused activation."""
    y = jnp.dot(w_ref[...], p_ref[...], preferred_element_type=jnp.float32)
    if act == "leaky":
        y = jnp.where(y > 0, y, LEAKY_SLOPE * y)
    elif act == "sigmoid":
        y = 1.0 / (1.0 + jnp.exp(-y))
    o_ref[...] = y.astype(o_ref.dtype)


def pallas_gemm_act(wmat, patches, act=None, out_dtype=jnp.bfloat16):
    """wmat: (Cout, K) bf16, patches: (K, M) bf16 -> (Cout, M) out_dtype."""
    C, K = wmat.shape
    K2, M = patches.shape
    assert K == K2
    out_bytes = jnp.dtype(out_dtype).itemsize
    w_bytes = C * K * 2 * (1 if _single_buffer_supported() else 2)
    # Per output lane: double-buffered bf16 patch column + double-buffered out.
    lane_bytes = 2 * (K * 2) + 2 * (C * out_bytes)
    tm = _pick_tile(M, lane_bytes, w_bytes)
    n_m = M // tm
    return pl.pallas_call(
        functools.partial(_gemm_act_kernel, act=act),
        out_shape=jax.ShapeDtypeStruct((C, M), out_dtype),
        grid=(n_m,),
        in_specs=[_const_block_spec((C, K), lambda i: (0, 0)),
                  pl.BlockSpec((K, tm), lambda i: (0, i))],
        out_specs=pl.BlockSpec((C, tm), lambda i: (0, i)),
        compiler_params=pltpu.CompilerParams(
            dimension_semantics=("parallel",),
            vmem_limit_bytes=_vmem_limit(w_bytes, lane_bytes, tm)),
    )(wmat, patches)


def _conv_bn_lrelu_kernel(w_ref, p_ref, gamma_ref, beta_ref, o_ref,
                          sum_sc, sumsq_sc, scale_sc, shift_sc, *, inv_m):
    """Fused conv-GEMM + BatchNorm (training-mode batch stats) + LeakyReLU.

    Grid = (2, n_m).  Pass 0: GEMM tiles are computed only to stream
    per-channel sum / sum-of-squares (tiles are discarded -> no O(C*M)
    scratch).  Pass 1: stats are folded into a per-channel scale/shift, the
    same patch tiles are re-streamed, the GEMM is recomputed and the
    normalized + LeakyReLU activation is written exactly once.
    """
    ps = pl.program_id(0)
    m = pl.program_id(1)

    # Both passes need the GEMM of the current (K, tm) patch tile.
    y = jnp.dot(w_ref[...], p_ref[...], preferred_element_type=jnp.float32)

    @pl.when(ps == 0)
    def _pass0():
        @pl.when(m == 0)
        def _init():
            sum_sc[...] = jnp.zeros_like(sum_sc)
            sumsq_sc[...] = jnp.zeros_like(sumsq_sc)
            # Defensive: the output block is pinned at tile 0 for all of
            # pass 0 and never holds real data until pass 1; keep it
            # initialized in case a backend flushes it early (pass 1
            # rewrites every tile, so correctness does not depend on this).
            o_ref[...] = jnp.zeros_like(o_ref)

        sum_sc[...] += jnp.sum(y, axis=1, keepdims=True)
        sumsq_sc[...] += jnp.sum(y * y, axis=1, keepdims=True)

    @pl.when(ps == 1)
    def _pass1():
        @pl.when(m == 0)
        def _finalize_stats():
            mean = sum_sc[...] * inv_m
            var = jnp.maximum(sumsq_sc[...] * inv_m - mean * mean, 0.0)
            scale = gamma_ref[...] * lax.rsqrt(var + BN_EPS)
            scale_sc[...] = scale
            shift_sc[...] = beta_ref[...] - mean * scale

        z = y * scale_sc[...] + shift_sc[...]
        o_ref[...] = jnp.where(z > 0, z, LEAKY_SLOPE * z).astype(o_ref.dtype)


def pallas_conv_bn_lrelu(wmat, patches, gamma, beta, out_dtype=jnp.bfloat16):
    """wmat: (C, K) bf16, patches: (K, M) bf16, gamma/beta: (C, 1) f32."""
    C, K = wmat.shape
    K2, M = patches.shape
    assert K == K2
    out_bytes = jnp.dtype(out_dtype).itemsize
    w_bytes = C * K * 2 * (1 if _single_buffer_supported() else 2)
    # 4 (C,1) f32 scratches + double-buffered gamma/beta blocks, lane-padded.
    c_pad = ((C + 7) // 8) * 8
    fixed_bytes = w_bytes + 8 * c_pad * 128 * 4
    lane_bytes = 2 * (K * 2) + 2 * (C * out_bytes)
    tm = _pick_tile(M, lane_bytes, fixed_bytes)
    n_m = M // tm
    return pl.pallas_call(
        functools.partial(_conv_bn_lrelu_kernel, inv_m=1.0 / M),
        out_shape=jax.ShapeDtypeStruct((C, M), out_dtype),
        grid=(2, n_m),
        in_specs=[
            _const_block_spec((C, K), lambda p, m: (0, 0)),
            # Both passes walk the M tiles (pass 1 re-streams for recompute).
            pl.BlockSpec((K, tm), lambda p, m: (0, m)),
            pl.BlockSpec((C, 1), lambda p, m: (0, 0)),
            pl.BlockSpec((C, 1), lambda p, m: (0, 0)),
        ],
        # Pass 0 pins the output block at tile 0 (no write-backs while the
        # stats are being accumulated); pass 1 walks and writes every tile.
        out_specs=pl.BlockSpec((C, tm), lambda p, m: (0, m * p)),
        scratch_shapes=[
            pltpu.VMEM((C, 1), jnp.float32),   # per-channel sum
            pltpu.VMEM((C, 1), jnp.float32),   # per-channel sum of squares
            pltpu.VMEM((C, 1), jnp.float32),   # folded BN scale
            pltpu.VMEM((C, 1), jnp.float32),   # folded BN shift
        ],
        compiler_params=pltpu.CompilerParams(
            dimension_semantics=("arbitrary", "arbitrary"),
            vmem_limit_bytes=_vmem_limit(fixed_bytes, lane_bytes, tm)),
    )(wmat, patches, gamma, beta)


# ----------------------------------------------------------------------------
# JAX glue: channel-major im2col + layer composition
# ----------------------------------------------------------------------------
def im2col_cm(x_cnhw, k, s, p):
    """x: (C, N, H, W) -> patches (k*k*C, N*Ho*Wo); K ordered (kh, kw, c)."""
    C, N, H, W = x_cnhw.shape
    xp = jnp.pad(x_cnhw, ((0, 0), (0, 0), (p, p), (p, p)))
    Ho = (H + 2 * p - k) // s + 1
    Wo = (W + 2 * p - k) // s + 1
    wins = []
    for kh in range(k):
        for kw in range(k):
            wins.append(xp[:, :, kh:kh + s * (Ho - 1) + 1:s,
                           kw:kw + s * (Wo - 1) + 1:s])
    pat = jnp.stack(wins, axis=0)                     # (k*k, C, N, Ho, Wo)
    return pat.reshape(k * k * C, N * Ho * Wo), (N, Ho, Wo)


def conv_block(x_cnhw, w_oihw, stride, pad, bn=None, act="leaky",
               out_dtype=jnp.bfloat16):
    cout, cin, kh, kw = w_oihw.shape
    # Layer outputs already arrive in bf16; only the network input needs a cast.
    x_bf16 = x_cnhw if x_cnhw.dtype == jnp.bfloat16 else x_cnhw.astype(jnp.bfloat16)
    patches, (N, Ho, Wo) = im2col_cm(x_bf16, kh, stride, pad)
    # PyTorch OIHW -> (Cout, kh*kw*Cin), matching the (kh, kw, c) patch order.
    wmat = jnp.transpose(w_oihw, (0, 2, 3, 1)).reshape(cout, kh * kw * cin)
    wmat = wmat.astype(jnp.bfloat16)
    if bn is None:
        y = pallas_gemm_act(wmat, patches, act=act, out_dtype=out_dtype)
    else:
        gamma, beta = bn
        y = pallas_conv_bn_lrelu(
            wmat, patches,
            gamma.reshape(cout, 1).astype(jnp.float32),
            beta.reshape(cout, 1).astype(jnp.float32),
            out_dtype=out_dtype)
    return y.reshape(cout, N, Ho, Wo)


def init_params(key, nc, ndf):
    ks = jax.random.split(key, 8)

    def conv_w(k, co, ci):                            # normal_(0, 0.02)
        return 0.02 * jax.random.normal(k, (co, ci, 4, 4), jnp.float32)

    def bn_p(k, c):                                   # weight ~ N(1, 0.02), bias 0
        return (1.0 + 0.02 * jax.random.normal(k, (c,), jnp.float32),
                jnp.zeros((c,), jnp.float32))

    return {
        "w1": conv_w(ks[0], ndf, nc),
        "w2": conv_w(ks[1], ndf * 2, ndf), "bn2": bn_p(ks[2], ndf * 2),
        "w3": conv_w(ks[3], ndf * 4, ndf * 2), "bn3": bn_p(ks[4], ndf * 4),
        "w4": conv_w(ks[5], ndf * 8, ndf * 4), "bn4": bn_p(ks[6], ndf * 8),
        "w5": conv_w(ks[7], 1, ndf * 8),
    }


def official_discriminator_forward(params, x_nchw):
    # NCHW -> channel-major (C, N, H, W): the M = N*H*W axis becomes the lane
    # (last) dim of every GEMM output (unmasked, lane-dense stores).
    x = jnp.transpose(x_nchw, (1, 0, 2, 3)).astype(jnp.float32)
    h = conv_block(x, params["w1"], 2, 1, bn=None, act="leaky")
    h = conv_block(h, params["w2"], 2, 1, bn=params["bn2"])
    h = conv_block(h, params["w3"], 2, 1, bn=params["bn3"])
    h = conv_block(h, params["w4"], 2, 1, bn=params["bn4"])
    # Final 1-channel sigmoid layer: keep exact f32 probabilities.
    h = conv_block(h, params["w5"], 1, 0, bn=None, act="sigmoid",
                   out_dtype=jnp.float32)                      # (1, N, 1, 1)
    return h.reshape(-1)   # == output.view(-1, 1).squeeze(1)


# ----------------------------------------------------------------------------
# Pure-JAX reference (for correctness check)
# ----------------------------------------------------------------------------
def reference_forward(params, x_nchw):
    x = jnp.transpose(x_nchw, (0, 2, 3, 1)).astype(jnp.float32)

    def conv(x, w, s, p):
        return lax.conv_general_dilated(
            x, jnp.transpose(w, (2, 3, 1, 0)), (s, s), [(p, p), (p, p)],
            dimension_numbers=("NHWC", "HWIO", "NHWC"))

    def bn(x, gamma, beta):
        m = jnp.mean(x, axis=(0, 1, 2))
        v = jnp.var(x, axis=(0, 1, 2))
        return gamma * (x - m) / jnp.sqrt(v + BN_EPS) + beta

    lrelu = lambda z: jnp.where(z > 0, z, LEAKY_SLOPE * z)
    h = lrelu(conv(x, params["w1"], 2, 1))
    h = lrelu(bn(conv(h, params["w2"], 2, 1), *params["bn2"]))
    h = lrelu(bn(conv(h, params["w3"], 2, 1), *params["bn3"]))
    h = lrelu(bn(conv(h, params["w4"], 2, 1), *params["bn4"]))
    h = jax.nn.sigmoid(conv(h, params["w5"], 1, 0))
    return h.reshape(-1)


if __name__ == "__main__":
    # 64x64 is the smallest spatial size this DCGAN discriminator supports
    # (four stride-2 convs then a 4x4 valid conv -> 1x1 output).
    nc, ndf = 3, 8
    N, H, W = 2, 64, 64

    key = jax.random.PRNGKey(0)
    kx, kp = jax.random.split(key)
    x = jax.random.normal(kx, (N, nc, H, W), jnp.float32)  # PyTorch-style NCHW
    params = init_params(kp, nc, ndf)

    _ = _single_buffer_supported()   # run the capability probe outside tracing

    out = jax.jit(official_discriminator_forward)(params, x)
    out = jax.block_until_ready(out)

    ref = reference_forward(params, x)
    assert out.shape == (N,), out.shape
    assert bool(jnp.all(jnp.isfinite(out)))
    assert jnp.allclose(out, ref, atol=2e-2, rtol=2e-2), (out, ref)

    print("KERNEL_OK")
</pallas_src>

<mosaic_0001>
module attributes {stable_mosaic.version = 11 : i64} {
  func.func @_probe_kernel(%arg0: i32, %arg1: memref<8x128xf32, #tpu.memory_space<vmem>>, %arg2: memref<8x128xf32, #tpu.memory_space<vmem>>) attributes {dimension_semantics = [#tpu.dimension_semantics<arbitrary>], iteration_bounds = array<i64: 2>, scalar_prefetch = 0 : i64, scratch_operands = 0 : i64, tpu.core_type = #tpu.core_type<tc>, window_params = [{pipeline_mode = #tpu.pipeline_mode<synchronous>, transform_indices = @transform_0, window_bounds = array<i64: 8, 128>}, {pipeline_mode = #tpu.pipeline_mode<synchronous>, transform_indices = @transform_1, window_bounds = array<i64: 8, 128>}]} {
    %c0 = arith.constant 0 : index
    %c0_0 = arith.constant 0 : index
    %0 = vector.load %arg1[%c0, %c0_0] : memref<8x128xf32, #tpu.memory_space<vmem>>, vector<8x128xf32>
    %cst = arith.constant 1.000000e+00 : f32
    %1 = vector.broadcast %cst : f32 to vector<8x128xf32>
    %2 = arith.addf %0, %1 : vector<8x128xf32>
    %c0_1 = arith.constant 0 : index
    %c0_2 = arith.constant 0 : index
    %3 = vector.load %arg2[%c0_1, %c0_2] : memref<8x128xf32, #tpu.memory_space<vmem>>, vector<8x128xf32>
    tpu.vector_store %arg2[%c0_1, %c0_2], %2 {strides = array<i32>} : memref<8x128xf32, #tpu.memory_space<vmem>>, vector<8x128xf32>,
    return
  }
  func.func @transform_0(%arg0: i32) -> (i32, i32) {
    %c0_i32 = arith.constant 0 : i32
    %c0_i32_0 = arith.constant 0 : i32
    %c0_i32_1 = arith.constant 0 : i32
    return %c0_i32, %c0_i32_0 : i32, i32
  }
  func.func @transform_1(%arg0: i32) -> (i32, i32) {
    %c0_i32 = arith.constant 0 : i32
    %c0_i32_0 = arith.constant 0 : i32
    %c0_i32_1 = arith.constant 0 : i32
    return %c0_i32, %c0_i32_0 : i32, i32
  }
}

module attributes {stable_mosaic.version = 11 : i64} {
  func.func @_gemm_act_kernel(%arg0: i32, %arg1: memref<8x48xbf16, #tpu.memory_space<vmem>>, %arg2: memref<48x2048xbf16, #tpu.memory_space<vmem>>, %arg3: memref<8x2048xbf16, #tpu.memory_space<vmem>>) attributes {dimension_semantics = [#tpu.dimension_semantics<parallel>], iteration_bounds = array<i64: 1>, scalar_prefetch = 0 : i64, scratch_operands = 0 : i64, tpu.core_type = #tpu.core_type<tc>, window_params = [{pipeline_mode = #tpu.pipeline_mode<synchronous>, transform_indices = @transform_0, window_bounds = array<i64: 8, 48>}, {transform_indices = @transform_1, window_bounds = array<i64: 48, 2048>}, {transform_indices = @transform_2, window_bounds = array<i64: 8, 2048>}]} {
    %c0 = arith.constant 0 : index
    %c0_0 = arith.constant 0 : index
    %0 = vector.load %arg1[%c0, %c0_0] : memref<8x48xbf16, #tpu.memory_space<vmem>>, vector<8x48xbf16>
    %c0_1 = arith.constant 0 : index
    %c0_2 = arith.constant 0 : index
    %1 = vector.load %arg2[%c0_1, %c0_2] : memref<48x2048xbf16, #tpu.memory_space<vmem>>, vector<48x2048xbf16>
    %cst = arith.constant dense<0.000000e+00> : vector<8x2048xf32>
    %2 = tpu.matmul %0, %1, %cst {dimension_numbers = #tpu.dot_dimension_numbers<[1], [0], [0], [1], [0, 0, 1, 1], [], []>} : vector<8x48xbf16>, vector<48x2048xbf16>, vector<8x2048xf32> -> vector<8x2048xf32>
    %cst_3 = arith.constant 0.000000e+00 : f32
    %3 = vector.broadcast %cst_3 : f32 to vector<8x2048xf32>
    %4 = arith.cmpf ogt, %2, %3 : vector<8x2048xf32>
    %cst_4 = arith.constant 2.000000e-01 : f32
    %5 = vector.broadcast %cst_4 : f32 to vector<8x2048xf32>
    %6 = arith.mulf %5, %2 : vector<8x2048xf32>
    %7 = arith.select %4, %2, %6 : vector<8x2048xi1>, vector<8x2048xf32>
    %8 = arith.truncf %7 : vector<8x2048xf32> to vector<8x2048xbf16>
    %c0_5 = arith.constant 0 : index
    %c0_6 = arith.constant 0 : index
    %9 = vector.load %arg3[%c0_5, %c0_6] : memref<8x2048xbf16, #tpu.memory_space<vmem>>, vector<8x2048xbf16>
    tpu.vector_store %arg3[%c0_5, %c0_6], %8 {strides = array<i32>} : memref<8x2048xbf16, #tpu.memory_space<vmem>>, vector<8x2048xbf16>,
    return
  }
  func.func @transform_0(%arg0: i32) -> (i32, i32) {
    %c0_i32 = arith.constant 0 : i32
    %c0_i32_0 = arith.constant 0 : i32
    %c0_i32_1 = arith.constant 0 : i32
    return %c0_i32, %c0_i32_0 : i32, i32
  }
  func.func @transform_1(%arg0: i32) -> (i32, i32) {
    %c0_i32 = arith.constant 0 : i32
    %c0_i32_0 = arith.constant 0 : i32
    return %c0_i32, %arg0 : i32, i32
  }
  func.func @transform_2(%arg0: i32) -> (i32, i32) {
    %c0_i32 = arith.constant 0 : i32
    %c0_i32_0 = arith.constant 0 : i32
    return %c0_i32, %arg0 : i32, i32
  }
}

module attributes {stable_mosaic.version = 11 : i64} {
  func.func @_conv_bn_lrelu_kernel(%arg0: i32, %arg1: i32, %arg2: memref<16x128xbf16, #tpu.memory_space<vmem>>, %arg3: memref<128x512xbf16, #tpu.memory_space<vmem>>, %arg4: memref<16x1xf32, #tpu.memory_space<vmem>>, %arg5: memref<16x1xf32, #tpu.memory_space<vmem>>, %arg6: memref<16x512xbf16, #tpu.memory_space<vmem>>, %arg7: memref<16x1xf32, #tpu.memory_space<vmem>>, %arg8: memref<16x1xf32, #tpu.memory_space<vmem>>, %arg9: memref<16x1xf32, #tpu.memory_space<vmem>>, %arg10: memref<16x1xf32, #tpu.memory_space<vmem>>) attributes {dimension_semantics = [#tpu.dimension_semantics<arbitrary>, #tpu.dimension_semantics<arbitrary>], iteration_bounds = array<i64: 2, 1>, scalar_prefetch = 0 : i64, scratch_operands = 4 : i64, tpu.core_type = #tpu.core_type<tc>, window_params = [{pipeline_mode = #tpu.pipeline_mode<synchronous>, transform_indices = @transform_0, window_bounds = array<i64: 16, 128>}, {transform_indices = @transform_1, window_bounds = array<i64: 128, 512>}, {pipeline_mode = #tpu.pipeline_mode<synchronous>, transform_indices = @transform_2, window_bounds = array<i64: 16, 1>}, {pipeline_mode = #tpu.pipeline_mode<synchronous>, transform_indices = @transform_3, window_bounds = array<i64: 16, 1>}, {transform_indices = @transform_4, window_bounds = array<i64: 16, 512>}]} {
    %c0 = arith.constant 0 : index
    %c0_0 = arith.constant 0 : index
    %0 = vector.load %arg2[%c0, %c0_0] : memref<16x128xbf16, #tpu.memory_space<vmem>>, vector<16x128xbf16>
    %c0_1 = arith.constant 0 : index
    %c0_2 = arith.constant 0 : index
    %1 = vector.load %arg3[%c0_1, %c0_2] : memref<128x512xbf16, #tpu.memory_space<vmem>>, vector<128x512xbf16>
    %cst = arith.constant dense<0.000000e+00> : vector<16x512xf32>
    %2 = tpu.matmul %0, %1, %cst {dimension_numbers = #tpu.dot_dimension_numbers<[1], [0], [0], [1], [0, 0, 1, 1], [], []>} : vector<16x128xbf16>, vector<128x512xbf16>, vector<16x512xf32> -> vector<16x512xf32>
    %c0_i32 = arith.constant 0 : i32
    %3 = arith.cmpi eq, %arg0, %c0_i32 : i32
    %4 = arith.extui %3 : i1 to i32
    %c0_i32_3 = arith.constant 0 : i32
    %5 = arith.cmpi ne, %4, %c0_i32_3 : i32
    scf.if %5 {
      %c0_i32_5 = arith.constant 0 : i32
      %9 = arith.cmpi eq, %arg1, %c0_i32_5 : i32
      %10 = arith.extui %9 : i1 to i32
      %c0_i32_6 = arith.constant 0 : i32
      %11 = arith.cmpi ne, %10, %c0_i32_6 : i32
      scf.if %11 {
        %cst_17 = arith.constant 0.000000e+00 : f32
        %23 = vector.broadcast %cst_17 : f32 to vector<16x1xf32>
        %c0_18 = arith.constant 0 : index
        %c0_19 = arith.constant 0 : index
        %24 = vector.load %arg7[%c0_18, %c0_19] : memref<16x1xf32, #tpu.memory_space<vmem>>, vector<16x1xf32>
        tpu.vector_store %arg7[%c0_18, %c0_19], %23 {strides = array<i32>} : memref<16x1xf32, #tpu.memory_space<vmem>>, vector<16x1xf32>,
        %cst_20 = arith.constant 0.000000e+00 : f32
        %25 = vector.broadcast %cst_20 : f32 to vector<16x1xf32>
        %c0_21 = arith.constant 0 : index
        %c0_22 = arith.constant 0 : index
        %26 = vector.load %arg8[%c0_21, %c0_22] : memref<16x1xf32, #tpu.memory_space<vmem>>, vector<16x1xf32>
        tpu.vector_store %arg8[%c0_21, %c0_22], %25 {strides = array<i32>} : memref<16x1xf32, #tpu.memory_space<vmem>>, vector<16x1xf32>,
        %cst_23 = arith.constant 0.000000e+00 : bf16
        %27 = vector.broadcast %cst_23 : bf16 to vector<16x512xbf16>
        %c0_24 = arith.constant 0 : index
        %c0_25 = arith.constant 0 : index
        %28 = vector.load %arg6[%c0_24, %c0_25] : memref<16x512xbf16, #tpu.memory_space<vmem>>, vector<16x512xbf16>
        tpu.vector_store %arg6[%c0_24, %c0_25], %27 {strides = array<i32>} : memref<16x512xbf16, #tpu.memory_space<vmem>>, vector<16x512xbf16>,
      } else {
      }
      %c0_7 = arith.constant 0 : index
      %c0_8 = arith.constant 0 : index
      %12 = vector.load %arg7[%c0_7, %c0_8] : memref<16x1xf32, #tpu.memory_space<vmem>>, vector<16x1xf32>
      %cst_9 = arith.constant dense<0.000000e+00> : vector<16xf32>
      %13 = vector.multi_reduction <add>, %2, %cst_9 [1] : vector<16x512xf32> to vector<16xf32>
      %14 = vector.shape_cast %13 : vector<16xf32> to vector<16x1xf32>
      %15 = arith.addf %12, %14 : vector<16x1xf32>
      %c0_10 = arith.constant 0 : index
      %c0_11 = arith.constant 0 : index
      %16 = vector.load %arg7[%c0_10, %c0_11] : memref<16x1xf32, #tpu.memory_space<vmem>>, vector<16x1xf32>
      tpu.vector_store %arg7[%c0_10, %c0_11], %15 {strides = array<i32>} : memref<16x1xf32, #tpu.memory_space<vmem>>, vector<16x1xf32>,
      %c0_12 = arith.constant 0 : index
      %c0_13 = arith.constant 0 : index
      %17 = vector.load %arg8[%c0_12, %c0_13] : memref<16x1xf32, #tpu.memory_space<vmem>>, vector<16x1xf32>
      %18 = arith.mulf %2, %2 : vector<16x512xf32>
      %cst_14 = arith.constant dense<0.000000e+00> : vector<16xf32>
      %19 = vector.multi_reduction <add>, %18, %cst_14 [1] : vector<16x512xf32> to vector<16xf32>
      %20 = vector.shape_cast %19 : vector<16xf32> to vector<16x1xf32>
      %21 = arith.addf %17, %20 : vector<16x1xf32>
      %c0_15 = arith.constant 0 : index
      %c0_16 = arith.constant 0 : index
      %22 = vector.load %arg8[%c0_15, %c0_16] : memref<16x1xf32, #tpu.memory_space<vmem>>, vector<16x1xf32>
      tpu.vector_store %arg8[%c0_15, %c0_16], %21 {strides = array<i32>} : memref<16x1xf32, #tpu.memory_space<vmem>>, vector<16x1xf32>,
    } else {
    }
    %c1_i32 = arith.constant 1 : i32
    %6 = arith.cmpi eq, %arg0, %c1_i32 : i32
    %7 = arith.extui %6 : i1 to i32
    %c0_i32_4 = arith.constant 0 : i32
    %8 = arith.cmpi ne, %7, %c0_i32_4 : i32
    scf.if %8 {
      %c0_i32_5 = arith.constant 0 : i32
      %9 = arith.cmpi eq, %arg1, %c0_i32_5 : i32
      %10 = arith.extui %9 : i1 to i32
      %c0_i32_6 = arith.constant 0 : i32
      %11 = arith.cmpi ne, %10, %c0_i32_6 : i32
      scf.if %11 {
        %c0_15 = arith.constant 0 : index
        %c0_16 = arith.constant 0 : index
        %25 = vector.load %arg7[%c0_15, %c0_16] : memref<16x1xf32, #tpu.memory_space<vmem>>, vector<16x1xf32>
        %cst_17 = arith.constant 0.001953125 : f32
        %26 = vector.broadcast %cst_17 : f32 to vector<16x1xf32>
        %27 = arith.mulf %25, %26 : vector<16x1xf32>
        %c0_18 = arith.constant 0 : index
        %c0_19 = arith.constant 0 : index
        %28 = vector.load %arg8[%c0_18, %c0_19] : memref<16x1xf32, #tpu.memory_space<vmem>>, vector<16x1xf32>
        %cst_20 = arith.constant 0.001953125 : f32
        %29 = vector.broadcast %cst_20 : f32 to vector<16x1xf32>
        %30 = arith.mulf %28, %29 : vector<16x1xf32>
        %31 = arith.mulf %27, %27 : vector<16x1xf32>
        %32 = arith.subf %30, %31 : vector<16x1xf32>
        %cst_21 = arith.constant 0.000000e+00 : f32
        %33 = vector.broadcast %cst_21 : f32 to vector<16x1xf32>
        %34 = arith.maximumf %32, %33 : vector<16x1xf32>
        %c0_22 = arith.constant 0 : index
        %c0_23 = arith.constant 0 : index
        %35 = vector.load %arg4[%c0_22, %c0_23] : memref<16x1xf32, #tpu.memory_space<vmem>>, vector<16x1xf32>
        %cst_24 = arith.constant 9.99999974E-6 : f32
        %36 = vector.broadcast %cst_24 : f32 to vector<16x1xf32>
        %37 = arith.addf %34, %36 : vector<16x1xf32>
        %38 = math.rsqrt %37 : vector<16x1xf32>
        %39 = arith.mulf %35, %38 : vector<16x1xf32>
        %c0_25 = arith.constant 0 : index
        %c0_26 = arith.constant 0 : index
        %40 = vector.load %arg9[%c0_25, %c0_26] : memref<16x1xf32, #tpu.memory_space<vmem>>, vector<16x1xf32>
        tpu.vector_store %arg9[%c0_25, %c0_26], %39 {strides = array<i32>} : memref<16x1xf32, #tpu.memory_space<vmem>>, vector<16x1xf32>,
        %c0_27 = arith.constant 0 : index
        %c0_28 = arith.constant 0 : index
        %41 = vector.load %arg5[%c0_27, %c0_28] : memref<16x1xf32, #tpu.memory_space<vmem>>, vector<16x1xf32>
        %42 = arith.mulf %27, %39 : vector<16x1xf32>
        %43 = arith.subf %41, %42 : vector<16x1xf32>
        %c0_29 = arith.constant 0 : index
        %c0_30 = arith.constant 0 : index
        %44 = vector.load %arg10[%c0_29, %c0_30] : memref<16x1xf32, #tpu.memory_space<vmem>>, vector<16x1xf32>
        tpu.vector_store %arg10[%c0_29, %c0_30], %43 {strides = array<i32>} : memref<16x1xf32, #tpu.memory_space<vmem>>, vector<16x1xf32>,
      } else {
      }
      %c0_7 = arith.constant 0 : index
      %c0_8 = arith.constant 0 : index
      %12 = vector.load %arg9[%c0_7, %c0_8] : memref<16x1xf32, #tpu.memory_space<vmem>>, vector<16x1xf32>
      %13 = vector.broadcast %12 : vector<16x1xf32> to vector<16x512xf32>
      %14 = arith.mulf %2, %13 : vector<16x512xf32>
      %c0_9 = arith.constant 0 : index
      %c0_10 = arith.constant 0 : index
      %15 = vector.load %arg10[%c0_9, %c0_10] : memref<16x1xf32, #tpu.memory_space<vmem>>, vector<16x1xf32>
      %16 = vector.broadcast %15 : vector<16x1xf32> to vector<16x512xf32>
      %17 = arith.addf %14, %16 : vector<16x512xf32>
      %cst_11 = arith.constant 0.000000e+00 : f32
      %18 = vector.broadcast %cst_11 : f32 to vector<16x512xf32>
      %19 = arith.cmpf ogt, %17, %18 : vector<16x512xf32>
      %cst_12 = arith.constant 2.000000e-01 : f32
      %20 = vector.broadcast %cst_12 : f32 to vector<16x512xf32>
      %21 = arith.mulf %20, %17 : vector<16x512xf32>
      %22 = arith.select %19, %17, %21 : vector<16x512xi1>, vector<16x512xf32>
      %23 = arith.truncf %22 : vector<16x512xf32> to vector<16x512xbf16>
      %c0_13 = arith.constant 0 : index
      %c0_14 = arith.constant 0 : index
      %24 = vector.load %arg6[%c0_13, %c0_14] : memref<16x512xbf16, #tpu.memory_space<vmem>>, vector<16x512xbf16>
      tpu.vector_store %arg6[%c0_13, %c0_14], %23 {strides = array<i32>} : memref<16x512xbf16, #tpu.memory_space<vmem>>, vector<16x512xbf16>,
    } else {
    }
    return
  }
  func.func @transform_0(%arg0: i32, %arg1: i32) -> (i32, i32) {
    %c0_i32 = arith.constant 0 : i32
    %c0_i32_0 = arith.constant 0 : i32
    %c0_i32_1 = arith.constant 0 : i32
    return %c0_i32, %c0_i32_0 : i32, i32
  }
  func.func @transform_1(%arg0: i32, %arg1: i32) -> (i32, i32) {
    %c0_i32 = arith.constant 0 : i32
    %c0_i32_0 = arith.constant 0 : i32
    return %c0_i32, %arg1 : i32, i32
  }
  func.func @transform_2(%arg0: i32, %arg1: i32) -> (i32, i32) {
    %c0_i32 = arith.constant 0 : i32
    %c0_i32_0 = arith.constant 0 : i32
    %c0_i32_1 = arith.constant 0 : i32
    return %c0_i32, %c0_i32_0 : i32, i32
  }
  func.func @transform_3(%arg0: i32, %arg1: i32) -> (i32, i32) {
    %c0_i32 = arith.constant 0 : i32
    %c0_i32_0 = arith.constant 0 : i32
    %c0_i32_1 = arith.constant 0 : i32
    return %c0_i32, %c0_i32_0 : i32, i32
  }
  func.func @transform_4(%arg0: i32, %arg1: i32) -> (i32, i32) {
    %0 = arith.muli %arg1, %arg0 : i32
    %c0_i32 = arith.constant 0 : i32
    %c0_i32_0 = arith.constant 0 : i32
    return %c0_i32, %0 : i32, i32
  }
}

module attributes {stable_mosaic.version = 11 : i64} {
  func.func @_conv_bn_lrelu_kernel(%arg0: i32, %arg1: i32, %arg2: memref<32x256xbf16, #tpu.memory_space<vmem>>, %arg3: memref<256x128xbf16, #tpu.memory_space<vmem>>, %arg4: memref<32x1xf32, #tpu.memory_space<vmem>>, %arg5: memref<32x1xf32, #tpu.memory_space<vmem>>, %arg6: memref<32x128xbf16, #tpu.memory_space<vmem>>, %arg7: memref<32x1xf32, #tpu.memory_space<vmem>>, %arg8: memref<32x1xf32, #tpu.memory_space<vmem>>, %arg9: memref<32x1xf32, #tpu.memory_space<vmem>>, %arg10: memref<32x1xf32, #tpu.memory_space<vmem>>) attributes {dimension_semantics = [#tpu.dimension_semantics<arbitrary>, #tpu.dimension_semantics<arbitrary>], iteration_bounds = array<i64: 2, 1>, scalar_prefetch = 0 : i64, scratch_operands = 4 : i64, tpu.core_type = #tpu.core_type<tc>, window_params = [{pipeline_mode = #tpu.pipeline_mode<synchronous>, transform_indices = @transform_0, window_bounds = array<i64: 32, 256>}, {transform_indices = @transform_1, window_bounds = array<i64: 256, 128>}, {pipeline_mode = #tpu.pipeline_mode<synchronous>, transform_indices = @transform_2, window_bounds = array<i64: 32, 1>}, {pipeline_mode = #tpu.pipeline_mode<synchronous>, transform_indices = @transform_3, window_bounds = array<i64: 32, 1>}, {transform_indices = @transform_4, window_bounds = array<i64: 32, 128>}]} {
    %c0 = arith.constant 0 : index
    %c0_0 = arith.constant 0 : index
    %0 = vector.load %arg2[%c0, %c0_0] : memref<32x256xbf16, #tpu.memory_space<vmem>>, vector<32x256xbf16>
    %c0_1 = arith.constant 0 : index
    %c0_2 = arith.constant 0 : index
    %1 = vector.load %arg3[%c0_1, %c0_2] : memref<256x128xbf16, #tpu.memory_space<vmem>>, vector<256x128xbf16>
    %cst = arith.constant dense<0.000000e+00> : vector<32x128xf32>
    %2 = tpu.matmul %0, %1, %cst {dimension_numbers = #tpu.dot_dimension_numbers<[1], [0], [0], [1], [0, 0, 1, 1], [], []>} : vector<32x256xbf16>, vector<256x128xbf16>, vector<32x128xf32> -> vector<32x128xf32>
    %c0_i32 = arith.constant 0 : i32
    %3 = arith.cmpi eq, %arg0, %c0_i32 : i32
    %4 = arith.extui %3 : i1 to i32
    %c0_i32_3 = arith.constant 0 : i32
    %5 = arith.cmpi ne, %4, %c0_i32_3 : i32
    scf.if %5 {
      %c0_i32_5 = arith.constant 0 : i32
      %9 = arith.cmpi eq, %arg1, %c0_i32_5 : i32
      %10 = arith.extui %9 : i1 to i32
      %c0_i32_6 = arith.constant 0 : i32
      %11 = arith.cmpi ne, %10, %c0_i32_6 : i32
      scf.if %11 {
        %cst_17 = arith.constant 0.000000e+00 : f32
        %23 = vector.broadcast %cst_17 : f32 to vector<32x1xf32>
        %c0_18 = arith.constant 0 : index
        %c0_19 = arith.constant 0 : index
        %24 = vector.load %arg7[%c0_18, %c0_19] : memref<32x1xf32, #tpu.memory_space<vmem>>, vector<32x1xf32>
        tpu.vector_store %arg7[%c0_18, %c0_19], %23 {strides = array<i32>} : memref<32x1xf32, #tpu.memory_space<vmem>>, vector<32x1xf32>,
        %cst_20 = arith.constant 0.000000e+00 : f32
        %25 = vector.broadcast %cst_20 : f32 to vector<32x1xf32>
        %c0_21 = arith.constant 0 : index
        %c0_22 = arith.constant 0 : index
        %26 = vector.load %arg8[%c0_21, %c0_22] : memref<32x1xf32, #tpu.memory_space<vmem>>, vector<32x1xf32>
        tpu.vector_store %arg8[%c0_21, %c0_22], %25 {strides = array<i32>} : memref<32x1xf32, #tpu.memory_space<vmem>>, vector<32x1xf32>,
        %cst_23 = arith.constant 0.000000e+00 : bf16
        %27 = vector.broadcast %cst_23 : bf16 to vector<32x128xbf16>
        %c0_24 = arith.constant 0 : index
        %c0_25 = arith.constant 0 : index
        %28 = vector.load %arg6[%c0_24, %c0_25] : memref<32x128xbf16, #tpu.memory_space<vmem>>, vector<32x128xbf16>
        tpu.vector_store %arg6[%c0_24, %c0_25], %27 {strides = array<i32>} : memref<32x128xbf16, #tpu.memory_space<vmem>>, vector<32x128xbf16>,
      } else {
      }
      %c0_7 = arith.constant 0 : index
      %c0_8 = arith.constant 0 : index
      %12 = vector.load %arg7[%c0_7, %c0_8] : memref<32x1xf32, #tpu.memory_space<vmem>>, vector<32x1xf32>
      %cst_9 = arith.constant dense<0.000000e+00> : vector<32xf32>
      %13 = vector.multi_reduction <add>, %2, %cst_9 [1] : vector<32x128xf32> to vector<32xf32>
      %14 = vector.shape_cast %13 : vector<32xf32> to vector<32x1xf32>
      %15 = arith.addf %12, %14 : vector<32x1xf32>
      %c0_10 = arith.constant 0 : index
      %c0_11 = arith.constant 0 : index
      %16 = vector.load %arg7[%c0_10, %c0_11] : memref<32x1xf32, #tpu.memory_space<vmem>>, vector<32x1xf32>
      tpu.vector_store %arg7[%c0_10, %c0_11], %15 {strides = array<i32>} : memref<32x1xf32, #tpu.memory_space<vmem>>, vector<32x1xf32>,
      %c0_12 = arith.constant 0 : index
      %c0_13 = arith.constant 0 : index
      %17 = vector.load %arg8[%c0_12, %c0_13] : memref<32x1xf32, #tpu.memory_space<vmem>>, vector<32x1xf32>
      %18 = arith.mulf %2, %2 : vector<32x128xf32>
      %cst_14 = arith.constant dense<0.000000e+00> : vector<32xf32>
      %19 = vector.multi_reduction <add>, %18, %cst_14 [1] : vector<32x128xf32> to vector<32xf32>
      %20 = vector.shape_cast %19 : vector<32xf32> to vector<32x1xf32>
      %21 = arith.addf %17, %20 : vector<32x1xf32>
      %c0_15 = arith.constant 0 : index
      %c0_16 = arith.constant 0 : index
      %22 = vector.load %arg8[%c0_15, %c0_16] : memref<32x1xf32, #tpu.memory_space<vmem>>, vector<32x1xf32>
      tpu.vector_store %arg8[%c0_15, %c0_16], %21 {strides = array<i32>} : memref<32x1xf32, #tpu.memory_space<vmem>>, vector<32x1xf32>,
    } else {
    }
    %c1_i32 = arith.constant 1 : i32
    %6 = arith.cmpi eq, %arg0, %c1_i32 : i32
    %7 = arith.extui %6 : i1 to i32
    %c0_i32_4 = arith.constant 0 : i32
    %8 = arith.cmpi ne, %7, %c0_i32_4 : i32
    scf.if %8 {
      %c0_i32_5 = arith.constant 0 : i32
      %9 = arith.cmpi eq, %arg1, %c0_i32_5 : i32
      %10 = arith.extui %9 : i1 to i32
      %c0_i32_6 = arith.constant 0 : i32
      %11 = arith.cmpi ne, %10, %c0_i32_6 : i32
      scf.if %11 {
        %c0_15 = arith.constant 0 : index
        %c0_16 = arith.constant 0 : index
        %25 = vector.load %arg7[%c0_15, %c0_16] : memref<32x1xf32, #tpu.memory_space<vmem>>, vector<32x1xf32>
        %cst_17 = arith.constant 7.812500e-03 : f32
        %26 = vector.broadcast %cst_17 : f32 to vector<32x1xf32>
        %27 = arith.mulf %25, %26 : vector<32x1xf32>
        %c0_18 = arith.constant 0 : index
        %c0_19 = arith.constant 0 : index
        %28 = vector.load %arg8[%c0_18, %c0_19] : memref<32x1xf32, #tpu.memory_space<vmem>>, vector<32x1xf32>
        %cst_20 = arith.constant 7.812500e-03 : f32
        %29 = vector.broadcast %cst_20 : f32 to vector<32x1xf32>
        %30 = arith.mulf %28, %29 : vector<32x1xf32>
        %31 = arith.mulf %27, %27 : vector<32x1xf32>
        %32 = arith.subf %30, %31 : vector<32x1xf32>
        %cst_21 = arith.constant 0.000000e+00 : f32
        %33 = vector.broadcast %cst_21 : f32 to vector<32x1xf32>
        %34 = arith.maximumf %32, %33 : vector<32x1xf32>
        %c0_22 = arith.constant 0 : index
        %c0_23 = arith.constant 0 : index
        %35 = vector.load %arg4[%c0_22, %c0_23] : memref<32x1xf32, #tpu.memory_space<vmem>>, vector<32x1xf32>
        %cst_24 = arith.constant 9.99999974E-6 : f32
        %36 = vector.broadcast %cst_24 : f32 to vector<32x1xf32>
        %37 = arith.addf %34, %36 : vector<32x1xf32>
        %38 = math.rsqrt %37 : vector<32x1xf32>
        %39 = arith.mulf %35, %38 : vector<32x1xf32>
        %c0_25 = arith.constant 0 : index
        %c0_26 = arith.constant 0 : index
        %40 = vector.load %arg9[%c0_25, %c0_26] : memref<32x1xf32, #tpu.memory_space<vmem>>, vector<32x1xf32>
        tpu.vector_store %arg9[%c0_25, %c0_26], %39 {strides = array<i32>} : memref<32x1xf32, #tpu.memory_space<vmem>>, vector<32x1xf32>,
        %c0_27 = arith.constant 0 : index
        %c0_28 = arith.constant 0 : index
        %41 = vector.load %arg5[%c0_27, %c0_28] : memref<32x1xf32, #tpu.memory_space<vmem>>, vector<32x1xf32>
        %42 = arith.mulf %27, %39 : vector<32x1xf32>
        %43 = arith.subf %41, %42 : vector<32x1xf32>
        %c0_29 = arith.constant 0 : index
        %c0_30 = arith.constant 0 : index
        %44 = vector.load %arg10[%c0_29, %c0_30] : memref<32x1xf32, #tpu.memory_space<vmem>>, vector<32x1xf32>
        tpu.vector_store %arg10[%c0_29, %c0_30], %43 {strides = array<i32>} : memref<32x1xf32, #tpu.memory_space<vmem>>, vector<32x1xf32>,
      } else {
      }
      %c0_7 = arith.constant 0 : index
      %c0_8 = arith.constant 0 : index
      %12 = vector.load %arg9[%c0_7, %c0_8] : memref<32x1xf32, #tpu.memory_space<vmem>>, vector<32x1xf32>
      %13 = vector.broadcast %12 : vector<32x1xf32> to vector<32x128xf32>
      %14 = arith.mulf %2, %13 : vector<32x128xf32>
      %c0_9 = arith.constant 0 : index
      %c0_10 = arith.constant 0 : index
      %15 = vector.load %arg10[%c0_9, %c0_10] : memref<32x1xf32, #tpu.memory_space<vmem>>, vector<32x1xf32>
      %16 = vector.broadcast %15 : vector<32x1xf32> to vector<32x128xf32>
      %17 = arith.addf %14, %16 : vector<32x128xf32>
      %cst_11 = arith.constant 0.000000e+00 : f32
      %18 = vector.broadcast %cst_11 : f32 to vector<32x128xf32>
      %19 = arith.cmpf ogt, %17, %18 : vector<32x128xf32>
      %cst_12 = arith.constant 2.000000e-01 : f32
      %20 = vector.broadcast %cst_12 : f32 to vector<32x128xf32>
      %21 = arith.mulf %20, %17 : vector<32x128xf32>
      %22 = arith.select %19, %17, %21 : vector<32x128xi1>, vector<32x128xf32>
      %23 = arith.truncf %22 : vector<32x128xf32> to vector<32x128xbf16>
      %c0_13 = arith.constant 0 : index
      %c0_14 = arith.constant 0 : index
      %24 = vector.load %arg6[%c0_13, %c0_14] : memref<32x128xbf16, #tpu.memory_space<vmem>>, vector<32x128xbf16>
      tpu.vector_store %arg6[%c0_13, %c0_14], %23 {strides = array<i32>} : memref<32x128xbf16, #tpu.memory_space<vmem>>, vector<32x128xbf16>,
    } else {
    }
    return
  }
  func.func @transform_0(%arg0: i32, %arg1: i32) -> (i32, i32) {
    %c0_i32 = arith.constant 0 : i32
    %c0_i32_0 = arith.constant 0 : i32
    %c0_i32_1 = arith.constant 0 : i32
    return %c0_i32, %c0_i32_0 : i32, i32
  }
  func.func @transform_1(%arg0: i32, %arg1: i32) -> (i32, i32) {
    %c0_i32 = arith.constant 0 : i32
    %c0_i32_0 = arith.constant 0 : i32
    return %c0_i32, %arg1 : i32, i32
  }
  func.func @transform_2(%arg0: i32, %arg1: i32) -> (i32, i32) {
    %c0_i32 = arith.constant 0 : i32
    %c0_i32_0 = arith.constant 0 : i32
    %c0_i32_1 = arith.constant 0 : i32
    return %c0_i32, %c0_i32_0 : i32, i32
  }
  func.func @transform_3(%arg0: i32, %arg1: i32) -> (i32, i32) {
    %c0_i32 = arith.constant 0 : i32
    %c0_i32_0 = arith.constant 0 : i32
    %c0_i32_1 = arith.constant 0 : i32
    return %c0_i32, %c0_i32_0 : i32, i32
  }
  func.func @transform_4(%arg0: i32, %arg1: i32) -> (i32, i32) {
    %0 = arith.muli %arg1, %arg0 : i32
    %c0_i32 = arith.constant 0 : i32
    %c0_i32_0 = arith.constant 0 : i32
    return %c0_i32, %0 : i32, i32
  }
}

module attributes {stable_mosaic.version = 11 : i64} {
  func.func @_conv_bn_lrelu_kernel(%arg0: i32, %arg1: i32, %arg2: memref<64x512xbf16, #tpu.memory_space<vmem>>, %arg3: memref<512x32xbf16, #tpu.memory_space<vmem>>, %arg4: memref<64x1xf32, #tpu.memory_space<vmem>>, %arg5: memref<64x1xf32, #tpu.memory_space<vmem>>, %arg6: memref<64x32xbf16, #tpu.memory_space<vmem>>, %arg7: memref<64x1xf32, #tpu.memory_space<vmem>>, %arg8: memref<64x1xf32, #tpu.memory_space<vmem>>, %arg9: memref<64x1xf32, #tpu.memory_space<vmem>>, %arg10: memref<64x1xf32, #tpu.memory_space<vmem>>) attributes {dimension_semantics = [#tpu.dimension_semantics<arbitrary>, #tpu.dimension_semantics<arbitrary>], iteration_bounds = array<i64: 2, 1>, scalar_prefetch = 0 : i64, scratch_operands = 4 : i64, tpu.core_type = #tpu.core_type<tc>, window_params = [{pipeline_mode = #tpu.pipeline_mode<synchronous>, transform_indices = @transform_0, window_bounds = array<i64: 64, 512>}, {transform_indices = @transform_1, window_bounds = array<i64: 512, 32>}, {pipeline_mode = #tpu.pipeline_mode<synchronous>, transform_indices = @transform_2, window_bounds = array<i64: 64, 1>}, {pipeline_mode = #tpu.pipeline_mode<synchronous>, transform_indices = @transform_3, window_bounds = array<i64: 64, 1>}, {transform_indices = @transform_4, window_bounds = array<i64: 64, 32>}]} {
    %c0 = arith.constant 0 : index
    %c0_0 = arith.constant 0 : index
    %0 = vector.load %arg2[%c0, %c0_0] : memref<64x512xbf16, #tpu.memory_space<vmem>>, vector<64x512xbf16>
    %c0_1 = arith.constant 0 : index
    %c0_2 = arith.constant 0 : index
    %1 = vector.load %arg3[%c0_1, %c0_2] : memref<512x32xbf16, #tpu.memory_space<vmem>>, vector<512x32xbf16>
    %cst = arith.constant dense<0.000000e+00> : vector<64x32xf32>
    %2 = tpu.matmul %0, %1, %cst {dimension_numbers = #tpu.dot_dimension_numbers<[1], [0], [0], [1], [0, 0, 1, 1], [], []>} : vector<64x512xbf16>, vector<512x32xbf16>, vector<64x32xf32> -> vector<64x32xf32>
    %c0_i32 = arith.constant 0 : i32
    %3 = arith.cmpi eq, %arg0, %c0_i32 : i32
    %4 = arith.extui %3 : i1 to i32
    %c0_i32_3 = arith.constant 0 : i32
    %5 = arith.cmpi ne, %4, %c0_i32_3 : i32
    scf.if %5 {
      %c0_i32_5 = arith.constant 0 : i32
      %9 = arith.cmpi eq, %arg1, %c0_i32_5 : i32
      %10 = arith.extui %9 : i1 to i32
      %c0_i32_6 = arith.constant 0 : i32
      %11 = arith.cmpi ne, %10, %c0_i32_6 : i32
      scf.if %11 {
        %cst_17 = arith.constant 0.000000e+00 : f32
        %23 = vector.broadcast %cst_17 : f32 to vector<64x1xf32>
        %c0_18 = arith.constant 0 : index
        %c0_19 = arith.constant 0 : index
        %24 = vector.load %arg7[%c0_18, %c0_19] : memref<64x1xf32, #tpu.memory_space<vmem>>, vector<64x1xf32>
        tpu.vector_store %arg7[%c0_18, %c0_19], %23 {strides = array<i32>} : memref<64x1xf32, #tpu.memory_space<vmem>>, vector<64x1xf32>,
        %cst_20 = arith.constant 0.000000e+00 : f32
        %25 = vector.broadcast %cst_20 : f32 to vector<64x1xf32>
        %c0_21 = arith.constant 0 : index
        %c0_22 = arith.constant 0 : index
        %26 = vector.load %arg8[%c0_21, %c0_22] : memref<64x1xf32, #tpu.memory_space<vmem>>, vector<64x1xf32>
        tpu.vector_store %arg8[%c0_21, %c0_22], %25 {strides = array<i32>} : memref<64x1xf32, #tpu.memory_space<vmem>>, vector<64x1xf32>,
        %cst_23 = arith.constant 0.000000e+00 : bf16
        %27 = vector.broadcast %cst_23 : bf16 to vector<64x32xbf16>
        %c0_24 = arith.constant 0 : index
        %c0_25 = arith.constant 0 : index
        %28 = vector.load %arg6[%c0_24, %c0_25] : memref<64x32xbf16, #tpu.memory_space<vmem>>, vector<64x32xbf16>
        tpu.vector_store %arg6[%c0_24, %c0_25], %27 {strides = array<i32>} : memref<64x32xbf16, #tpu.memory_space<vmem>>, vector<64x32xbf16>,
      } else {
      }
      %c0_7 = arith.constant 0 : index
      %c0_8 = arith.constant 0 : index
      %12 = vector.load %arg7[%c0_7, %c0_8] : memref<64x1xf32, #tpu.memory_space<vmem>>, vector<64x1xf32>
      %cst_9 = arith.constant dense<0.000000e+00> : vector<64xf32>
      %13 = vector.multi_reduction <add>, %2, %cst_9 [1] : vector<64x32xf32> to vector<64xf32>
      %14 = vector.shape_cast %13 : vector<64xf32> to vector<64x1xf32>
      %15 = arith.addf %12, %14 : vector<64x1xf32>
      %c0_10 = arith.constant 0 : index
      %c0_11 = arith.constant 0 : index
      %16 = vector.load %arg7[%c0_10, %c0_11] : memref<64x1xf32, #tpu.memory_space<vmem>>, vector<64x1xf32>
      tpu.vector_store %arg7[%c0_10, %c0_11], %15 {strides = array<i32>} : memref<64x1xf32, #tpu.memory_space<vmem>>, vector<64x1xf32>,
      %c0_12 = arith.constant 0 : index
      %c0_13 = arith.constant 0 : index
      %17 = vector.load %arg8[%c0_12, %c0_13] : memref<64x1xf32, #tpu.memory_space<vmem>>, vector<64x1xf32>
      %18 = arith.mulf %2, %2 : vector<64x32xf32>
      %cst_14 = arith.constant dense<0.000000e+00> : vector<64xf32>
      %19 = vector.multi_reduction <add>, %18, %cst_14 [1] : vector<64x32xf32> to vector<64xf32>
      %20 = vector.shape_cast %19 : vector<64xf32> to vector<64x1xf32>
      %21 = arith.addf %17, %20 : vector<64x1xf32>
      %c0_15 = arith.constant 0 : index
      %c0_16 = arith.constant 0 : index
      %22 = vector.load %arg8[%c0_15, %c0_16] : memref<64x1xf32, #tpu.memory_space<vmem>>, vector<64x1xf32>
      tpu.vector_store %arg8[%c0_15, %c0_16], %21 {strides = array<i32>} : memref<64x1xf32, #tpu.memory_space<vmem>>, vector<64x1xf32>,
    } else {
    }
    %c1_i32 = arith.constant 1 : i32
    %6 = arith.cmpi eq, %arg0, %c1_i32 : i32
    %7 = arith.extui %6 : i1 to i32
    %c0_i32_4 = arith.constant 0 : i32
    %8 = arith.cmpi ne, %7, %c0_i32_4 : i32
    scf.if %8 {
      %c0_i32_5 = arith.constant 0 : i32
      %9 = arith.cmpi eq, %arg1, %c0_i32_5 : i32
      %10 = arith.extui %9 : i1 to i32
      %c0_i32_6 = arith.constant 0 : i32
      %11 = arith.cmpi ne, %10, %c0_i32_6 : i32
      scf.if %11 {
        %c0_15 = arith.constant 0 : index
        %c0_16 = arith.constant 0 : index
        %25 = vector.load %arg7[%c0_15, %c0_16] : memref<64x1xf32, #tpu.memory_space<vmem>>, vector<64x1xf32>
        %cst_17 = arith.constant 3.125000e-02 : f32
        %26 = vector.broadcast %cst_17 : f32 to vector<64x1xf32>
        %27 = arith.mulf %25, %26 : vector<64x1xf32>
        %c0_18 = arith.constant 0 : index
        %c0_19 = arith.constant 0 : index
        %28 = vector.load %arg8[%c0_18, %c0_19] : memref<64x1xf32, #tpu.memory_space<vmem>>, vector<64x1xf32>
        %cst_20 = arith.constant 3.125000e-02 : f32
        %29 = vector.broadcast %cst_20 : f32 to vector<64x1xf32>
        %30 = arith.mulf %28, %29 : vector<64x1xf32>
        %31 = arith.mulf %27, %27 : vector<64x1xf32>
        %32 = arith.subf %30, %31 : vector<64x1xf32>
        %cst_21 = arith.constant 0.000000e+00 : f32
        %33 = vector.broadcast %cst_21 : f32 to vector<64x1xf32>
        %34 = arith.maximumf %32, %33 : vector<64x1xf32>
        %c0_22 = arith.constant 0 : index
        %c0_23 = arith.constant 0 : index
        %35 = vector.load %arg4[%c0_22, %c0_23] : memref<64x1xf32, #tpu.memory_space<vmem>>, vector<64x1xf32>
        %cst_24 = arith.constant 9.99999974E-6 : f32
        %36 = vector.broadcast %cst_24 : f32 to vector<64x1xf32>
        %37 = arith.addf %34, %36 : vector<64x1xf32>
        %38 = math.rsqrt %37 : vector<64x1xf32>
        %39 = arith.mulf %35, %38 : vector<64x1xf32>
        %c0_25 = arith.constant 0 : index
        %c0_26 = arith.constant 0 : index
        %40 = vector.load %arg9[%c0_25, %c0_26] : memref<64x1xf32, #tpu.memory_space<vmem>>, vector<64x1xf32>
        tpu.vector_store %arg9[%c0_25, %c0_26], %39 {strides = array<i32>} : memref<64x1xf32, #tpu.memory_space<vmem>>, vector<64x1xf32>,
        %c0_27 = arith.constant 0 : index
        %c0_28 = arith.constant 0 : index
        %41 = vector.load %arg5[%c0_27, %c0_28] : memref<64x1xf32, #tpu.memory_space<vmem>>, vector<64x1xf32>
        %42 = arith.mulf %27, %39 : vector<64x1xf32>
        %43 = arith.subf %41, %42 : vector<64x1xf32>
        %c0_29 = arith.constant 0 : index
        %c0_30 = arith.constant 0 : index
        %44 = vector.load %arg10[%c0_29, %c0_30] : memref<64x1xf32, #tpu.memory_space<vmem>>, vector<64x1xf32>
        tpu.vector_store %arg10[%c0_29, %c0_30], %43 {strides = array<i32>} : memref<64x1xf32, #tpu.memory_space<vmem>>, vector<64x1xf32>,
      } else {
      }
      %c0_7 = arith.constant 0 : index
      %c0_8 = arith.constant 0 : index
      %12 = vector.load %arg9[%c0_7, %c0_8] : memref<64x1xf32, #tpu.memory_space<vmem>>, vector<64x1xf32>
      %13 = vector.broadcast %12 : vector<64x1xf32> to vector<64x32xf32>
      %14 = arith.mulf %2, %13 : vector<64x32xf32>
      %c0_9 = arith.constant 0 : index
      %c0_10 = arith.constant 0 : index
      %15 = vector.load %arg10[%c0_9, %c0_10] : memref<64x1xf32, #tpu.memory_space<vmem>>, vector<64x1xf32>
      %16 = vector.broadcast %15 : vector<64x1xf32> to vector<64x32xf32>
      %17 = arith.addf %14, %16 : vector<64x32xf32>
      %cst_11 = arith.constant 0.000000e+00 : f32
      %18 = vector.broadcast %cst_11 : f32 to vector<64x32xf32>
      %19 = arith.cmpf ogt, %17, %18 : vector<64x32xf32>
      %cst_12 = arith.constant 2.000000e-01 : f32
      %20 = vector.broadcast %cst_12 : f32 to vector<64x32xf32>
      %21 = arith.mulf %20, %17 : vector<64x32xf32>
      %22 = arith.select %19, %17, %21 : vector<64x32xi1>, vector<64x32xf32>
      %23 = arith.truncf %22 : vector<64x32xf32> to vector<64x32xbf16>
      %c0_13 = arith.constant 0 : index
      %c0_14 = arith.constant 0 : index
      %24 = vector.load %arg6[%c0_13, %c0_14] : memref<64x32xbf16, #tpu.memory_space<vmem>>, vector<64x32xbf16>
      tpu.vector_store %arg6[%c0_13, %c0_14], %23 {strides = array<i32>} : memref<64x32xbf16, #tpu.memory_space<vmem>>, vector<64x32xbf16>,
    } else {
    }
    return
  }
  func.func @transform_0(%arg0: i32, %arg1: i32) -> (i32, i32) {
    %c0_i32 = arith.constant 0 : i32
    %c0_i32_0 = arith.constant 0 : i32
    %c0_i32_1 = arith.constant 0 : i32
    return %c0_i32, %c0_i32_0 : i32, i32
  }
  func.func @transform_1(%arg0: i32, %arg1: i32) -> (i32, i32) {
    %c0_i32 = arith.constant 0 : i32
    %c0_i32_0 = arith.constant 0 : i32
    return %c0_i32, %arg1 : i32, i32
  }
  func.func @transform_2(%arg0: i32, %arg1: i32) -> (i32, i32) {
    %c0_i32 = arith.constant 0 : i32
    %c0_i32_0 = arith.constant 0 : i32
    %c0_i32_1 = arith.constant 0 : i32
    return %c0_i32, %c0_i32_0 : i32, i32
  }
  func.func @transform_3(%arg0: i32, %arg1: i32) -> (i32, i32) {
    %c0_i32 = arith.constant 0 : i32
    %c0_i32_0 = arith.constant 0 : i32
    %c0_i32_1 = arith.constant 0 : i32
    return %c0_i32, %c0_i32_0 : i32, i32
  }
  func.func @transform_4(%arg0: i32, %arg1: i32) -> (i32, i32) {
    %0 = arith.muli %arg1, %arg0 : i32
    %c0_i32 = arith.constant 0 : i32
    %c0_i32_0 = arith.constant 0 : i32
    return %c0_i32, %0 : i32, i32
  }
}

module attributes {stable_mosaic.version = 11 : i64} {
  func.func @_gemm_act_kernel(%arg0: i32, %arg1: memref<1x1024xbf16, #tpu.memory_space<vmem>>, %arg2: memref<1024x2xbf16, #tpu.memory_space<vmem>>, %arg3: memref<1x2xf32, #tpu.memory_space<vmem>>) attributes {dimension_semantics = [#tpu.dimension_semantics<parallel>], iteration_bounds = array<i64: 1>, scalar_prefetch = 0 : i64, scratch_operands = 0 : i64, tpu.core_type = #tpu.core_type<tc>, window_params = [{pipeline_mode = #tpu.pipeline_mode<synchronous>, transform_indices = @transform_0, window_bounds = array<i64: 1, 1024>}, {transform_indices = @transform_1, window_bounds = array<i64: 1024, 2>}, {transform_indices = @transform_2, window_bounds = array<i64: 1, 2>}]} {
    %c0 = arith.constant 0 : index
    %c0_0 = arith.constant 0 : index
    %0 = vector.load %arg1[%c0, %c0_0] : memref<1x1024xbf16, #tpu.memory_space<vmem>>, vector<1x1024xbf16>
    %c0_1 = arith.constant 0 : index
    %c0_2 = arith.constant 0 : index
    %1 = vector.load %arg2[%c0_1, %c0_2] : memref<1024x2xbf16, #tpu.memory_space<vmem>>, vector<1024x2xbf16>
    %cst = arith.constant dense<0.000000e+00> : vector<1x2xf32>
    %2 = tpu.matmul %0, %1, %cst {dimension_numbers = #tpu.dot_dimension_numbers<[1], [0], [0], [1], [0, 0, 1, 1], [], []>} : vector<1x1024xbf16>, vector<1024x2xbf16>, vector<1x2xf32> -> vector<1x2xf32>
    %cst_3 = arith.constant 0.000000e+00 : f32
    %3 = vector.broadcast %cst_3 : f32 to vector<1x2xf32>
    %4 = arith.subf %3, %2 : vector<1x2xf32>
    %5 = math.exp %4 : vector<1x2xf32>
    %cst_4 = arith.constant 1.000000e+00 : f32
    %6 = vector.broadcast %cst_4 : f32 to vector<1x2xf32>
    %7 = arith.addf %6, %5 : vector<1x2xf32>
    %cst_5 = arith.constant 1.000000e+00 : f32
    %8 = vector.broadcast %cst_5 : f32 to vector<1x2xf32>
    %9 = arith.divf %8, %7 : vector<1x2xf32>
    %c0_6 = arith.constant 0 : index
    %c0_7 = arith.constant 0 : index
    %10 = vector.load %arg3[%c0_6, %c0_7] : memref<1x2xf32, #tpu.memory_space<vmem>>, vector<1x2xf32>
    tpu.vector_store %arg3[%c0_6, %c0_7], %9 {strides = array<i32>} : memref<1x2xf32, #tpu.memory_space<vmem>>, vector<1x2xf32>,
    return
  }
  func.func @transform_0(%arg0: i32) -> (i32, i32) {
    %c0_i32 = arith.constant 0 : i32
    %c0_i32_0 = arith.constant 0 : i32
    %c0_i32_1 = arith.constant 0 : i32
    return %c0_i32, %c0_i32_0 : i32, i32
  }
  func.func @transform_1(%arg0: i32) -> (i32, i32) {
    %c0_i32 = arith.constant 0 : i32
    %c0_i32_0 = arith.constant 0 : i32
    return %c0_i32, %arg0 : i32, i32
  }
  func.func @transform_2(%arg0: i32) -> (i32, i32) {
    %c0_i32 = arith.constant 0 : i32
    %c0_i32_0 = arith.constant 0 : i32
    return %c0_i32, %arg0 : i32, i32
  }
}

</mosaic_0001>

<llo_original>
// kernel: tpu_custom_call.1
$region0: #{tpu_custom_call.1}
  #allocation0 [shape = 'u32[]', space=smem, size = 0x4, offset = 0x4, fixed_abs, tag = 'smem constant byte address 0x4 - core index']
  #allocation1 [shape = 'u32[144,128]{1,0:T(1,128)}', space=vmem, size = 0x12000, scoped, tag = 'internal scratch']
  %s0 = inlined_call_operand.hbm [shape: f32[8,128], index: 0, kind: input, shape index: {}]
  %s1 = inlined_call_operand.hbm [shape: f32[8,128], index: 1, kind: output, shape index: {}]
  %s2 = sld [smem:[#allocation0]]
  $region41: #{tpu_custom_call.1} parent=0
    _
  %s4 = ssub.s32 1, %s2
  %s5 = scalar_select 0, %s4, %s2
  $region1: #{tpu_custom_call.1} parent=0
    #allocation2 [shape = 'u8[4096]{0}', space=vmem, size = 0x1000, scoped, tag = 'input window, operand 0, single buffered']
    #allocation3 [shape = 's32[2]{0}', space=sflag, size = 0x8, scoped, tag = 'scoped memory for tpu_custom_call.1']
    #allocation4 [shape = 's32[2]{0}', space=sflag, size = 0x8, scoped, tag = 'scoped memory for tpu_custom_call.1']
    #allocation5 [shape = 'u8[4096]{0}', space=vmem, size = 0x1000, scoped, tag = 'output window, operand 0, single buffered']
    %6 = vsyncpa [#allocation3], 0
    %7 = vsyncpa [#allocation4], 0
    loop: start=0, step=1, limit=4
    $region2: #{tpu_custom_call.1} parent=1 // loop_pre_header
      _
    $region3: #{tpu_custom_call.1} parent=1 // loop_header
      %s9 = sphi 0, %s13
      %p10 = scmp.ge.s32.totalorder %s9, 4
      %s17 = sphi 0, %s17
      %s19 = sphi 0, %s17
      %s20 = sphi 0, %s19
      %s34 = sphi 0, %s20
      %s38 = sphi 0, %s38
      %s40 = sphi 0, %s38
      %s41 = sphi 0, %s40
      %s55 = sphi 0, %s41
    $region4: #{tpu_custom_call.1} parent=1 // loop_header_branch
      %12 = sbr.rel (%p10) target = $region8
    $region5: #{tpu_custom_call.1} parent=1 // loop_body
      %s14 = ssub.s32 %s9, 1
      %s15 = ssub.s32 %s9, 2
      %s16 = sadd.s32 %s9, 1
      %s18 = sadd.s32 %s17, 1
      %p21 = scmp.eq.s32.totalorder %s9, 1
      %p22 = scmp.ne.s32.totalorder %s17, %s19
      %p23 = scmp.eq.s32.totalorder %s9, 0
      %p24 = por %p22, %p23
      %p25 = scmp.ne.s32.totalorder %s17, %s19
      %p26 = scmp.eq.s32.totalorder %s14, 1
      %p27 = por %p25, %p26
      %p28 = scmp.ne.s32.totalorder %s19, %s20
      %p29 = scmp.eq.s32.totalorder %s14, 0
      %p30 = por %p28, %p29
      %p31 = scmp.ne.s32.totalorder %s19, %s20
      %p32 = scmp.eq.s32.totalorder %s15, 1
      %p33 = por %p31, %p32
      %p35 = scmp.ne.s32.totalorder %s20, %s34
      %p36 = scmp.eq.s32.totalorder %s15, 0
      %p37 = por %p35, %p36
      %s39 = sadd.s32 %s38, 1
      %p42 = scmp.eq.s32.totalorder %s9, 1
      %p43 = scmp.ne.s32.totalorder %s38, %s40
      %p44 = scmp.eq.s32.totalorder %s9, 0
      %p45 = por %p43, %p44
      %p46 = scmp.ne.s32.totalorder %s38, %s40
      %p47 = scmp.eq.s32.totalorder %s14, 1
      %p48 = por %p46, %p47
      %p49 = scmp.ne.s32.totalorder %s40, %s41
      %p50 = scmp.eq.s32.totalorder %s14, 0
      %p51 = por %p49, %p50
      %p52 = scmp.ne.s32.totalorder %s40, %s41
      %p53 = scmp.eq.s32.totalorder %s15, 1
      %p54 = por %p52, %p53
      %p56 = scmp.ne.s32.totalorder %s41, %s55
      %p57 = scmp.eq.s32.totalorder %s15, 0
      %p58 = por %p56, %p57
      %p59 = scmp.le.s32.totalorder 1, %s9
      %p60 = scmp.lt.s32.totalorder %s9, 3
      %p61 = pnand %p59, %p60
      %p62 = pneg %p61
      // Predicated region
      $region9: #{tpu_custom_call.1} parent=5 // pred_check
        _
      $region10: #{tpu_custom_call.1} parent=5 // pred_check_branch
        %64 = sbr.rel (%p61) target = $region12
      $region11: #{tpu_custom_call.1} parent=5 // pred_region
        %s65 = ssub.s32 %s9, 1
        // Predicated region
        $region13: #{tpu_custom_call.1} parent=11 // pred_check
          %p66 = pneg %p30
        $region14: #{tpu_custom_call.1} parent=11 // pred_check_branch
          %68 = sbr.rel (%p66) target = $region16
        $region15: #{tpu_custom_call.1} parent=11 // pred_region
          %s70 = ssub.s32 128, 128
          %71 = vsyncadd [#allocation3], %s70
          %s73 = sshll.u32 [#allocation2], 4
          %s74 = int_to_ptr.vmem [resolvable:$true] %s73
          %76 = dma.hbm_to_vmem [thread:$0]  %s0, 128, %s74, [#allocation3]
        $region16: #{tpu_custom_call.1} parent=11 // pred_fallthru
          _
      $region12: #{tpu_custom_call.1} parent=5 // pred_fallthru
        _
      %p77 = scmp.lt.s32.totalorder %s9, 2
      // Predicated region
      $region17: #{tpu_custom_call.1} parent=5 // pred_check
        %p78 = pneg %p77
      $region18: #{tpu_custom_call.1} parent=5 // pred_check_branch
        %80 = sbr.rel (%p78) target = $region20
      $region19: #{tpu_custom_call.1} parent=5 // pred_region
        _
      $region20: #{tpu_custom_call.1} parent=5 // pred_fallthru
        _
      %p81 = scmp.le.s32.totalorder 1, %s9
      %p82 = scmp.lt.s32.totalorder %s9, 3
      %p83 = pnand %p81, %p82
      %p84 = pneg %p83
      // Predicated region
      $region21: #{tpu_custom_call.1} parent=5 // pred_check
        _
      $region22: #{tpu_custom_call.1} parent=5 // pred_check_branch
        %86 = sbr.rel (%p83) target = $region24
      $region23: #{tpu_custom_call.1} parent=5 // pred_region
        %s87 = ssub.s32 %s9, 1
        // Predicated region
        $region25: #{tpu_custom_call.1} parent=23 // pred_check
          %p88 = pneg %p30
        $region26: #{tpu_custom_call.1} parent=23 // pred_check_branch
          %90 = sbr.rel (%p88) target = $region28
        $region27: #{tpu_custom_call.1} parent=23 // pred_region
          %91 = dma.done [#allocation3], 128
        $region28: #{tpu_custom_call.1} parent=23 // pred_fallthru
          _
        %p92 = pneg %p30
        %p93 = pneg %p27
        %p94 = pneg %p51
        %p95 = pneg %p48
        %v96 = vld [vmem:[#allocation2] sm:$0xff]
        %v97 = vadd.f32 %v96, 1.0
        %98 = vst [vmem:[#allocation5] sm:$0xff] %v97
        // Predicated region
        $region29: #{tpu_custom_call.1} parent=23 // pred_check
          %p99 = pneg %p48
        $region30: #{tpu_custom_call.1} parent=23 // pred_check_branch
          %101 = sbr.rel (%p99) target = $region32
        $region31: #{tpu_custom_call.1} parent=23 // pred_region
          %s103 = ssub.s32 128, 128
          %104 = vsyncadd [#allocation4], %s103
          %s106 = sshll.u32 [#allocation5], 4
          %s107 = int_to_ptr.vmem [resolvable:$true] %s106
          %109 = dma.vmem_to_hbm [thread:$0]  %s107, 128, %s1, [#allocation4]
        $region32: #{tpu_custom_call.1} parent=23 // pred_fallthru
          _
        // Predicated region
        $region33: #{tpu_custom_call.1} parent=23 // pred_check
          %p110 = pneg %p48
        $region34: #{tpu_custom_call.1} parent=23 // pred_check_branch
          %112 = sbr.rel (%p110) target = $region36
        $region35: #{tpu_custom_call.1} parent=23 // pred_region
          %113 = dma.done [#allocation4], 128
        $region36: #{tpu_custom_call.1} parent=23 // pred_fallthru
          _
      $region24: #{tpu_custom_call.1} parent=5 // pred_fallthru
        _
      %p114 = scmp.le.s32.totalorder 2, %s9
      // Predicated region
      $region37: #{tpu_custom_call.1} parent=5 // pred_check
        %p115 = pneg %p114
      $region38: #{tpu_custom_call.1} parent=5 // pred_check_branch
        %117 = sbr.rel (%p115) target = $region40
      $region39: #{tpu_custom_call.1} parent=5 // pred_region
        %s118 = ssub.s32 %s9, 2
      $region40: #{tpu_custom_call.1} parent=5 // pred_fallthru
        _
    $region6: #{tpu_custom_call.1} parent=1 // loop_footer
      %s13 = sadd.s32 1, %s9
    $region7: #{tpu_custom_call.1} parent=1 // loop_footer_branch
      %8 = sbr.rel target = $region3
    $region8: #{tpu_custom_call.1} parent=1 // loop_exit
      _
    %119 = vsyncpa [#allocation3], 1
    %s120 = scalar_lea.sflag [#allocation3], 1
    %121 = vsyncpa %s120, 1
    %122 = vsyncpa [#allocation4], 1
    %s123 = scalar_lea.sflag [#allocation4], 1
    %124 = vsyncpa %s123, 1

// kernel: official_discriminator_forward.5
$region0: #{official_discriminator_forward.5}
  #allocation0 [shape = 'u32[]', space=smem, size = 0x4, offset = 0x4, fixed_abs, tag = 'smem constant byte address 0x4 - core index']
  #allocation1 [shape = 'u32[144,128]{1,0:T(1,128)}', space=vmem, size = 0x12000, scoped, tag = 'internal scratch']
  %s0 = inlined_call_operand.vmem [shape: bf16[8,48], index: 0, kind: input, shape index: {}]
  %s1 = inlined_call_operand.vmem [shape: bf16[48,2048], index: 1, kind: input, shape index: {}]
  %s2 = inlined_call_operand.vmem [shape: bf16[8,2048], index: 2, kind: output, shape index: {}]
  %s3 = sld [smem:[#allocation0]]
  $region18: #{official_discriminator_forward.5} parent=0
    _
  %s5 = ssub.s32 1, %s3
  %s6 = scalar_select 0, %s5, %s3
  // Predicated region
  $region2: #{official_discriminator_forward.5} parent=0 // pred_check
    _
  $region3: #{official_discriminator_forward.5} parent=0 // pred_check_branch
    %8 = sbr.rel (0) target = $region5
  $region4: #{official_discriminator_forward.5} parent=0 // pred_region
    _
  $region5: #{official_discriminator_forward.5} parent=0 // pred_fallthru
    _
  // Predicated region
  $region6: #{official_discriminator_forward.5} parent=0 // pred_check
    _
  $region7: #{official_discriminator_forward.5} parent=0 // pred_check_branch
    %10 = sbr.rel (0) target = $region9
  $region8: #{official_discriminator_forward.5} parent=0 // pred_region
    _
  $region9: #{official_discriminator_forward.5} parent=0 // pred_fallthru
    _
  %v12 = vld [vmem:[%s0] sm:$0xf]
  %v13 = vld [vmem:[%s1] sm:$0xff]
  %v14 = vld [vmem:[%s1 + $0x8] sm:$0xff]
  %v15 = vld [vmem:[%s1 + $0x10] sm:$0xff]
  %v16 = vld [vmem:[%s1 + $0x18] sm:$0xff]
  %v17 = vld [vmem:[%s1 + $0x20] sm:$0xff]
  %v18 = vld [vmem:[%s1 + $0x28] sm:$0xff]
  %v19 = vld [vmem:[%s1 + $0x30] sm:$0xff]
  %v20 = vld [vmem:[%s1 + $0x38] sm:$0xff]
  %v21 = vld [vmem:[%s1 + $0x40] sm:$0xff]
  %v22 = vld [vmem:[%s1 + $0x48] sm:$0xff]
  %v23 = vld [vmem:[%s1 + $0x50] sm:$0xff]
  %v24 = vld [vmem:[%s1 + $0x58] sm:$0xff]
  %v25 = vld [vmem:[%s1 + $0x60] sm:$0xff]
  %v26 = vld [vmem:[%s1 + $0x68] sm:$0xff]
  %v27 = vld [vmem:[%s1 + $0x70] sm:$0xff]
  %v28 = vld [vmem:[%s1 + $0x78] sm:$0xff]
  %v29 = vld [vmem:[%s1 + $0x80] sm:$0xff]
  %v30 = vld [vmem:[%s1 + $0x88] sm:$0xff]
  %v31 = vld [vmem:[%s1 + $0x90] sm:$0xff]
  %v32 = vld [vmem:[%s1 + $0x98] sm:$0xff]
  %v33 = vld [vmem:[%s1 + $0xa0] sm:$0xff]
  %v34 = vld [vmem:[%s1 + $0xa8] sm:$0xff]
  %v35 = vld [vmem:[%s1 + $0xb0] sm:$0xff]
  %v36 = vld [vmem:[%s1 + $0xb8] sm:$0xff]
  %v37 = vld [vmem:[%s1 + $0xc0] sm:$0xff]
  %v38 = vld [vmem:[%s1 + $0xc8] sm:$0xff]
  %v39 = vld [vmem:[%s1 + $0xd0] sm:$0xff]
  %v40 = vld [vmem:[%s1 + $0xd8] sm:$0xff]
  %v41 = vld [vmem:[%s1 + $0xe0] sm:$0xff]
  %v42 = vld [vmem:[%s1 + $0xe8] sm:$0xff]
  %v43 = vld [vmem:[%s1 + $0xf0] sm:$0xff]
  %v44 = vld [vmem:[%s1 + $0xf8] sm:$0xff]
  %v45 = vld [vmem:[%s1 + $0x100] sm:$0xff]
  %v46 = vld [vmem:[%s1 + $0x108] sm:$0xff]
  %v47 = vld [vmem:[%s1 + $0x110] sm:$0xff]
  %v48 = vld [vmem:[%s1 + $0x118] sm:$0xff]
  %v49 = vld [vmem:[%s1 + $0x120] sm:$0xff]
  %v50 = vld [vmem:[%s1 + $0x128] sm:$0xff]
  %v51 = vld [vmem:[%s1 + $0x130] sm:$0xff]
  %v52 = vld [vmem:[%s1 + $0x138] sm:$0xff]
  %v53 = vld [vmem:[%s1 + $0x140] sm:$0xff]
  %v54 = vld [vmem:[%s1 + $0x148] sm:$0xff]
  %v55 = vld [vmem:[%s1 + $0x150] sm:$0xff]
  %v56 = vld [vmem:[%s1 + $0x158] sm:$0xff]
  %v57 = vld [vmem:[%s1 + $0x160] sm:$0xff]
  %v58 = vld [vmem:[%s1 + $0x168] sm:$0xff]
  %v59 = vld [vmem:[%s1 + $0x170] sm:$0xff]
  %v60 = vld [vmem:[%s1 + $0x178] sm:$0xff]
  %v109 = vunpack.c.l.b16 %v13
  %v110 = vunpack.c.h.b16 %v13
  %v111 = vunpack.c.l.b16 %v14
  %v112 = vunpack.c.h.b16 %v14
  %v113 = vunpack.c.l.b16 %v15
  %v114 = vunpack.c.h.b16 %v15
  %v115 = vunpack.c.l.b16 %v16
  %v116 = vunpack.c.h.b16 %v16
  %v117 = vunpack.c.l.b16 %v17
  %v118 = vunpack.c.h.b16 %v17
  %v119 = vunpack.c.l.b16 %v18
  %v120 = vunpack.c.h.b16 %v18
  %v121 = vunpack.c.l.b16 %v19
  %v122 = vunpack.c.h.b16 %v19
  %v123 = vunpack.c.l.b16 %v20
  %v124 = vunpack.c.h.b16 %v20
  %v125 = vunpack.c.l.b16 %v21
  %v126 = vunpack.c.h.b16 %v21
  %v127 = vunpack.c.l.b16 %v22
  %v128 = vunpack.c.h.b16 %v22
  %v129 = vunpack.c.l.b16 %v23
  %v130 = vunpack.c.h.b16 %v23
  %v131 = vunpack.c.l.b16 %v24
  %v132 = vunpack.c.h.b16 %v24
  %v133 = vunpack.c.l.b16 %v25
  %v134 = vunpack.c.h.b16 %v25
  %v135 = vunpack.c.l.b16 %v26
  %v136 = vunpack.c.h.b16 %v26
  %v137 = vunpack.c.l.b16 %v27
  %v138 = vunpack.c.h.b16 %v27
  %v139 = vunpack.c.l.b16 %v28
  %v140 = vunpack.c.h.b16 %v28
  %v141 = vunpack.c.l.b16 %v29
  %v142 = vunpack.c.h.b16 %v29
  %v143 = vunpack.c.l.b16 %v30
  %v144 = vunpack.c.h.b16 %v30
  %v145 = vunpack.c.l.b16 %v31
  %v146 = vunpack.c.h.b16 %v31
  %v147 = vunpack.c.l.b16 %v32
  %v148 = vunpack.c.h.b16 %v32
  %v149 = vunpack.c.l.b16 %v33
  %v150 = vunpack.c.h.b16 %v33
  %v151 = vunpack.c.l.b16 %v34
  %v152 = vunpack.c.h.b16 %v34
  %v153 = vunpack.c.l.b16 %v35
  %v154 = vunpack.c.h.b16 %v35
  %v155 = vunpack.c.l.b16 %v36
  %v156 = vunpack.c.h.b16 %v36
  %v157 = vunpack.c.l.b16 %v37
  %v158 = vunpack.c.h.b16 %v37
  %v159 = vunpack.c.l.b16 %v38
  %v160 = vunpack.c.h.b16 %v38
  %v161 = vunpack.c.l.b16 %v39
  %v162 = vunpack.c.h.b16 %v39
  %v163 = vunpack.c.l.b16 %v40
  %v164 = vunpack.c.h.b16 %v40
  %v165 = vunpack.c.l.b16 %v41
  %v166 = vunpack.c.h.b16 %v41
  %v167 = vunpack.c.l.b16 %v42
  %v168 = vunpack.c.h.b16 %v42
  %v169 = vunpack.c.l.b16 %v43
  %v170 = vunpack.c.h.b16 %v43
  %v171 = vunpack.c.l.b16 %v44
  %v172 = vunpack.c.h.b16 %v44
  %v173 = vunpack.c.l.b16 %v45
  %v174 = vunpack.c.h.b16 %v45
  %v175 = vunpack.c.l.b16 %v46
  %v176 = vunpack.c.h.b16 %v46
  %v177 = vunpack.c.l.b16 %v47
  %v178 = vunpack.c.h.b16 %v47
  %v179 = vunpack.c.l.b16 %v48
  %v180 = vunpack.c.h.b16 %v48
  %v181 = vunpack.c.l.b16 %v49
  %v182 = vunpack.c.h.b16 %v49
  %v183 = vunpack.c.l.b16 %v50
  %v184 = vunpack.c.h.b16 %v50
  %v185 = vunpack.c.l.b16 %v51
  %v186 = vunpack.c.h.b16 %v51
  %v187 = vunpack.c.l.b16 %v52
  %v188 = vunpack.c.h.b16 %v52
  %v189 = vunpack.c.l.b16 %v53
  %v190 = vunpack.c.h.b16 %v53
  %v191 = vunpack.c.l.b16 %v54
  %v192 = vunpack.c.h.b16 %v54
  %v193 = vunpack.c.l.b16 %v55
  %v194 = vunpack.c.h.b16 %v55
  %v195 = vunpack.c.l.b16 %v56
  %v196 = vunpack.c.h.b16 %v56
  %v197 = vunpack.c.l.b16 %v57
  %v198 = vunpack.c.h.b16 %v57
  %v199 = vunpack.c.l.b16 %v58
  %v200 = vunpack.c.h.b16 %v58
  %v201 = vunpack.c.l.b16 %v59
  %v202 = vunpack.c.h.b16 %v59
  %v203 = vunpack.c.l.b16 %v60
  %v204 = vunpack.c.h.b16 %v60
  %v205 = vpack.c.b16 %v125, %v109
  %v206 = vpack.c.b16 %v126, %v110
  %v207 = vpack.c.b16 %v127, %v111
  %v208 = vpack.c.b16 %v128, %v112
  %v209 = vpack.c.b16 %v129, %v113
  %v210 = vpack.c.b16 %v130, %v114
  %v211 = vpack.c.b16 %v131, %v115
  %v212 = vpack.c.b16 %v132, %v116
  %v213 = vpack.c.b16 %v133, %v117
  %v214 = vpack.c.b16 %v134, %v118
  %v215 = vpack.c.b16 %v135, %v119
  %v216 = vpack.c.b16 %v136, %v120
  %v217 = vpack.c.b16 %v137, %v121
  %v218 = vpack.c.b16 %v138, %v122
  %v219 = vpack.c.b16 %v139, %v123
  %v220 = vpack.c.b16 %v140, %v124
  %v221 = vpack.c.b16 %v157, %v141
  %v222 = vpack.c.b16 %v158, %v142
  %v223 = vpack.c.b16 %v159, %v143
  %v224 = vpack.c.b16 %v160, %v144
  %v225 = vpack.c.b16 %v161, %v145
  %v226 = vpack.c.b16 %v162, %v146
  %v227 = vpack.c.b16 %v163, %v147
  %v228 = vpack.c.b16 %v164, %v148
  %v229 = vpack.c.b16 %v165, %v149
  %v230 = vpack.c.b16 %v166, %v150
  %v231 = vpack.c.b16 %v167, %v151
  %v232 = vpack.c.b16 %v168, %v152
  %v233 = vpack.c.b16 %v169, %v153
  %v234 = vpack.c.b16 %v170, %v154
  %v235 = vpack.c.b16 %v171, %v155
  %v236 = vpack.c.b16 %v172, %v156
  %v237 = vpack.c.b16 %v189, %v173
  %v238 = vpack.c.b16 %v190, %v174
  %v239 = vpack.c.b16 %v191, %v175
  %v240 = vpack.c.b16 %v192, %v176
  %v241 = vpack.c.b16 %v193, %v177
  %v242 = vpack.c.b16 %v194, %v178
  %v243 = vpack.c.b16 %v195, %v179
  %v244 = vpack.c.b16 %v196, %v180
  %v245 = vpack.c.b16 %v197, %v181
  %v246 = vpack.c.b16 %v198, %v182
  %v247 = vpack.c.b16 %v199, %v183
  %v248 = vpack.c.b16 %v200, %v184
  %v249 = vpack.c.b16 %v201, %v185
  %v250 = vpack.c.b16 %v202, %v186
  %v251 = vpack.c.b16 %v203, %v187
  %v252 = vpack.c.b16 %v204, %v188
  %vm301 = vcmask 392192
  %v303 = vsel %vm301, %v12, 0
  %305 = vmatprep.subr.bf16.mxu0 %v206
  %306 = vmatpush1.bf16.msra.mxu0 %v205
  %307 = vmatprep.subr.bf16.mxu0 %v222
  %308 = vmatpush1.bf16.msra.mxu0 %v221
  %309 = vmatprep.subr.bf16.mxu0 %v238
  %310 = vmatpush1.bf16.msra.mxu0 %v237
  %311 = vmatprep.subr.bf16.mxu0 0
  %312 = vmatpush1.bf16.msra.mxu0 0
  %313 = vmatprep.subr.bf16.mxu0 0
  %314 = vmatpush1.bf16.msra.mxu0 0
  %315 = vmatprep.subr.bf16.mxu0 0
  %316 = vmatpush1.bf16.msra.mxu0 0
  %317 = vmatprep.subr.bf16.mxu0 0
  %318 = vmatpush1.bf16.msra.mxu0 0
  %319 = vmatprep.subr.bf16.mxu0 0
  %320 = vmatpush1.bf16.msra.mxu0 0
  %321 = vmatprep.subr.bf16.mxu0 0
  %322 = vmatpush1.bf16.msra.mxu0 0
  %323 = vmatprep.subr.bf16.mxu0 0
  %324 = vmatpush1.bf16.msra.mxu0 0
  %325 = vmatprep.subr.bf16.mxu0 0
  %326 = vmatpush1.bf16.msra.mxu0 0
  %327 = vmatprep.subr.bf16.mxu0 0
  %328 = vmatpush1.bf16.msra.mxu0 0
  %329 = vmatprep.subr.bf16.mxu0 0
  %330 = vmatpush1.bf16.msra.mxu0 0
  %331 = vmatprep.subr.bf16.mxu0 0
  %332 = vmatpush1.bf16.msra.mxu0 0
  %333 = vmatprep.subr.bf16.mxu0 0
  %334 = vmatpush1.bf16.msra.mxu0 0
  %335 = vmatprep.subr.bf16.mxu0 0
  %336 = vmatpush1.bf16.msra.mxu0 0
  %337 = vmatprep.mubr.bf16.mxu0 0
  %338 = vmatmul.mubr.bf16.gmra.mrb[0].mxu0 %v303
  %v339 = vpop.f32.mrb[0].mxu0
  %v340 = vadd.f32 0.0, %v339
  %v341 = vpop.f32.mrb[0].mxu0
  %v342 = vadd.f32 0.0, %v341
  %v343 = vpop.f32.mrb[0].mxu0
  %v344 = vpop.f32.mrb[0].mxu0
  %345 = vdwg.mxu0
  %346 = vmatprep.subr.bf16.mxu0 %v208
  %347 = vmatpush1.bf16.msra.mxu0 %v207
  %348 = vmatprep.subr.bf16.mxu0 %v224
  %349 = vmatpush1.bf16.msra.mxu0 %v223
  %350 = vmatprep.subr.bf16.mxu0 %v240
  %351 = vmatpush1.bf16.msra.mxu0 %v239
  %352 = vmatprep.subr.bf16.mxu0 0
  %353 = vmatpush1.bf16.msra.mxu0 0
  %354 = vmatprep.subr.bf16.mxu0 0
  %355 = vmatpush1.bf16.msra.mxu0 0
  %356 = vmatprep.subr.bf16.mxu0 0
  %357 = vmatpush1.bf16.msra.mxu0 0
  %358 = vmatprep.subr.bf16.mxu0 0
  %359 = vmatpush1.bf16.msra.mxu0 0
  %360 = vmatprep.subr.bf16.mxu0 0
  %361 = vmatpush1.bf16.msra.mxu0 0
  %362 = vmatprep.subr.bf16.mxu0 0
  %363 = vmatpush1.bf16.msra.mxu0 0
  %364 = vmatprep.subr.bf16.mxu0 0
  %365 = vmatpush1.bf16.msra.mxu0 0
  %366 = vmatprep.subr.bf16.mxu0 0
  %367 = vmatpush1.bf16.msra.mxu0 0
  %368 = vmatprep.subr.bf16.mxu0 0
  %369 = vmatpush1.bf16.msra.mxu0 0
  %370 = vmatprep.subr.bf16.mxu0 0
  %371 = vmatpush1.bf16.msra.mxu0 0
  %372 = vmatprep.subr.bf16.mxu0 0
  %373 = vmatpush1.bf16.msra.mxu0 0
  %374 = vmatprep.subr.bf16.mxu0 0
  %375 = vmatpush1.bf16.msra.mxu0 0
  %376 = vmatprep.subr.bf16.mxu0 0
  %377 = vmatpush1.bf16.msra.mxu0 0
  %378 = vmatprep.mubr.bf16.mxu0 0
  %379 = vmatmul.mubr.bf16.gmra.mrb[0].mxu0 %v303
  %v380 = vpop.f32.mrb[0].mxu0
  %v381 = vadd.f32 0.0, %v380
  %v382 = vpop.f32.mrb[0].mxu0
  %v383 = vadd.f32 0.0, %v382
  %v384 = vpop.f32.mrb[0].mxu0
  %v385 = vpop.f32.mrb[0].mxu0
  %386 = vdwg.mxu0
  %387 = vmatprep.subr.bf16.mxu0 %v210
  %388 = vmatpush1.bf16.msra.mxu0 %v209
  %389 = vmatprep.subr.bf16.mxu0 %v226
  %390 = vmatpush1.bf16.msra.mxu0 %v225
  %391 = vmatprep.subr.bf16.mxu0 %v242
  %392 = vmatpush1.bf16.msra.mxu0 %v241
  %393 = vmatprep.subr.bf16.mxu0 0
  %394 = vmatpush1.bf16.msra.mxu0 0
  %395 = vmatprep.subr.bf16.mxu0 0
  %396 = vmatpush1.bf16.msra.mxu0 0
  %397 = vmatprep.subr.bf16.mxu0 0
  %398 = vmatpush1.bf16.msra.mxu0 0
  %399 = vmatprep.subr.bf16.mxu0 0
  %400 = vmatpush1.bf16.msra.mxu0 0
  %401 = vmatprep.subr.bf16.mxu0 0
  %402 = vmatpush1.bf16.msra.mxu0 0
  %403 = vmatprep.subr.bf16.mxu0 0
  %404 = vmatpush1.bf16.msra.mxu0 0
  %405 = vmatprep.subr.bf16.mxu0 0
  %406 = vmatpush1.bf16.msra.mxu0 0
  %407 = vmatprep.subr.bf16.mxu0 0
  %408 = vmatpush1.bf16.msra.mxu0 0
  %409 = vmatprep.subr.bf16.mxu0 0
  %410 = vmatpush1.bf16.msra.mxu0 0
  %411 = vmatprep.subr.bf16.mxu0 0
  %412 = vmatpush1.bf16.msra.mxu0 0
  %413 = vmatprep.subr.bf16.mxu0 0
  %414 = vmatpush1.bf16.msra.mxu0 0
  %415 = vmatprep.subr.bf16.mxu0 0
  %416 = vmatpush1.bf16.msra.mxu0 0
  %417 = vmatprep.subr.bf16.mxu0 0
  %418 = vmatpush1.bf16.msra.mxu0 0
  %419 = vmatprep.mubr.bf16.mxu0 0
  %420 = vmatmul.mubr.bf16.gmra.mrb[0].mxu0 %v303
  %v421 = vpop.f32.mrb[0].mxu0
  %v422 = vadd.f32 0.0, %v421
  %v423 = vpop.f32.mrb[0].mxu0
  %v424 = vadd.f32 0.0, %v423
  %v425 = vpop.f32.mrb[0].mxu0
  %v426 = vpop.f32.mrb[0].mxu0
  %427 = vdwg.mxu0
  %428 = vmatprep.subr.bf16.mxu0 %v212
  %429 = vmatpush1.bf16.msra.mxu0 %v211
  %430 = vmatprep.subr.bf16.mxu0 %v228
  %431 = vmatpush1.bf16.msra.mxu0 %v227
  %432 = vmatprep.subr.bf16.mxu0 %v244
  %433 = vmatpush1.bf16.msra.mxu0 %v243
  %434 = vmatprep.subr.bf16.mxu0 0
  %435 = vmatpush1.bf16.msra.mxu0 0
  %436 = vmatprep.subr.bf16.mxu0 0
  %437 = vmatpush1.bf16.msra.mxu0 0
  %438 = vmatprep.subr.bf16.mxu0 0
  %439 = vmatpush1.bf16.msra.mxu0 0
  %440 = vmatprep.subr.bf16.mxu0 0
  %441 = vmatpush1.bf16.msra.mxu0 0
  %442 = vmatprep.subr.bf16.mxu0 0
  %443 = vmatpush1.bf16.msra.mxu0 0
  %444 = vmatprep.subr.bf16.mxu0 0
  %445 = vmatpush1.bf16.msra.mxu0 0
  %446 = vmatprep.subr.bf16.mxu0 0
  %447 = vmatpush1.bf16.msra.mxu0 0
  %448 = vmatprep.subr.bf16.mxu0 0
  %449 = vmatpush1.bf16.msra.mxu0 0
  %450 = vmatprep.subr.bf16.mxu0 0
  %451 = vmatpush1.bf16.msra.mxu0 0
  %452 = vmatprep.subr.bf16.mxu0 0
  %453 = vmatpush1.bf16.msra.mxu0 0
  %454 = vmatprep.subr.bf16.mxu0 0
  %455 = vmatpush1.bf16.msra.mxu0 0
  %456 = vmatprep.subr.bf16.mxu0 0
  %457 = vmatpush1.bf16.msra.mxu0 0
  %458 = vmatprep.subr.bf16.mxu0 0
  %459 = vmatpush1.bf16.msra.mxu0 0
  %460 = vmatprep.mubr.bf16.mxu0 0
  %461 = vmatmul.mubr.bf16.gmra.mrb[0].mxu0 %v303
  %v462 = vpop.f32.mrb[0].mxu0
  %v463 = vadd.f32 0.0, %v462
  %v464 = vpop.f32.mrb[0].mxu0
  %v465 = vadd.f32 0.0, %v464
  %v466 = vpop.f32.mrb[0].mxu0
  %v467 = vpop.f32.mrb[0].mxu0
  %468 = vdwg.mxu0
  %469 = vmatprep.subr.bf16.mxu0 %v214
  %470 = vmatpush1.bf16.msra.mxu0 %v213
  %471 = vmatprep.subr.bf16.mxu0 %v230
  %472 = vmatpush1.bf16.msra.mxu0 %v229
  %473 = vmatprep.subr.bf16.mxu0 %v246
  %474 = vmatpush1.bf16.msra.mxu0 %v245
  %475 = vmatprep.subr.bf16.mxu0 0
  %476 = vmatpush1.bf16.msra.mxu0 0
  %477 = vmatprep.subr.bf16.mxu0 0
  %478 = vmatpush1.bf16.msra.mxu0 0
  %479 = vmatprep.subr.bf16.mxu0 0
  %480 = vmatpush1.bf16.msra.mxu0 0
  %481 = vmatprep.subr.bf16.mxu0 0
  %482 = vmatpush1.bf16.msra.mxu0 0
  %483 = vmatprep.subr.bf16.mxu0 0
  %484 = vmatpush1.bf16.msra.mxu0 0
  %485 = vmatprep.subr.bf16.mxu0 0
  %486 = vmatpush1.bf16.msra.mxu0 0
  %487 = vmatprep.subr.bf16.mxu0 0
  %488 = vmatpush1.bf16.msra.mxu0 0
  %489 = vmatprep.subr.bf16.mxu0 0
  %490 = vmatpush1.bf16.msra.mxu0 0
  %491 = vmatprep.subr.bf16.mxu0 0
  %492 = vmatpush1.bf16.msra.mxu0 0
  %493 = vmatprep.subr.bf16.mxu0 0
  %494 = vmatpush1.bf16.msra.mxu0 0
  %495 = vmatprep.subr.bf16.mxu0 0
  %496 = vmatpush1.bf16.msra.mxu0 0
  %497 = vmatprep.subr.bf16.mxu0 0
  %498 = vmatpush1.bf16.msra.mxu0 0
  %499 = vmatprep.subr.bf16.mxu0 0
  %500 = vmatpush1.bf16.msra.mxu0 0
  %501 = vmatprep.mubr.bf16.mxu0 0
  %502 = vmatmul.mubr.bf16.gmra.mrb[0].mxu0 %v303
  %v503 = vpop.f32.mrb[0].mxu0
  %v504 = vadd.f32 0.0, %v503
  %v505 = vpop.f32.mrb[0].mxu0
  %v506 = vadd.f32 0.0, %v505
  %v507 = vpop.f32.mrb[0].mxu0
  %v508 = vpop.f32.mrb[0].mxu0
  %509 = vdwg.mxu0
  %510 = vmatprep.subr.bf16.mxu0 %v216
  %511 = vmatpush1.bf16.msra.mxu0 %v215
  %512 = vmatprep.subr.bf16.mxu0 %v232
  %513 = vmatpush1.bf16.msra.mxu0 %v231
  %514 = vmatprep.subr.bf16.mxu0 %v248
  %515 = vmatpush1.bf16.msra.mxu0 %v247
  %516 = vmatprep.subr.bf16.mxu0 0
  %517 = vmatpush1.bf16.msra.mxu0 0
  %518 = vmatprep.subr.bf16.mxu0 0
  %519 = vmatpush1.bf16.msra.mxu0 0
  %520 = vmatprep.subr.bf16.mxu0 0
  %521 = vmatpush1.bf16.msra.mxu0 0
  %522 = vmatprep.subr.bf16.mxu0 0
  %523 = vmatpush1.bf16.msra.mxu0 0
  %524 = vmatprep.subr.bf16.mxu0 0
  %525 = vmatpush1.bf16.msra.mxu0 0
  %526 = vmatprep.subr.bf16.mxu0 0
  %527 = vmatpush1.bf16.msra.mxu0 0
  %528 = vmatprep.subr.bf16.mxu0 0
  %529 = vmatpush1.bf16.msra.mxu0 0
  %530 = vmatprep.subr.bf16.mxu0 0
  %531 = vmatpush1.bf16.msra.mxu0 0
  %532 = vmatprep.subr.bf16.mxu0 0
  %533 = vmatpush1.bf16.msra.mxu0 0
  %534 = vmatprep.subr.bf16.mxu0 0
  %535 = vmatpush1.bf16.msra.mxu0 0
  %536 = vmatprep.subr.bf16.mxu0 0
  %537 = vmatpush1.bf16.msra.mxu0 0
  %538 = vmatprep.subr.bf16.mxu0 0
  %539 = vmatpush1.bf16.msra.mxu0 0
  %540 = vmatprep.subr.bf16.mxu0 0
  %541 = vmatpush1.bf16.msra.mxu0 0
  %542 = vmatprep.mubr.bf16.mxu0 0
  %543 = vmatmul.mubr.bf16.gmra.mrb[0].mxu0 %v303
  %v544 = vpop.f32.mrb[0].mxu0
  %v545 = vadd.f32 0.0, %v544
  %v546 = vpop.f32.mrb[0].mxu0
  %v547 = vadd.f32 0.0, %v546
  %v548 = vpop.f32.mrb[0].mxu0
  %v549 = vpop.f32.mrb[0].mxu0
  %550 = vdwg.mxu0
  %551 = vmatprep.subr.bf16.mxu0 %v218
  %552 = vmatpush1.bf16.msra.mxu0 %v217
  %553 = vmatprep.subr.bf16.mxu0 %v234
  %554 = vmatpush1.bf16.msra.mxu0 %v233
  %555 = vmatprep.subr.bf16.mxu0 %v250
  %556 = vmatpush1.bf16.msra.mxu0 %v249
  %557 = vmatprep.subr.bf16.mxu0 0
  %558 = vmatpush1.bf16.msra.mxu0 0
  %559 = vmatprep.subr.bf16.mxu0 0
  %560 = vmatpush1.bf16.msra.mxu0 0
  %561 = vmatprep.subr.bf16.mxu0 0
  %562 = vmatpush1.bf16.msra.mxu0 0
  %563 = vmatprep.subr.bf16.mxu0 0
  %564 = vmatpush1.bf16.msra.mxu0 0
  %565 = vmatprep.subr.bf16.mxu0 0
  %566 = vmatpush1.bf16.msra.mxu0 0
  %567 = vmatprep.subr.bf16.mxu0 0
  %568 = vmatpush1.bf16.msra.mxu0 0
  %569 = vmatprep.subr.bf16.mxu0 0
  %570 = vmatpush1.bf16.msra.mxu0 0
  %571 = vmatprep.subr.bf16.mxu0 0
  %572 = vmatpush1.bf16.msra.mxu0 0
  %573 = vmatprep.subr.bf16.mxu0 0
  %574 = vmatpush1.bf16.msra.mxu0 0
  %575 = vmatprep.subr.bf16.mxu0 0
  %576 = vmatpush1.bf16.msra.mxu0 0
  %577 = vmatprep.subr.bf16.mxu0 0
  %578 = vmatpush1.bf16.msra.mxu0 0
  %579 = vmatprep.subr.bf16.mxu0 0
  %580 = vmatpush1.bf16.msra.mxu0 0
  %581 = vmatprep.subr.bf16.mxu0 0
  %582 = vmatpush1.bf16.msra.mxu0 0
  %583 = vmatprep.mubr.bf16.mxu0 0
  %584 = vmatmul.mubr.bf16.gmra.mrb[0].mxu0 %v303
  %v585 = vpop.f32.mrb[0].mxu0
  %v586 = vadd.f32 0.0, %v585
  %v587 = vpop.f32.mrb[0].mxu0
  %v588 = vadd.f32 0.0, %v587
  %v589 = vpop.f32.mrb[0].mxu0
  %v590 = vpop.f32.mrb[0].mxu0
  %591 = vdwg.mxu0
  %592 = vmatprep.subr.bf16.mxu0 %v220
  %593 = vmatpush1.bf16.msra.mxu0 %v219
  %594 = vmatprep.subr.bf16.mxu0 %v236
  %595 = vmatpush1.bf16.msra.mxu0 %v235
  %596 = vmatprep.subr.bf16.mxu0 %v252
  %597 = vmatpush1.bf16.msra.mxu0 %v251
  %598 = vmatprep.subr.bf16.mxu0 0
  %599 = vmatpush1.bf16.msra.mxu0 0
  %600 = vmatprep.subr.bf16.mxu0 0
  %601 = vmatpush1.bf16.msra.mxu0 0
  %602 = vmatprep.subr.bf16.mxu0 0
  %603 = vmatpush1.bf16.msra.mxu0 0
  %604 = vmatprep.subr.bf16.mxu0 0
  %605 = vmatpush1.bf16.msra.mxu0 0
  %606 = vmatprep.subr.bf16.mxu0 0
  %607 = vmatpush1.bf16.msra.mxu0 0
  %608 = vmatprep.subr.bf16.mxu0 0
  %609 = vmatpush1.bf16.msra.mxu0 0
  %610 = vmatprep.subr.bf16.mxu0 0
  %611 = vmatpush1.bf16.msra.mxu0 0
  %612 = vmatprep.subr.bf16.mxu0 0
  %613 = vmatpush1.bf16.msra.mxu0 0
  %614 = vmatprep.subr.bf16.mxu0 0
  %615 = vmatpush1.bf16.msra.mxu0 0
  %616 = vmatprep.subr.bf16.mxu0 0
  %617 = vmatpush1.bf16.msra.mxu0 0
  %618 = vmatprep.subr.bf16.mxu0 0
  %619 = vmatpush1.bf16.msra.mxu0 0
  %620 = vmatprep.subr.bf16.mxu0 0
  %621 = vmatpush1.bf16.msra.mxu0 0
  %622 = vmatprep.subr.bf16.mxu0 0
  %623 = vmatpush1.bf16.msra.mxu0 0
  %624 = vmatprep.mubr.bf16.mxu0 0
  %625 = vmatmul.mubr.bf16.gmra.mrb[0].mxu0 %v303
  %v626 = vpop.f32.mrb[0].mxu0
  %v627 = vadd.f32 0.0, %v626
  %v628 = vpop.f32.mrb[0].mxu0
  %v629 = vadd.f32 0.0, %v628
  %v630 = vpop.f32.mrb[0].mxu0
  %v631 = vpop.f32.mrb[0].mxu0
  %632 = vdwg.mxu0
  %vm633 = vcmp.gt.f32.partialorder %v340, 0.0
  %vm634 = vcmp.gt.f32.partialorder %v342, 0.0
  %vm635 = vcmp.gt.f32.partialorder %v381, 0.0
  %vm636 = vcmp.gt.f32.partialorder %v383, 0.0
  %vm637 = vcmp.gt.f32.partialorder %v422, 0.0
  %vm638 = vcmp.gt.f32.partialorder %v424, 0.0
  %vm639 = vcmp.gt.f32.partialorder %v463, 0.0
  %vm640 = vcmp.gt.f32.partialorder %v465, 0.0
  %vm641 = vcmp.gt.f32.partialorder %v504, 0.0
  %vm642 = vcmp.gt.f32.partialorder %v506, 0.0
  %vm643 = vcmp.gt.f32.partialorder %v545, 0.0
  %vm644 = vcmp.gt.f32.partialorder %v547, 0.0
  %vm645 = vcmp.gt.f32.partialorder %v586, 0.0
  %vm646 = vcmp.gt.f32.partialorder %v588, 0.0
  %vm647 = vcmp.gt.f32.partialorder %v627, 0.0
  %vm648 = vcmp.gt.f32.partialorder %v629, 0.0
  %v649 = vmul.f32 %v340, 0.2
  %v650 = vmul.f32 %v342, 0.2
  %v651 = vmul.f32 %v381, 0.2
  %v652 = vmul.f32 %v383, 0.2
  %v653 = vmul.f32 %v422, 0.2
  %v654 = vmul.f32 %v424, 0.2
  %v655 = vmul.f32 %v463, 0.2
  %v656 = vmul.f32 %v465, 0.2
  %v657 = vmul.f32 %v504, 0.2
  %v658 = vmul.f32 %v506, 0.2
  %v659 = vmul.f32 %v545, 0.2
  %v660 = vmul.f32 %v547, 0.2
  %v661 = vmul.f32 %v586, 0.2
  %v662 = vmul.f32 %v588, 0.2
  %v663 = vmul.f32 %v627, 0.2
  %v664 = vmul.f32 %v629, 0.2
  %v665 = vsel %vm633, %v340, %v649
  %v666 = vsel %vm634, %v342, %v650
  %v667 = vsel %vm635, %v381, %v651
  %v668 = vsel %vm636, %v383, %v652
  %v669 = vsel %vm637, %v422, %v653
  %v670 = vsel %vm638, %v424, %v654
  %v671 = vsel %vm639, %v463, %v655
  %v672 = vsel %vm640, %v465, %v656
  %v673 = vsel %vm641, %v504, %v657
  %v674 = vsel %vm642, %v506, %v658
  %v675 = vsel %vm643, %v545, %v659
  %v676 = vsel %vm644, %v547, %v660
  %v677 = vsel %vm645, %v586, %v661
  %v678 = vsel %vm646, %v588, %v662
  %v679 = vsel %vm647, %v627, %v663
  %v680 = vsel %vm648, %v629, %v664
  %v681 = vpack.c.bf16 %v665, %v665
  %v682 = vpack.c.bf16 %v666, %v666
  %v683 = vpack.c.bf16 %v667, %v667
  %v684 = vpack.c.bf16 %v668, %v668
  %v685 = vpack.c.bf16 %v669, %v669
  %v686 = vpack.c.bf16 %v670, %v670
  %v687 = vpack.c.bf16 %v671, %v671
  %v688 = vpack.c.bf16 %v672, %v672
  %v689 = vpack.c.bf16 %v673, %v673
  %v690 = vpack.c.bf16 %v674, %v674
  %v691 = vpack.c.bf16 %v675, %v675
  %v692 = vpack.c.bf16 %v676, %v676
  %v693 = vpack.c.bf16 %v677, %v677
  %v694 = vpack.c.bf16 %v678, %v678
  %v695 = vpack.c.bf16 %v679, %v679
  %v696 = vpack.c.bf16 %v680, %v680
  %v713 = vunpack.c.l.b16 %v681
  %v714 = vunpack.c.l.b16 %v682
  %v715 = vunpack.c.l.b16 %v683
  %v716 = vunpack.c.l.b16 %v684
  %v717 = vunpack.c.l.b16 %v685
  %v718 = vunpack.c.l.b16 %v686
  %v719 = vunpack.c.l.b16 %v687
  %v720 = vunpack.c.l.b16 %v688
  %v721 = vunpack.c.l.b16 %v689
  %v722 = vunpack.c.l.b16 %v690
  %v723 = vunpack.c.l.b16 %v691
  %v724 = vunpack.c.l.b16 %v692
  %v725 = vunpack.c.l.b16 %v693
  %v726 = vunpack.c.l.b16 %v694
  %v727 = vunpack.c.l.b16 %v695
  %v728 = vunpack.c.l.b16 %v696
  %v729 = vpack.c.b16 %v714, %v713
  %v730 = vpack.c.b16 %v716, %v715
  %v731 = vpack.c.b16 %v718, %v717
  %v732 = vpack.c.b16 %v720, %v719
  %v733 = vpack.c.b16 %v722, %v721
  %v734 = vpack.c.b16 %v724, %v723
  %v735 = vpack.c.b16 %v726, %v725
  %v736 = vpack.c.b16 %v728, %v727
  %745 = vst [vmem:[%s2] sm:$0xff] %v729
  %746 = vst [vmem:[%s2 + $0x8] sm:$0xff] %v730
  %747 = vst [vmem:[%s2 + $0x10] sm:$0xff] %v731
  %748 = vst [vmem:[%s2 + $0x18] sm:$0xff] %v732
  %749 = vst [vmem:[%s2 + $0x20] sm:$0xff] %v733
  %750 = vst [vmem:[%s2 + $0x28] sm:$0xff] %v734
  %751 = vst [vmem:[%s2 + $0x30] sm:$0xff] %v735
  %752 = vst [vmem:[%s2 + $0x38] sm:$0xff] %v736
  // Predicated region
  $region10: #{official_discriminator_forward.5} parent=0 // pred_check
    _
  $region11: #{official_discriminator_forward.5} parent=0 // pred_check_branch
    %754 = sbr.rel (0) target = $region13
  $region12: #{official_discriminator_forward.5} parent=0 // pred_region
    _
  $region13: #{official_discriminator_forward.5} parent=0 // pred_fallthru
    _
  // Predicated region
  $region14: #{official_discriminator_forward.5} parent=0 // pred_check
    _
  $region15: #{official_discriminator_forward.5} parent=0 // pred_check_branch
    %756 = sbr.rel (0) target = $region17
  $region16: #{official_discriminator_forward.5} parent=0 // pred_region
    _
  $region17: #{official_discriminator_forward.5} parent=0 // pred_fallthru
    _

// kernel: official_discriminator_forward.6
$region0: #{official_discriminator_forward.6}
  #allocation0 [shape = 'u32[]', space=smem, size = 0x4, offset = 0x4, fixed_abs, tag = 'smem constant byte address 0x4 - core index']
  #allocation1 [shape = 'u32[144,128]{1,0:T(1,128)}', space=vmem, size = 0x12000, scoped, tag = 'internal scratch']
  #allocation2 [shape = 'f32[16,1]{1,0:T(8,128)}', space=vmem, size = 0x2000, scoped, tag = 'scratch operand']
  #allocation3 [shape = 'f32[16,1]{1,0:T(8,128)}', space=vmem, size = 0x2000, scoped, tag = 'scratch operand']
  #allocation4 [shape = 'f32[16,1]{1,0:T(8,128)}', space=vmem, size = 0x2000, scoped, tag = 'scratch operand']
  #allocation5 [shape = 'f32[16,1]{1,0:T(8,128)}', space=vmem, size = 0x2000, scoped, tag = 'scratch operand']
  %s0 = inlined_call_operand.vmem [shape: bf16[16,128], index: 0, kind: input, shape index: {}]
  %s1 = inlined_call_operand.vmem [shape: bf16[128,512], index: 1, kind: input, shape index: {}]
  %s2 = inlined_call_operand.vmem [shape: f32[16,1], index: 2, kind: input, shape index: {}]
  %s3 = inlined_call_operand.vmem [shape: f32[16,1], index: 3, kind: input, shape index: {}]
  %s4 = inlined_call_operand.vmem [shape: bf16[16,512], index: 4, kind: output, shape index: {}]
  %s5 = sld [smem:[#allocation0]]
  $region65: #{official_discriminator_forward.6} parent=0
    _
  %s7 = ssub.s32 1, %s5
  %s8 = scalar_select 0, %s7, %s5
  loop: start=0, step=1, limit=4
  $region2: #{official_discriminator_forward.6} parent=0 // loop_pre_header
    _
  $region3: #{official_discriminator_forward.6} parent=0 // loop_header
    %s10 = sphi 0, %s14
    %p11 = scmp.ge.s32.totalorder %s10, 4
    %s17 = sphi 0, %s29
    %s18 = sphi 0, %s25
    %s19 = sphi 0, %s17
    %s20 = sphi 0, %s18
    %s21 = sphi 0, %s19
    %s22 = sphi 0, %s20
    %s30 = sphi 0, %s30
    %s32 = sphi 0, %s30
    %s33 = sphi 0, %s32
    %s47 = sphi 0, %s33
    %s53 = sphi 0, %s55
    %s56 = sphi 0, %s53
    %s57 = sphi 0, %s56
    %s73 = sphi 0, %s57
    %s77 = sphi 0, %s77
    %s79 = sphi 0, %s77
    %s80 = sphi 0, %s79
    %s94 = sphi 0, %s80
    %s98 = sphi 0, %s98
    %s100 = sphi 0, %s98
    %s101 = sphi 0, %s100
    %s115 = sphi 0, %s101
    %s123 = sphi 0, %s125
    %s126 = sphi 0, %s123
    %s127 = sphi 0, %s126
    %s143 = sphi 0, %s127
  $region4: #{official_discriminator_forward.6} parent=0 // loop_header_branch
    %13 = sbr.rel (%p11) target = $region8
  $region5: #{official_discriminator_forward.6} parent=0 // loop_body
    %s15 = ssub.s32 %s10, 1
    %s16 = ssub.s32 %s10, 2
    %s23 = sadd.s32 1, %s18
    %p24 = scmp.ge.s32.totalorder %s23, 1
    %s25 = scalar_select %p24, 0, %s23
    %s26 = sadd.s32 1, %s17
    %s27 = scalar_select %p24, %s26, %s17
    %p28 = scmp.ge.s32.totalorder %s27, 2
    %s29 = scalar_select %p28, 0, %s27
    %s31 = sadd.s32 %s30, 1
    %p34 = scmp.eq.s32.totalorder %s10, 1
    %p35 = scmp.ne.s32.totalorder %s30, %s32
    %p36 = scmp.eq.s32.totalorder %s10, 0
    %p37 = por %p35, %p36
    %p38 = scmp.ne.s32.totalorder %s30, %s32
    %p39 = scmp.eq.s32.totalorder %s15, 1
    %p40 = por %p38, %p39
    %p41 = scmp.ne.s32.totalorder %s32, %s33
    %p42 = scmp.eq.s32.totalorder %s15, 0
    %p43 = por %p41, %p42
    %p44 = scmp.ne.s32.totalorder %s32, %s33
    %p45 = scmp.eq.s32.totalorder %s16, 1
    %p46 = por %p44, %p45
    %p48 = scmp.ne.s32.totalorder %s33, %s47
    %p49 = scmp.eq.s32.totalorder %s16, 0
    %p50 = por %p48, %p49
    %s51 = ssub.s32 %s18, %s25
    %p52 = scmp.eq.s32.totalorder %s51, 0
    %s54 = sadd.s32 %s53, 1
    %s55 = scalar_select %p52, %s53, %s54
    %p58 = pneg %p52
    %p59 = scmp.eq.s32.totalorder %s10, 1
    %p60 = por %p58, %p59
    %p61 = scmp.ne.s32.totalorder %s53, %s56
    %p62 = scmp.eq.s32.totalorder %s10, 0
    %p63 = por %p61, %p62
    %p64 = scmp.ne.s32.totalorder %s53, %s56
    %p65 = scmp.eq.s32.totalorder %s15, 1
    %p66 = por %p64, %p65
    %p67 = scmp.ne.s32.totalorder %s56, %s57
    %p68 = scmp.eq.s32.totalorder %s15, 0
    %p69 = por %p67, %p68
    %p70 = scmp.ne.s32.totalorder %s56, %s57
    %p71 = scmp.eq.s32.totalorder %s16, 1
    %p72 = por %p70, %p71
    %p74 = scmp.ne.s32.totalorder %s57, %s73
    %p75 = scmp.eq.s32.totalorder %s16, 0
    %p76 = por %p74, %p75
    %s78 = sadd.s32 %s77, 1
    %p81 = scmp.eq.s32.totalorder %s10, 1
    %p82 = scmp.ne.s32.totalorder %s77, %s79
    %p83 = scmp.eq.s32.totalorder %s10, 0
    %p84 = por %p82, %p83
    %p85 = scmp.ne.s32.totalorder %s77, %s79
    %p86 = scmp.eq.s32.totalorder %s15, 1
    %p87 = por %p85, %p86
    %p88 = scmp.ne.s32.totalorder %s79, %s80
    %p89 = scmp.eq.s32.totalorder %s15, 0
    %p90 = por %p88, %p89
    %p91 = scmp.ne.s32.totalorder %s79, %s80
    %p92 = scmp.eq.s32.totalorder %s16, 1
    %p93 = por %p91, %p92
    %p95 = scmp.ne.s32.totalorder %s80, %s94
    %p96 = scmp.eq.s32.totalorder %s16, 0
    %p97 = por %p95, %p96
    %s99 = sadd.s32 %s98, 1
    %p102 = scmp.eq.s32.totalorder %s10, 1
    %p103 = scmp.ne.s32.totalorder %s98, %s100
    %p104 = scmp.eq.s32.totalorder %s10, 0
    %p105 = por %p103, %p104
    %p106 = scmp.ne.s32.totalorder %s98, %s100
    %p107 = scmp.eq.s32.totalorder %s15, 1
    %p108 = por %p106, %p107
    %p109 = scmp.ne.s32.totalorder %s100, %s101
    %p110 = scmp.eq.s32.totalorder %s15, 0
    %p111 = por %p109, %p110
    %p112 = scmp.ne.s32.totalorder %s100, %s101
    %p113 = scmp.eq.s32.totalorder %s16, 1
    %p114 = por %p112, %p113
    %p116 = scmp.ne.s32.totalorder %s101, %s115
    %p117 = scmp.eq.s32.totalorder %s16, 0
    %p118 = por %p116, %p117
    %s119 = smul.u32 %s18, %s17
    %s120 = smul.u32 %s25, %s29
    %s121 = ssub.s32 %s119, %s120
    %p122 = scmp.eq.s32.totalorder %s121, 0
    %s124 = sadd.s32 %s123, 1
    %s125 = scalar_select %p122, %s123, %s124
    %p128 = pneg %p122
    %p129 = scmp.eq.s32.totalorder %s10, 1
    %p130 = por %p128, %p129
    %p131 = scmp.ne.s32.totalorder %s123, %s126
    %p132 = scmp.eq.s32.totalorder %s10, 0
    %p133 = por %p131, %p132
    %p134 = scmp.ne.s32.totalorder %s123, %s126
    %p135 = scmp.eq.s32.totalorder %s15, 1
    %p136 = por %p134, %p135
    %p137 = scmp.ne.s32.totalorder %s126, %s127
    %p138 = scmp.eq.s32.totalorder %s15, 0
    %p139 = por %p137, %p138
    %p140 = scmp.ne.s32.totalorder %s126, %s127
    %p141 = scmp.eq.s32.totalorder %s16, 1
    %p142 = por %p140, %p141
    %p144 = scmp.ne.s32.totalorder %s127, %s143
    %p145 = scmp.eq.s32.totalorder %s16, 0
    %p146 = por %p144, %p145
    %p147 = scmp.le.s32.totalorder 1, %s10
    %p148 = scmp.lt.s32.totalorder %s10, 3
    %p149 = pnand %p147, %p148
    %p150 = pneg %p149
    // Predicated region
    $region9: #{official_discriminator_forward.6} parent=5 // pred_check
      _
    $region10: #{official_discriminator_forward.6} parent=5 // pred_check_branch
      %152 = sbr.rel (%p149) target = $region12
    $region11: #{official_discriminator_forward.6} parent=5 // pred_region
      %s153 = ssub.s32 %s10, 1
      // Predicated region
      $region13: #{official_discriminator_forward.6} parent=11 // pred_check
        %p154 = pneg %p43
      $region14: #{official_discriminator_forward.6} parent=11 // pred_check_branch
        %156 = sbr.rel (%p154) target = $region16
      $region15: #{official_discriminator_forward.6} parent=11 // pred_region
        _
      $region16: #{official_discriminator_forward.6} parent=11 // pred_fallthru
        _
      // Predicated region
      $region17: #{official_discriminator_forward.6} parent=11 // pred_check
        %p157 = pneg %p69
      $region18: #{official_discriminator_forward.6} parent=11 // pred_check_branch
        %159 = sbr.rel (%p157) target = $region20
      $region19: #{official_discriminator_forward.6} parent=11 // pred_region
        %s160 = smul.u32 4, %s20
        %p161 = scmp.lt.s32.totalorder %s160, 3
        %s162 = scalar_select %p161, %s160, 3
        %s163 = smul.addr %s162, 4
        %s164 = scalar_lea.vmem %s1, %s163
        %s165 = smul.u32 4, %s20
      $region20: #{official_discriminator_forward.6} parent=11 // pred_fallthru
        _
      // Predicated region
      $region21: #{official_discriminator_forward.6} parent=11 // pred_check
        %p166 = pneg %p90
      $region22: #{official_discriminator_forward.6} parent=11 // pred_check_branch
        %168 = sbr.rel (%p166) target = $region24
      $region23: #{official_discriminator_forward.6} parent=11 // pred_region
        _
      $region24: #{official_discriminator_forward.6} parent=11 // pred_fallthru
        _
      // Predicated region
      $region25: #{official_discriminator_forward.6} parent=11 // pred_check
        %p169 = pneg %p111
      $region26: #{official_discriminator_forward.6} parent=11 // pred_check_branch
        %171 = sbr.rel (%p169) target = $region28
      $region27: #{official_discriminator_forward.6} parent=11 // pred_region
        _
      $region28: #{official_discriminator_forward.6} parent=11 // pred_fallthru
        _
    $region12: #{official_discriminator_forward.6} parent=5 // pred_fallthru
      _
    %p172 = scmp.lt.s32.totalorder %s10, 2
    // Predicated region
    $region29: #{official_discriminator_forward.6} parent=5 // pred_check
      %p173 = pneg %p172
    $region30: #{official_discriminator_forward.6} parent=5 // pred_check_branch
      %175 = sbr.rel (%p173) target = $region32
    $region31: #{official_discriminator_forward.6} parent=5 // pred_region
      _
    $region32: #{official_discriminator_forward.6} parent=5 // pred_fallthru
      _
    %p176 = scmp.le.s32.totalorder 1, %s10
    %p177 = scmp.lt.s32.totalorder %s10, 3
    %p178 = pnand %p176, %p177
    %p179 = pneg %p178
    // Predicated region
    $region33: #{official_discriminator_forward.6} parent=5 // pred_check
      _
    $region34: #{official_discriminator_forward.6} parent=5 // pred_check_branch
      %181 = sbr.rel (%p178) target = $region36
    $region35: #{official_discriminator_forward.6} parent=5 // pred_region
      %s182 = ssub.s32 %s10, 1
      %p183 = pneg %p43
      %p184 = pneg %p40
      %s185 = smul.u32 4, %s20
      %p186 = scmp.lt.s32.totalorder %s185, 3
      %s187 = scalar_select %p186, %s185, 3
      %s188 = smul.addr %s187, 4
      %s189 = scalar_lea.vmem %s1, %s188
      %p190 = pneg %p69
      %p191 = pneg %p66
      %p192 = pneg %p90
      %p193 = pneg %p87
      %p194 = pneg %p111
      %p195 = pneg %p108
      %p196 = pneg %p139
      %p197 = pneg %p136
      %s198 = smul.u32 %s20, %s19
      %s199 = smul.u32 4, %s198
      %p200 = scmp.lt.s32.totalorder %s199, 3
      %s201 = scalar_select %p200, %s199, 3
      %s202 = smul.addr %s201, 4
      %s203 = scalar_lea.vmem %s4, %s202
      %s204 = smul.u32 4, %s20
      %p205 = scmp.lt.s32.totalorder %s204, 3
      %s206 = scalar_select %p205, %s204, 3
      %s207 = smul.addr %s206, 4
      %s208 = scalar_lea.vmem %s1, %s207
      %s209 = smul.u32 4, %s20
      %s210 = smul.u32 %s20, %s19
      %s211 = smul.u32 4, %s210
      %p212 = scmp.lt.s32.totalorder %s211, 3
      %s213 = scalar_select %p212, %s211, 3
      %s214 = smul.addr %s213, 4
      %s215 = scalar_lea.vmem %s4, %s214
      %s216 = smul.u32 %s20, %s19
      %s217 = smul.u32 4, %s216
      %v219 = vld [vmem:[%s0] sm:$0xf]
      %v220 = vld [vmem:[%s0 + $0x4] sm:$0xf]
      %v221 = vld [vmem:[%s208] sm:$0xff]
      %v222 = vld [vmem:[%s208 + $0x8] sm:$0xff]
      %v223 = vld [vmem:[%s208 + $0x10] sm:$0xff]
      %v224 = vld [vmem:[%s208 + $0x18] sm:$0xff]
      %v225 = vld [vmem:[%s208 + $0x20] sm:$0xff]
      %v226 = vld [vmem:[%s208 + $0x28] sm:$0xff]
      %v227 = vld [vmem:[%s208 + $0x30] sm:$0xff]
      %v228 = vld [vmem:[%s208 + $0x38] sm:$0xff]
      %v229 = vld [vmem:[%s208 + $0x40] sm:$0xff]
      %v230 = vld [vmem:[%s208 + $0x48] sm:$0xff]
      %v231 = vld [vmem:[%s208 + $0x50] sm:$0xff]
      %v232 = vld [vmem:[%s208 + $0x58] sm:$0xff]
      %v233 = vld [vmem:[%s208 + $0x60] sm:$0xff]
      %v234 = vld [vmem:[%s208 + $0x68] sm:$0xff]
      %v235 = vld [vmem:[%s208 + $0x70] sm:$0xff]
      %v236 = vld [vmem:[%s208 + $0x78] sm:$0xff]
      %v237 = vld [vmem:[%s208 + $0x80] sm:$0xff]
      %v238 = vld [vmem:[%s208 + $0x88] sm:$0xff]
      %v239 = vld [vmem:[%s208 + $0x90] sm:$0xff]
      %v240 = vld [vmem:[%s208 + $0x98] sm:$0xff]
      %v241 = vld [vmem:[%s208 + $0xa0] sm:$0xff]
      %v242 = vld [vmem:[%s208 + $0xa8] sm:$0xff]
      %v243 = vld [vmem:[%s208 + $0xb0] sm:$0xff]
      %v244 = vld [vmem:[%s208 + $0xb8] sm:$0xff]
      %v245 = vld [vmem:[%s208 + $0xc0] sm:$0xff]
      %v246 = vld [vmem:[%s208 + $0xc8] sm:$0xff]
      %v247 = vld [vmem:[%s208 + $0xd0] sm:$0xff]
      %v248 = vld [vmem:[%s208 + $0xd8] sm:$0xff]
      %v249 = vld [vmem:[%s208 + $0xe0] sm:$0xff]
      %v250 = vld [vmem:[%s208 + $0xe8] sm:$0xff]
      %v251 = vld [vmem:[%s208 + $0xf0] sm:$0xff]
      %v252 = vld [vmem:[%s208 + $0xf8] sm:$0xff]
      %v255 = vunpack.c.l.b16 %v219
      %v256 = vunpack.c.l.b16 %v220
      %v257 = vpack.c.b16 %v256, %v255
      %v291 = vunpack.c.l.b16 %v221
      %v292 = vunpack.c.h.b16 %v221
      %v293 = vunpack.c.l.b16 %v222
      %v294 = vunpack.c.h.b16 %v222
      %v295 = vunpack.c.l.b16 %v223
      %v296 = vunpack.c.h.b16 %v223
      %v297 = vunpack.c.l.b16 %v224
      %v298 = vunpack.c.h.b16 %v224
      %v299 = vunpack.c.l.b16 %v225
      %v300 = vunpack.c.h.b16 %v225
      %v301 = vunpack.c.l.b16 %v226
      %v302 = vunpack.c.h.b16 %v226
      %v303 = vunpack.c.l.b16 %v227
      %v304 = vunpack.c.h.b16 %v227
      %v305 = vunpack.c.l.b16 %v228
      %v306 = vunpack.c.h.b16 %v228
      %v307 = vunpack.c.l.b16 %v229
      %v308 = vunpack.c.h.b16 %v229
      %v309 = vunpack.c.l.b16 %v230
      %v310 = vunpack.c.h.b16 %v230
      %v311 = vunpack.c.l.b16 %v231
      %v312 = vunpack.c.h.b16 %v231
      %v313 = vunpack.c.l.b16 %v232
      %v314 = vunpack.c.h.b16 %v232
      %v315 = vunpack.c.l.b16 %v233
      %v316 = vunpack.c.h.b16 %v233
      %v317 = vunpack.c.l.b16 %v234
      %v318 = vunpack.c.h.b16 %v234
      %v319 = vunpack.c.l.b16 %v235
      %v320 = vunpack.c.h.b16 %v235
      %v321 = vunpack.c.l.b16 %v236
      %v322 = vunpack.c.h.b16 %v236
      %v323 = vunpack.c.l.b16 %v237
      %v324 = vunpack.c.h.b16 %v237
      %v325 = vunpack.c.l.b16 %v238
      %v326 = vunpack.c.h.b16 %v238
      %v327 = vunpack.c.l.b16 %v239
      %v328 = vunpack.c.h.b16 %v239
      %v329 = vunpack.c.l.b16 %v240
      %v330 = vunpack.c.h.b16 %v240
      %v331 = vunpack.c.l.b16 %v241
      %v332 = vunpack.c.h.b16 %v241
      %v333 = vunpack.c.l.b16 %v242
      %v334 = vunpack.c.h.b16 %v242
      %v335 = vunpack.c.l.b16 %v243
      %v336 = vunpack.c.h.b16 %v243
      %v337 = vunpack.c.l.b16 %v244
      %v338 = vunpack.c.h.b16 %v244
      %v339 = vunpack.c.l.b16 %v245
      %v340 = vunpack.c.h.b16 %v245
      %v341 = vunpack.c.l.b16 %v246
      %v342 = vunpack.c.h.b16 %v246
      %v343 = vunpack.c.l.b16 %v247
      %v344 = vunpack.c.h.b16 %v247
      %v345 = vunpack.c.l.b16 %v248
      %v346 = vunpack.c.h.b16 %v248
      %v347 = vunpack.c.l.b16 %v249
      %v348 = vunpack.c.h.b16 %v249
      %v349 = vunpack.c.l.b16 %v250
      %v350 = vunpack.c.h.b16 %v250
      %v351 = vunpack.c.l.b16 %v251
      %v352 = vunpack.c.h.b16 %v251
      %v353 = vunpack.c.l.b16 %v252
      %v354 = vunpack.c.h.b16 %v252
      %v355 = vpack.c.b16 %v295, %v291
      %v356 = vpack.c.b16 %v296, %v292
      %v357 = vpack.c.b16 %v297, %v293
      %v358 = vpack.c.b16 %v298, %v294
      %v359 = vpack.c.b16 %v303, %v299
      %v360 = vpack.c.b16 %v304, %v300
      %v361 = vpack.c.b16 %v305, %v301
      %v362 = vpack.c.b16 %v306, %v302
      %v363 = vpack.c.b16 %v311, %v307
      %v364 = vpack.c.b16 %v312, %v308
      %v365 = vpack.c.b16 %v313, %v309
      %v366 = vpack.c.b16 %v314, %v310
      %v367 = vpack.c.b16 %v319, %v315
      %v368 = vpack.c.b16 %v320, %v316
      %v369 = vpack.c.b16 %v321, %v317
      %v370 = vpack.c.b16 %v322, %v318
      %v371 = vpack.c.b16 %v327, %v323
      %v372 = vpack.c.b16 %v328, %v324
      %v373 = vpack.c.b16 %v329, %v325
      %v374 = vpack.c.b16 %v330, %v326
      %v375 = vpack.c.b16 %v335, %v331
      %v376 = vpack.c.b16 %v336, %v332
      %v377 = vpack.c.b16 %v337, %v333
      %v378 = vpack.c.b16 %v338, %v334
      %v379 = vpack.c.b16 %v343, %v339
      %v380 = vpack.c.b16 %v344, %v340
      %v381 = vpack.c.b16 %v345, %v341
      %v382 = vpack.c.b16 %v346, %v342
      %v383 = vpack.c.b16 %v351, %v347
      %v384 = vpack.c.b16 %v352, %v348
      %v385 = vpack.c.b16 %v353, %v349
      %v386 = vpack.c.b16 %v354, %v350
      %419 = vmatprep.subr.bf16.mxu0 %v356
      %420 = vmatpush1.bf16.msra.mxu0 %v355
      %421 = vmatprep.subr.bf16.mxu0 %v360
      %422 = vmatpush1.bf16.msra.mxu0 %v359
      %423 = vmatprep.subr.bf16.mxu0 %v364
      %424 = vmatpush1.bf16.msra.mxu0 %v363
      %425 = vmatprep.subr.bf16.mxu0 %v368
      %426 = vmatpush1.bf16.msra.mxu0 %v367
      %427 = vmatprep.subr.bf16.mxu0 %v372
      %428 = vmatpush1.bf16.msra.mxu0 %v371
      %429 = vmatprep.subr.bf16.mxu0 %v376
      %430 = vmatpush1.bf16.msra.mxu0 %v375
      %431 = vmatprep.subr.bf16.mxu0 %v380
      %432 = vmatpush1.bf16.msra.mxu0 %v379
      %433 = vmatprep.subr.bf16.mxu0 %v384
      %434 = vmatpush1.bf16.msra.mxu0 %v383
      %435 = vmatprep.subr.bf16.mxu0 0
      %436 = vmatpush1.bf16.msra.mxu0 0
      %437 = vmatprep.subr.bf16.mxu0 0
      %438 = vmatpush1.bf16.msra.mxu0 0
      %439 = vmatprep.subr.bf16.mxu0 0
      %440 = vmatpush1.bf16.msra.mxu0 0
      %441 = vmatprep.subr.bf16.mxu0 0
      %442 = vmatpush1.bf16.msra.mxu0 0
      %443 = vmatprep.subr.bf16.mxu0 0
      %444 = vmatpush1.bf16.msra.mxu0 0
      %445 = vmatprep.subr.bf16.mxu0 0
      %446 = vmatpush1.bf16.msra.mxu0 0
      %447 = vmatprep.subr.bf16.mxu0 0
      %448 = vmatpush1.bf16.msra.mxu0 0
      %449 = vmatprep.subr.bf16.mxu0 0
      %450 = vmatpush1.bf16.msra.mxu0 0
      %451 = vmatprep.mubr.bf16.mxu0 0
      %452 = vmatmul.mubr.bf16.gmra.mrb[0].mxu0 %v257
      %v453 = vpop.f32.mrb[0].mxu0
      %v454 = vadd.f32 0.0, %v453
      %v455 = vpop.f32.mrb[0].mxu0
      %v456 = vadd.f32 0.0, %v455
      %v457 = vpop.f32.mrb[0].mxu0
      %v458 = vadd.f32 0.0, %v457
      %v459 = vpop.f32.mrb[0].mxu0
      %v460 = vadd.f32 0.0, %v459
      %461 = vdwg.mxu0
      %462 = vmatprep.subr.bf16.mxu0 %v358
      %463 = vmatpush1.bf16.msra.mxu0 %v357
      %464 = vmatprep.subr.bf16.mxu0 %v362
      %465 = vmatpush1.bf16.msra.mxu0 %v361
      %466 = vmatprep.subr.bf16.mxu0 %v366
      %467 = vmatpush1.bf16.msra.mxu0 %v365
      %468 = vmatprep.subr.bf16.mxu0 %v370
      %469 = vmatpush1.bf16.msra.mxu0 %v369
      %470 = vmatprep.subr.bf16.mxu0 %v374
      %471 = vmatpush1.bf16.msra.mxu0 %v373
      %472 = vmatprep.subr.bf16.mxu0 %v378
      %473 = vmatpush1.bf16.msra.mxu0 %v377
      %474 = vmatprep.subr.bf16.mxu0 %v382
      %475 = vmatpush1.bf16.msra.mxu0 %v381
      %476 = vmatprep.subr.bf16.mxu0 %v386
      %477 = vmatpush1.bf16.msra.mxu0 %v385
      %478 = vmatprep.subr.bf16.mxu0 0
      %479 = vmatpush1.bf16.msra.mxu0 0
      %480 = vmatprep.subr.bf16.mxu0 0
      %481 = vmatpush1.bf16.msra.mxu0 0
      %482 = vmatprep.subr.bf16.mxu0 0
      %483 = vmatpush1.bf16.msra.mxu0 0
      %484 = vmatprep.subr.bf16.mxu0 0
      %485 = vmatpush1.bf16.msra.mxu0 0
      %486 = vmatprep.subr.bf16.mxu0 0
      %487 = vmatpush1.bf16.msra.mxu0 0
      %488 = vmatprep.subr.bf16.mxu0 0
      %489 = vmatpush1.bf16.msra.mxu0 0
      %490 = vmatprep.subr.bf16.mxu0 0
      %491 = vmatpush1.bf16.msra.mxu0 0
      %492 = vmatprep.subr.bf16.mxu0 0
      %493 = vmatpush1.bf16.msra.mxu0 0
      %494 = vmatprep.mubr.bf16.mxu0 0
      %495 = vmatmul.mubr.bf16.gmra.mrb[0].mxu0 %v257
      %v496 = vpop.f32.mrb[0].mxu0
      %v497 = vadd.f32 0.0, %v496
      %v498 = vpop.f32.mrb[0].mxu0
      %v499 = vadd.f32 0.0, %v498
      %v500 = vpop.f32.mrb[0].mxu0
      %v501 = vadd.f32 0.0, %v500
      %v502 = vpop.f32.mrb[0].mxu0
      %v503 = vadd.f32 0.0, %v502
      %504 = vdwg.mxu0
      %p505 = scmp.eq.s32.totalorder %s19, 0
      // Predicated region
      $region37: #{official_discriminator_forward.6} parent=35 // pred_check
        %p506 = pneg %p505
      $region38: #{official_discriminator_forward.6} parent=35 // pred_check_branch
        %508 = sbr.rel (%p506) target = $region40
      $region39: #{official_discriminator_forward.6} parent=35 // pred_region
        %p509 = scmp.eq.s32.totalorder %s20, 0
        // Predicated region
        $region41: #{official_discriminator_forward.6} parent=39 // pred_check
          %p510 = pneg %p509
        $region42: #{official_discriminator_forward.6} parent=39 // pred_check_branch
          %512 = sbr.rel (%p510) target = $region44
        $region43: #{official_discriminator_forward.6} parent=39 // pred_region
          %vm513 = vcmask 7168
          %514 = vst.msk [vmem:[#allocation2] sm:$0xff] %vm513, 0.0
          %515 = vst.msk [vmem:[#allocation2 + $0x8] sm:$0xff] %vm513, 0.0
          %516 = vst.msk [vmem:[#allocation3] sm:$0xff] %vm513, 0.0
          %517 = vst.msk [vmem:[#allocation3 + $0x8] sm:$0xff] %vm513, 0.0
          %518 = vst [vmem:[%s215] sm:$0xff] 0
          %519 = vst [vmem:[%s215 + $0x8] sm:$0xff] 0
          %520 = vst [vmem:[%s215 + $0x10] sm:$0xff] 0
          %521 = vst [vmem:[%s215 + $0x18] sm:$0xff] 0
        $region44: #{official_discriminator_forward.6} parent=39 // pred_fallthru
          _
        %v522 = vld [vmem:[#allocation2] sm:$0xff]
        %v523 = vld [vmem:[#allocation2 + $0x8] sm:$0xff]
        %v524 = vadd.f32 %v454, %v456
        %v525 = vadd.f32 %v524, %v497
        %v526 = vadd.f32 %v525, %v499
        %527 = vadd.xlane.f32.xlu0 %v526
        %v528 = vpop.xlane.xlu0 %527
        %v529 = vadd.f32 %v458, %v460
        %v530 = vadd.f32 %v529, %v501
        %v531 = vadd.f32 %v530, %v503
        %532 = vadd.xlane.f32.xlu0 %v531
        %v533 = vpop.xlane.xlu0 %532
        %v534 = vadd.f32 %v522, %v528
        %v535 = vadd.f32 %v523, %v533
        %vm536 = vcmask 7168
        %537 = vst.msk [vmem:[#allocation2] sm:$0xff] %vm536, %v534
        %538 = vst.msk [vmem:[#allocation2 + $0x8] sm:$0xff] %vm536, %v535
        %v539 = vld [vmem:[#allocation3] sm:$0xff]
        %v540 = vld [vmem:[#allocation3 + $0x8] sm:$0xff]
        %v541 = vmul.f32 %v454, %v454
        %v542 = vmul.f32 %v456, %v456
        %v543 = vmul.f32 %v497, %v497
        %v544 = vmul.f32 %v499, %v499
        %v545 = vmul.f32 %v458, %v458
        %v546 = vmul.f32 %v460, %v460
        %v547 = vmul.f32 %v501, %v501
        %v548 = vmul.f32 %v503, %v503
        %v549 = vadd.f32 %v541, %v542
        %v550 = vadd.f32 %v549, %v543
        %v551 = vadd.f32 %v550, %v544
        %552 = vadd.xlane.f32.xlu0 %v551
        %v553 = vpop.xlane.xlu0 %552
        %v554 = vadd.f32 %v545, %v546
        %v555 = vadd.f32 %v554, %v547
        %v556 = vadd.f32 %v555, %v548
        %557 = vadd.xlane.f32.xlu0 %v556
        %v558 = vpop.xlane.xlu0 %557
        %v559 = vadd.f32 %v539, %v553
        %v560 = vadd.f32 %v540, %v558
        %561 = vst.msk [vmem:[#allocation3] sm:$0xff] %vm536, %v559
        %562 = vst.msk [vmem:[#allocation3 + $0x8] sm:$0xff] %vm536, %v560
      $region40: #{official_discriminator_forward.6} parent=35 // pred_fallthru
        _
      %p563 = scmp.eq.s32.totalorder %s19, 1
      // Predicated region
      $region45: #{official_discriminator_forward.6} parent=35 // pred_check
        %p564 = pneg %p563
      $region46: #{official_discriminator_forward.6} parent=35 // pred_check_branch
        %566 = sbr.rel (%p564) target = $region48
      $region47: #{official_discriminator_forward.6} parent=35 // pred_region
        %p567 = scmp.eq.s32.totalorder %s20, 0
        // Predicated region
        $region49: #{official_discriminator_forward.6} parent=47 // pred_check
          %p568 = pneg %p567
        $region50: #{official_discriminator_forward.6} parent=47 // pred_check_branch
          %570 = sbr.rel (%p568) target = $region52
        $region51: #{official_discriminator_forward.6} parent=47 // pred_region
          %v571 = vld [vmem:[#allocation2] sm:$0xff]
          %v572 = vld [vmem:[#allocation2 + $0x8] sm:$0xff]
          %v573 = vmul.f32 %v571, 0.001953125
          %v574 = vmul.f32 %v572, 0.001953125
          %v575 = vld [vmem:[#allocation3] sm:$0xff]
          %v576 = vld [vmem:[#allocation3 + $0x8] sm:$0xff]
          %v577 = vmul.f32 %v575, 0.001953125
          %v578 = vmul.f32 %v576, 0.001953125
          %v579 = vmul.f32 %v573, %v573
          %v580 = vmul.f32 %v574, %v574
          %v581 = vsub.f32 %v577, %v579
          %v582 = vsub.f32 %v578, %v580
          %v583 = vmax.f32 %v581, 0.0
          %v584 = vmax.f32 %v582, 0.0
          %v585 = vld [vmem:[%s2] sm:$0xff]
          %v586 = vld [vmem:[%s2 + $0x8] sm:$0xff]
          %v587 = vadd.f32 %v583, 1e-05
          %v588 = vadd.f32 %v584, 1e-05
          %v589 = vrsqrt.pop %v587
          %v590 = vrsqrt.pop %v588
          %v591 = vmul.f32 %v585, %v589
          %v592 = vmul.f32 %v586, %v590
          %vm593 = vcmask 7168
          %594 = vst.msk [vmem:[#allocation4] sm:$0xff] %vm593, %v591
          %595 = vst.msk [vmem:[#allocation4 + $0x8] sm:$0xff] %vm593, %v592
          %v596 = vld [vmem:[%s3] sm:$0xff]
          %v597 = vld [vmem:[%s3 + $0x8] sm:$0xff]
          %v598 = vmul.f32 %v573, %v591
          %v599 = vmul.f32 %v574, %v592
          %v600 = vsub.f32 %v596, %v598
          %v601 = vsub.f32 %v597, %v599
          %602 = vst.msk [vmem:[#allocation5] sm:$0xff] %vm593, %v600
          %603 = vst.msk [vmem:[#allocation5 + $0x8] sm:$0xff] %vm593, %v601
        $region52: #{official_discriminator_forward.6} parent=47 // pred_fallthru
          _
        %v604 = vld [vmem:[#allocation4] sm:$0xff]
        %v605 = vld [vmem:[#allocation4 + $0x8] sm:$0xff]
        %607 = vset.pattern.permute.xlu0 0
        %608 = vperm.xlu0 %607, %v604
        %v609 = vpop.permute.xlu0 %608
        %612 = vset.pattern.permute.xlu0 0
        %613 = vperm.xlu0 %612, %v605
        %v614 = vpop.permute.xlu0 %613
        %v616 = vmul.f32 %v454, %v609
        %v617 = vmul.f32 %v456, %v609
        %v618 = vmul.f32 %v497, %v609
        %v619 = vmul.f32 %v499, %v609
        %v620 = vmul.f32 %v458, %v614
        %v621 = vmul.f32 %v460, %v614
        %v622 = vmul.f32 %v501, %v614
        %v623 = vmul.f32 %v503, %v614
        %v624 = vld [vmem:[#allocation5] sm:$0xff]
        %v625 = vld [vmem:[#allocation5 + $0x8] sm:$0xff]
        %627 = vset.pattern.permute.xlu0 0
        %628 = vperm.xlu0 %627, %v624
        %v629 = vpop.permute.xlu0 %628
        %632 = vset.pattern.permute.xlu0 0
        %633 = vperm.xlu0 %632, %v625
        %v634 = vpop.permute.xlu0 %633
        %v636 = vadd.f32 %v616, %v629
        %v637 = vadd.f32 %v617, %v629
        %v638 = vadd.f32 %v618, %v629
        %v639 = vadd.f32 %v619, %v629
        %v640 = vadd.f32 %v620, %v634
        %v641 = vadd.f32 %v621, %v634
        %v642 = vadd.f32 %v622, %v634
        %v643 = vadd.f32 %v623, %v634
        %vm644 = vcmp.gt.f32.partialorder %v636, 0.0
        %vm645 = vcmp.gt.f32.partialorder %v637, 0.0
        %vm646 = vcmp.gt.f32.partialorder %v638, 0.0
        %vm647 = vcmp.gt.f32.partialorder %v639, 0.0
        %vm648 = vcmp.gt.f32.partialorder %v640, 0.0
        %vm649 = vcmp.gt.f32.partialorder %v641, 0.0
        %vm650 = vcmp.gt.f32.partialorder %v642, 0.0
        %vm651 = vcmp.gt.f32.partialorder %v643, 0.0
        %v652 = vmul.f32 %v636, 0.2
        %v653 = vmul.f32 %v637, 0.2
        %v654 = vmul.f32 %v638, 0.2
        %v655 = vmul.f32 %v639, 0.2
        %v656 = vmul.f32 %v640, 0.2
        %v657 = vmul.f32 %v641, 0.2
        %v658 = vmul.f32 %v642, 0.2
        %v659 = vmul.f32 %v643, 0.2
        %v660 = vsel %vm644, %v636, %v652
        %v661 = vsel %vm645, %v637, %v653
        %v662 = vsel %vm646, %v638, %v654
        %v663 = vsel %vm647, %v639, %v655
        %v664 = vsel %vm648, %v640, %v656
        %v665 = vsel %vm649, %v641, %v657
        %v666 = vsel %vm650, %v642, %v658
        %v667 = vsel %vm651, %v643, %v659
        %v668 = vpack.c.bf16 %v664, %v660
        %v669 = vpack.c.bf16 %v665, %v661
        %v670 = vpack.c.bf16 %v666, %v662
        %v671 = vpack.c.bf16 %v667, %v663
        %v676 = vunpack.c.l.b16 %v668
        %v677 = vunpack.c.l.b16 %v669
        %v678 = vunpack.c.l.b16 %v670
        %v679 = vunpack.c.l.b16 %v671
        %v680 = vunpack.c.h.b16 %v668
        %v681 = vunpack.c.h.b16 %v669
        %v682 = vunpack.c.h.b16 %v670
        %v683 = vunpack.c.h.b16 %v671
        %v684 = vpack.c.b16 %v677, %v676
        %v685 = vpack.c.b16 %v679, %v678
        %v686 = vpack.c.b16 %v681, %v680
        %v687 = vpack.c.b16 %v683, %v682
        %692 = vst [vmem:[%s215] sm:$0xff] %v684
        %693 = vst [vmem:[%s215 + $0x8] sm:$0xff] %v685
        %694 = vst [vmem:[%s215 + $0x10] sm:$0xff] %v686
        %695 = vst [vmem:[%s215 + $0x18] sm:$0xff] %v687
      $region48: #{official_discriminator_forward.6} parent=35 // pred_fallthru
        _
      %s696 = smul.u32 %s20, %s19
      %s697 = smul.u32 4, %s696
      %p698 = scmp.lt.s32.totalorder %s697, 3
      %s699 = scalar_select %p698, %s697, 3
      %s700 = smul.addr %s699, 4
      %s701 = scalar_lea.vmem %s4, %s700
      // Predicated region
      $region53: #{official_discriminator_forward.6} parent=35 // pred_check
        %p702 = pneg %p136
      $region54: #{official_discriminator_forward.6} parent=35 // pred_check_branch
        %704 = sbr.rel (%p702) target = $region56
      $region55: #{official_discriminator_forward.6} parent=35 // pred_region
        %s705 = smul.u32 %s20, %s19
        %s706 = smul.u32 4, %s705
      $region56: #{official_discriminator_forward.6} parent=35 // pred_fallthru
        _
    $region36: #{official_discriminator_forward.6} parent=5 // pred_fallthru
      _
    %p707 = scmp.le.s32.totalorder 2, %s10
    // Predicated region
    $region57: #{official_discriminator_forward.6} parent=5 // pred_check
      %p708 = pneg %p707
    $region58: #{official_discriminator_forward.6} parent=5 // pred_check_branch
      %710 = sbr.rel (%p708) target = $region60
    $region59: #{official_discriminator_forward.6} parent=5 // pred_region
      %s711 = ssub.s32 %s10, 2
      // Predicated region
      $region61: #{official_discriminator_forward.6} parent=59 // pred_check
        %p712 = pneg %p142
      $region62: #{official_discriminator_forward.6} parent=59 // pred_check_branch
        %714 = sbr.rel (%p712) target = $region64
      $region63: #{official_discriminator_forward.6} parent=59 // pred_region
        %s715 = smul.u32 %s22, %s21
        %s716 = smul.u32 4, %s715
        %p717 = scmp.lt.s32.totalorder %s716, 3
        %s718 = scalar_select %p717, %s716, 3
        %s719 = smul.addr %s718, 4
        %s720 = scalar_lea.vmem %s4, %s719
      $region64: #{official_discriminator_forward.6} parent=59 // pred_fallthru
        _
    $region60: #{official_discriminator_forward.6} parent=5 // pred_fallthru
      _
  $region6: #{official_discriminator_forward.6} parent=0 // loop_footer
    %s14 = sadd.s32 1, %s10
  $region7: #{official_discriminator_forward.6} parent=0 // loop_footer_branch
    %9 = sbr.rel target = $region3
  $region8: #{official_discriminator_forward.6} parent=0 // loop_exit
    _

// kernel: official_discriminator_forward.7
$region0: #{official_discriminator_forward.7}
  #allocation0 [shape = 'u32[]', space=smem, size = 0x4, offset = 0x4, fixed_abs, tag = 'smem constant byte address 0x4 - core index']
  #allocation1 [shape = 'u32[144,128]{1,0:T(1,128)}', space=vmem, size = 0x12000, scoped, tag = 'internal scratch']
  #allocation2 [shape = 'f32[32,1]{1,0:T(8,128)}', space=vmem, size = 0x4000, scoped, tag = 'scratch operand']
  #allocation3 [shape = 'f32[32,1]{1,0:T(8,128)}', space=vmem, size = 0x4000, scoped, tag = 'scratch operand']
  #allocation4 [shape = 'f32[32,1]{1,0:T(8,128)}', space=vmem, size = 0x4000, scoped, tag = 'scratch operand']
  #allocation5 [shape = 'f32[32,1]{1,0:T(8,128)}', space=vmem, size = 0x4000, scoped, tag = 'scratch operand']
  %s0 = inlined_call_operand.vmem [shape: bf16[32,256], index: 0, kind: input, shape index: {}]
  %s1 = inlined_call_operand.vmem [shape: bf16[256,128], index: 1, kind: input, shape index: {}]
  %s2 = inlined_call_operand.vmem [shape: f32[32,1], index: 2, kind: input, shape index: {}]
  %s3 = inlined_call_operand.vmem [shape: f32[32,1], index: 3, kind: input, shape index: {}]
  %s4 = inlined_call_operand.vmem [shape: bf16[32,128], index: 4, kind: output, shape index: {}]
  %s5 = sld [smem:[#allocation0]]
  $region65: #{official_discriminator_forward.7} parent=0
    _
  %s7 = ssub.s32 1, %s5
  %s8 = scalar_select 0, %s7, %s5
  loop: start=0, step=1, limit=4
  $region2: #{official_discriminator_forward.7} parent=0 // loop_pre_header
    _
  $region3: #{official_discriminator_forward.7} parent=0 // loop_header
    %s10 = sphi 0, %s14
    %p11 = scmp.ge.s32.totalorder %s10, 4
    %s17 = sphi 0, %s29
    %s18 = sphi 0, %s25
    %s19 = sphi 0, %s17
    %s20 = sphi 0, %s18
    %s21 = sphi 0, %s19
    %s22 = sphi 0, %s20
    %s30 = sphi 0, %s30
    %s32 = sphi 0, %s30
    %s33 = sphi 0, %s32
    %s47 = sphi 0, %s33
    %s53 = sphi 0, %s55
    %s56 = sphi 0, %s53
    %s57 = sphi 0, %s56
    %s73 = sphi 0, %s57
    %s77 = sphi 0, %s77
    %s79 = sphi 0, %s77
    %s80 = sphi 0, %s79
    %s94 = sphi 0, %s80
    %s98 = sphi 0, %s98
    %s100 = sphi 0, %s98
    %s101 = sphi 0, %s100
    %s115 = sphi 0, %s101
    %s123 = sphi 0, %s125
    %s126 = sphi 0, %s123
    %s127 = sphi 0, %s126
    %s143 = sphi 0, %s127
  $region4: #{official_discriminator_forward.7} parent=0 // loop_header_branch
    %13 = sbr.rel (%p11) target = $region8
  $region5: #{official_discriminator_forward.7} parent=0 // loop_body
    %s15 = ssub.s32 %s10, 1
    %s16 = ssub.s32 %s10, 2
    %s23 = sadd.s32 1, %s18
    %p24 = scmp.ge.s32.totalorder %s23, 1
    %s25 = scalar_select %p24, 0, %s23
    %s26 = sadd.s32 1, %s17
    %s27 = scalar_select %p24, %s26, %s17
    %p28 = scmp.ge.s32.totalorder %s27, 2
    %s29 = scalar_select %p28, 0, %s27
    %s31 = sadd.s32 %s30, 1
    %p34 = scmp.eq.s32.totalorder %s10, 1
    %p35 = scmp.ne.s32.totalorder %s30, %s32
    %p36 = scmp.eq.s32.totalorder %s10, 0
    %p37 = por %p35, %p36
    %p38 = scmp.ne.s32.totalorder %s30, %s32
    %p39 = scmp.eq.s32.totalorder %s15, 1
    %p40 = por %p38, %p39
    %p41 = scmp.ne.s32.totalorder %s32, %s33
    %p42 = scmp.eq.s32.totalorder %s15, 0
    %p43 = por %p41, %p42
    %p44 = scmp.ne.s32.totalorder %s32, %s33
    %p45 = scmp.eq.s32.totalorder %s16, 1
    %p46 = por %p44, %p45
    %p48 = scmp.ne.s32.totalorder %s33, %s47
    %p49 = scmp.eq.s32.totalorder %s16, 0
    %p50 = por %p48, %p49
    %s51 = ssub.s32 %s18, %s25
    %p52 = scmp.eq.s32.totalorder %s51, 0
    %s54 = sadd.s32 %s53, 1
    %s55 = scalar_select %p52, %s53, %s54
    %p58 = pneg %p52
    %p59 = scmp.eq.s32.totalorder %s10, 1
    %p60 = por %p58, %p59
    %p61 = scmp.ne.s32.totalorder %s53, %s56
    %p62 = scmp.eq.s32.totalorder %s10, 0
    %p63 = por %p61, %p62
    %p64 = scmp.ne.s32.totalorder %s53, %s56
    %p65 = scmp.eq.s32.totalorder %s15, 1
    %p66 = por %p64, %p65
    %p67 = scmp.ne.s32.totalorder %s56, %s57
    %p68 = scmp.eq.s32.totalorder %s15, 0
    %p69 = por %p67, %p68
    %p70 = scmp.ne.s32.totalorder %s56, %s57
    %p71 = scmp.eq.s32.totalorder %s16, 1
    %p72 = por %p70, %p71
    %p74 = scmp.ne.s32.totalorder %s57, %s73
    %p75 = scmp.eq.s32.totalorder %s16, 0
    %p76 = por %p74, %p75
    %s78 = sadd.s32 %s77, 1
    %p81 = scmp.eq.s32.totalorder %s10, 1
    %p82 = scmp.ne.s32.totalorder %s77, %s79
    %p83 = scmp.eq.s32.totalorder %s10, 0
    %p84 = por %p82, %p83
    %p85 = scmp.ne.s32.totalorder %s77, %s79
    %p86 = scmp.eq.s32.totalorder %s15, 1
    %p87 = por %p85, %p86
    %p88 = scmp.ne.s32.totalorder %s79, %s80
    %p89 = scmp.eq.s32.totalorder %s15, 0
    %p90 = por %p88, %p89
    %p91 = scmp.ne.s32.totalorder %s79, %s80
    %p92 = scmp.eq.s32.totalorder %s16, 1
    %p93 = por %p91, %p92
    %p95 = scmp.ne.s32.totalorder %s80, %s94
    %p96 = scmp.eq.s32.totalorder %s16, 0
    %p97 = por %p95, %p96
    %s99 = sadd.s32 %s98, 1
    %p102 = scmp.eq.s32.totalorder %s10, 1
    %p103 = scmp.ne.s32.totalorder %s98, %s100
    %p104 = scmp.eq.s32.totalorder %s10, 0
    %p105 = por %p103, %p104
    %p106 = scmp.ne.s32.totalorder %s98, %s100
    %p107 = scmp.eq.s32.totalorder %s15, 1
    %p108 = por %p106, %p107
    %p109 = scmp.ne.s32.totalorder %s100, %s101
    %p110 = scmp.eq.s32.totalorder %s15, 0
    %p111 = por %p109, %p110
    %p112 = scmp.ne.s32.totalorder %s100, %s101
    %p113 = scmp.eq.s32.totalorder %s16, 1
    %p114 = por %p112, %p113
    %p116 = scmp.ne.s32.totalorder %s101, %s115
    %p117 = scmp.eq.s32.totalorder %s16, 0
    %p118 = por %p116, %p117
    %s119 = smul.u32 %s18, %s17
    %s120 = smul.u32 %s25, %s29
    %s121 = ssub.s32 %s119, %s120
    %p122 = scmp.eq.s32.totalorder %s121, 0
    %s124 = sadd.s32 %s123, 1
    %s125 = scalar_select %p122, %s123, %s124
    %p128 = pneg %p122
    %p129 = scmp.eq.s32.totalorder %s10, 1
    %p130 = por %p128, %p129
    %p131 = scmp.ne.s32.totalorder %s123, %s126
    %p132 = scmp.eq.s32.totalorder %s10, 0
    %p133 = por %p131, %p132
    %p134 = scmp.ne.s32.totalorder %s123, %s126
    %p135 = scmp.eq.s32.totalorder %s15, 1
    %p136 = por %p134, %p135
    %p137 = scmp.ne.s32.totalorder %s126, %s127
    %p138 = scmp.eq.s32.totalorder %s15, 0
    %p139 = por %p137, %p138
    %p140 = scmp.ne.s32.totalorder %s126, %s127
    %p141 = scmp.eq.s32.totalorder %s16, 1
    %p142 = por %p140, %p141
    %p144 = scmp.ne.s32.totalorder %s127, %s143
    %p145 = scmp.eq.s32.totalorder %s16, 0
    %p146 = por %p144, %p145
    %p147 = scmp.le.s32.totalorder 1, %s10
    %p148 = scmp.lt.s32.totalorder %s10, 3
    %p149 = pnand %p147, %p148
    %p150 = pneg %p149
    // Predicated region
    $region9: #{official_discriminator_forward.7} parent=5 // pred_check
      _
    $region10: #{official_discriminator_forward.7} parent=5 // pred_check_branch
      %152 = sbr.rel (%p149) target = $region12
    $region11: #{official_discriminator_forward.7} parent=5 // pred_region
      %s153 = ssub.s32 %s10, 1
      // Predicated region
      $region13: #{official_discriminator_forward.7} parent=11 // pred_check
        %p154 = pneg %p43
      $region14: #{official_discriminator_forward.7} parent=11 // pred_check_branch
        %156 = sbr.rel (%p154) target = $region16
      $region15: #{official_discriminator_forward.7} parent=11 // pred_region
        _
      $region16: #{official_discriminator_forward.7} parent=11 // pred_fallthru
        _
      // Predicated region
      $region17: #{official_discriminator_forward.7} parent=11 // pred_check
        %p157 = pneg %p69
      $region18: #{official_discriminator_forward.7} parent=11 // pred_check_branch
        %159 = sbr.rel (%p157) target = $region20
      $region19: #{official_discriminator_forward.7} parent=11 // pred_region
        %p160 = scmp.lt.s32.totalorder %s20, 0
        %s161 = scalar_select %p160, %s20, 0
        %s162 = smul.addr %s161, 4
        %s163 = scalar_lea.vmem %s1, %s162
      $region20: #{official_discriminator_forward.7} parent=11 // pred_fallthru
        _
      // Predicated region
      $region21: #{official_discriminator_forward.7} parent=11 // pred_check
        %p164 = pneg %p90
      $region22: #{official_discriminator_forward.7} parent=11 // pred_check_branch
        %166 = sbr.rel (%p164) target = $region24
      $region23: #{official_discriminator_forward.7} parent=11 // pred_region
        _
      $region24: #{official_discriminator_forward.7} parent=11 // pred_fallthru
        _
      // Predicated region
      $region25: #{official_discriminator_forward.7} parent=11 // pred_check
        %p167 = pneg %p111
      $region26: #{official_discriminator_forward.7} parent=11 // pred_check_branch
        %169 = sbr.rel (%p167) target = $region28
      $region27: #{official_discriminator_forward.7} parent=11 // pred_region
        _
      $region28: #{official_discriminator_forward.7} parent=11 // pred_fallthru
        _
    $region12: #{official_discriminator_forward.7} parent=5 // pred_fallthru
      _
    %p170 = scmp.lt.s32.totalorder %s10, 2
    // Predicated region
    $region29: #{official_discriminator_forward.7} parent=5 // pred_check
      %p171 = pneg %p170
    $region30: #{official_discriminator_forward.7} parent=5 // pred_check_branch
      %173 = sbr.rel (%p171) target = $region32
    $region31: #{official_discriminator_forward.7} parent=5 // pred_region
      _
    $region32: #{official_discriminator_forward.7} parent=5 // pred_fallthru
      _
    %p174 = scmp.le.s32.totalorder 1, %s10
    %p175 = scmp.lt.s32.totalorder %s10, 3
    %p176 = pnand %p174, %p175
    %p177 = pneg %p176
    // Predicated region
    $region33: #{official_discriminator_forward.7} parent=5 // pred_check
      _
    $region34: #{official_discriminator_forward.7} parent=5 // pred_check_branch
      %179 = sbr.rel (%p176) target = $region36
    $region35: #{official_discriminator_forward.7} parent=5 // pred_region
      %s180 = ssub.s32 %s10, 1
      %p181 = pneg %p43
      %p182 = pneg %p40
      %p183 = scmp.lt.s32.totalorder %s20, 0
      %s184 = scalar_select %p183, %s20, 0
      %s185 = smul.addr %s184, 4
      %s186 = scalar_lea.vmem %s1, %s185
      %p187 = pneg %p69
      %p188 = pneg %p66
      %p189 = pneg %p90
      %p190 = pneg %p87
      %p191 = pneg %p111
      %p192 = pneg %p108
      %p193 = pneg %p139
      %p194 = pneg %p136
      %s195 = smul.u32 %s20, %s19
      %p196 = scmp.lt.s32.totalorder %s195, 0
      %s197 = scalar_select %p196, %s195, 0
      %s198 = smul.addr %s197, 4
      %s199 = scalar_lea.vmem %s4, %s198
      %p200 = scmp.lt.s32.totalorder %s20, 0
      %s201 = scalar_select %p200, %s20, 0
      %s202 = smul.addr %s201, 4
      %s203 = scalar_lea.vmem %s1, %s202
      %s204 = smul.u32 %s20, %s19
      %p205 = scmp.lt.s32.totalorder %s204, 0
      %s206 = scalar_select %p205, %s204, 0
      %s207 = smul.addr %s206, 4
      %s208 = scalar_lea.vmem %s4, %s207
      %s209 = smul.u32 %s20, %s19
      %v211 = vld [vmem:[%s0] sm:$0xff]
      %v212 = vld [vmem:[%s0 + $0x8] sm:$0xff]
      %v213 = vld [vmem:[%s0 + $0x10] sm:$0xff]
      %v214 = vld [vmem:[%s0 + $0x18] sm:$0xff]
      %v215 = vld [vmem:[%s203] sm:$0xf]
      %v216 = vld [vmem:[%s203 + $0x4] sm:$0xf]
      %v217 = vld [vmem:[%s203 + $0x8] sm:$0xf]
      %v218 = vld [vmem:[%s203 + $0xc] sm:$0xf]
      %v219 = vld [vmem:[%s203 + $0x10] sm:$0xf]
      %v220 = vld [vmem:[%s203 + $0x14] sm:$0xf]
      %v221 = vld [vmem:[%s203 + $0x18] sm:$0xf]
      %v222 = vld [vmem:[%s203 + $0x1c] sm:$0xf]
      %v223 = vld [vmem:[%s203 + $0x20] sm:$0xf]
      %v224 = vld [vmem:[%s203 + $0x24] sm:$0xf]
      %v225 = vld [vmem:[%s203 + $0x28] sm:$0xf]
      %v226 = vld [vmem:[%s203 + $0x2c] sm:$0xf]
      %v227 = vld [vmem:[%s203 + $0x30] sm:$0xf]
      %v228 = vld [vmem:[%s203 + $0x34] sm:$0xf]
      %v229 = vld [vmem:[%s203 + $0x38] sm:$0xf]
      %v230 = vld [vmem:[%s203 + $0x3c] sm:$0xf]
      %v231 = vld [vmem:[%s203 + $0x40] sm:$0xf]
      %v232 = vld [vmem:[%s203 + $0x44] sm:$0xf]
      %v233 = vld [vmem:[%s203 + $0x48] sm:$0xf]
      %v234 = vld [vmem:[%s203 + $0x4c] sm:$0xf]
      %v235 = vld [vmem:[%s203 + $0x50] sm:$0xf]
      %v236 = vld [vmem:[%s203 + $0x54] sm:$0xf]
      %v237 = vld [vmem:[%s203 + $0x58] sm:$0xf]
      %v238 = vld [vmem:[%s203 + $0x5c] sm:$0xf]
      %v239 = vld [vmem:[%s203 + $0x60] sm:$0xf]
      %v240 = vld [vmem:[%s203 + $0x64] sm:$0xf]
      %v241 = vld [vmem:[%s203 + $0x68] sm:$0xf]
      %v242 = vld [vmem:[%s203 + $0x6c] sm:$0xf]
      %v243 = vld [vmem:[%s203 + $0x70] sm:$0xf]
      %v244 = vld [vmem:[%s203 + $0x74] sm:$0xf]
      %v245 = vld [vmem:[%s203 + $0x78] sm:$0xf]
      %v246 = vld [vmem:[%s203 + $0x7c] sm:$0xf]
      %v251 = vunpack.c.l.b16 %v211
      %v252 = vunpack.c.h.b16 %v211
      %v253 = vunpack.c.l.b16 %v212
      %v254 = vunpack.c.h.b16 %v212
      %v255 = vunpack.c.l.b16 %v213
      %v256 = vunpack.c.h.b16 %v213
      %v257 = vunpack.c.l.b16 %v214
      %v258 = vunpack.c.h.b16 %v214
      %v259 = vpack.c.b16 %v253, %v251
      %v260 = vpack.c.b16 %v254, %v252
      %v261 = vpack.c.b16 %v257, %v255
      %v262 = vpack.c.b16 %v258, %v256
      %v299 = vunpack.c.l.b16 %v215
      %v300 = vunpack.c.l.b16 %v216
      %v301 = vunpack.c.l.b16 %v217
      %v302 = vunpack.c.l.b16 %v218
      %v303 = vunpack.c.l.b16 %v219
      %v304 = vunpack.c.l.b16 %v220
      %v305 = vunpack.c.l.b16 %v221
      %v306 = vunpack.c.l.b16 %v222
      %v307 = vunpack.c.l.b16 %v223
      %v308 = vunpack.c.l.b16 %v224
      %v309 = vunpack.c.l.b16 %v225
      %v310 = vunpack.c.l.b16 %v226
      %v311 = vunpack.c.l.b16 %v227
      %v312 = vunpack.c.l.b16 %v228
      %v313 = vunpack.c.l.b16 %v229
      %v314 = vunpack.c.l.b16 %v230
      %v315 = vunpack.c.l.b16 %v231
      %v316 = vunpack.c.l.b16 %v232
      %v317 = vunpack.c.l.b16 %v233
      %v318 = vunpack.c.l.b16 %v234
      %v319 = vunpack.c.l.b16 %v235
      %v320 = vunpack.c.l.b16 %v236
      %v321 = vunpack.c.l.b16 %v237
      %v322 = vunpack.c.l.b16 %v238
      %v323 = vunpack.c.l.b16 %v239
      %v324 = vunpack.c.l.b16 %v240
      %v325 = vunpack.c.l.b16 %v241
      %v326 = vunpack.c.l.b16 %v242
      %v327 = vunpack.c.l.b16 %v243
      %v328 = vunpack.c.l.b16 %v244
      %v329 = vunpack.c.l.b16 %v245
      %v330 = vunpack.c.l.b16 %v246
      %v331 = vpack.c.b16 %v300, %v299
      %v332 = vpack.c.b16 %v302, %v301
      %v333 = vpack.c.b16 %v304, %v303
      %v334 = vpack.c.b16 %v306, %v305
      %v335 = vpack.c.b16 %v308, %v307
      %v336 = vpack.c.b16 %v310, %v309
      %v337 = vpack.c.b16 %v312, %v311
      %v338 = vpack.c.b16 %v314, %v313
      %v339 = vpack.c.b16 %v316, %v315
      %v340 = vpack.c.b16 %v318, %v317
      %v341 = vpack.c.b16 %v320, %v319
      %v342 = vpack.c.b16 %v322, %v321
      %v343 = vpack.c.b16 %v324, %v323
      %v344 = vpack.c.b16 %v326, %v325
      %v345 = vpack.c.b16 %v328, %v327
      %v346 = vpack.c.b16 %v330, %v329
      %363 = vmatprep.subr.bf16.mxu0 0
      %364 = vmatpush1.bf16.msra.mxu0 %v331
      %365 = vmatprep.subr.bf16.mxu0 0
      %366 = vmatpush1.bf16.msra.mxu0 %v332
      %367 = vmatprep.subr.bf16.mxu0 0
      %368 = vmatpush1.bf16.msra.mxu0 %v333
      %369 = vmatprep.subr.bf16.mxu0 0
      %370 = vmatpush1.bf16.msra.mxu0 %v334
      %371 = vmatprep.subr.bf16.mxu0 0
      %372 = vmatpush1.bf16.msra.mxu0 %v335
      %373 = vmatprep.subr.bf16.mxu0 0
      %374 = vmatpush1.bf16.msra.mxu0 %v336
      %375 = vmatprep.subr.bf16.mxu0 0
      %376 = vmatpush1.bf16.msra.mxu0 %v337
      %377 = vmatprep.subr.bf16.mxu0 0
      %378 = vmatpush1.bf16.msra.mxu0 %v338
      %379 = vmatprep.subr.bf16.mxu0 0
      %380 = vmatpush1.bf16.msra.mxu0 %v339
      %381 = vmatprep.subr.bf16.mxu0 0
      %382 = vmatpush1.bf16.msra.mxu0 %v340
      %383 = vmatprep.subr.bf16.mxu0 0
      %384 = vmatpush1.bf16.msra.mxu0 %v341
      %385 = vmatprep.subr.bf16.mxu0 0
      %386 = vmatpush1.bf16.msra.mxu0 %v342
      %387 = vmatprep.subr.bf16.mxu0 0
      %388 = vmatpush1.bf16.msra.mxu0 %v343
      %389 = vmatprep.subr.bf16.mxu0 0
      %390 = vmatpush1.bf16.msra.mxu0 %v344
      %391 = vmatprep.subr.bf16.mxu0 0
      %392 = vmatpush1.bf16.msra.mxu0 %v345
      %393 = vmatprep.subr.bf16.mxu0 0
      %394 = vmatpush1.bf16.msra.mxu0 %v346
      %395 = vmatprep.mubr.bf16.mxu0 %v260
      %396 = vmatmul.mubr.bf16.gmra.mrb[0].mxu0 %v259
      %v397 = vpop.f32.mrb[0].mxu0
      %v398 = vadd.f32 0.0, %v397
      %v399 = vpop.f32.mrb[0].mxu0
      %v400 = vpop.f32.mrb[0].mxu0
      %v401 = vadd.f32 0.0, %v400
      %v402 = vpop.f32.mrb[0].mxu0
      %403 = vmatprep.mubr.bf16.mxu0 %v262
      %404 = vmatmul.mubr.bf16.gmra.mrb[0].mxu0 %v261
      %v405 = vpop.f32.mrb[0].mxu0
      %v406 = vadd.f32 0.0, %v405
      %v407 = vpop.f32.mrb[0].mxu0
      %v408 = vpop.f32.mrb[0].mxu0
      %v409 = vadd.f32 0.0, %v408
      %v410 = vpop.f32.mrb[0].mxu0
      %411 = vdwg.mxu0
      %p412 = scmp.eq.s32.totalorder %s19, 0
      // Predicated region
      $region37: #{official_discriminator_forward.7} parent=35 // pred_check
        %p413 = pneg %p412
      $region38: #{official_discriminator_forward.7} parent=35 // pred_check_branch
        %415 = sbr.rel (%p413) target = $region40
      $region39: #{official_discriminator_forward.7} parent=35 // pred_region
        %p416 = scmp.eq.s32.totalorder %s20, 0
        // Predicated region
        $region41: #{official_discriminator_forward.7} parent=39 // pred_check
          %p417 = pneg %p416
        $region42: #{official_discriminator_forward.7} parent=39 // pred_check_branch
          %419 = sbr.rel (%p417) target = $region44
        $region43: #{official_discriminator_forward.7} parent=39 // pred_region
          %vm420 = vcmask 7168
          %421 = vst.msk [vmem:[#allocation2] sm:$0xff] %vm420, 0.0
          %422 = vst.msk [vmem:[#allocation2 + $0x8] sm:$0xff] %vm420, 0.0
          %423 = vst.msk [vmem:[#allocation2 + $0x10] sm:$0xff] %vm420, 0.0
          %424 = vst.msk [vmem:[#allocation2 + $0x18] sm:$0xff] %vm420, 0.0
          %425 = vst.msk [vmem:[#allocation3] sm:$0xff] %vm420, 0.0
          %426 = vst.msk [vmem:[#allocation3 + $0x8] sm:$0xff] %vm420, 0.0
          %427 = vst.msk [vmem:[#allocation3 + $0x10] sm:$0xff] %vm420, 0.0
          %428 = vst.msk [vmem:[#allocation3 + $0x18] sm:$0xff] %vm420, 0.0
          %429 = vst [vmem:[%s208] sm:$0xf] 0
          %430 = vst [vmem:[%s208 + $0x4] sm:$0xf] 0
          %431 = vst [vmem:[%s208 + $0x8] sm:$0xf] 0
          %432 = vst [vmem:[%s208 + $0xc] sm:$0xf] 0
        $region44: #{official_discriminator_forward.7} parent=39 // pred_fallthru
          _
        %v433 = vld [vmem:[#allocation2] sm:$0xff]
        %v434 = vld [vmem:[#allocation2 + $0x8] sm:$0xff]
        %v435 = vld [vmem:[#allocation2 + $0x10] sm:$0xff]
        %v436 = vld [vmem:[#allocation2 + $0x18] sm:$0xff]
        %437 = vadd.xlane.f32.xlu0 %v398
        %v438 = vpop.xlane.xlu0 %437
        %439 = vadd.xlane.f32.xlu0 %v401
        %v440 = vpop.xlane.xlu0 %439
        %441 = vadd.xlane.f32.xlu0 %v406
        %v442 = vpop.xlane.xlu0 %441
        %443 = vadd.xlane.f32.xlu0 %v409
        %v444 = vpop.xlane.xlu0 %443
        %v445 = vadd.f32 %v433, %v438
        %v446 = vadd.f32 %v434, %v440
        %v447 = vadd.f32 %v435, %v442
        %v448 = vadd.f32 %v436, %v444
        %vm449 = vcmask 7168
        %450 = vst.msk [vmem:[#allocation2] sm:$0xff] %vm449, %v445
        %451 = vst.msk [vmem:[#allocation2 + $0x8] sm:$0xff] %vm449, %v446
        %452 = vst.msk [vmem:[#allocation2 + $0x10] sm:$0xff] %vm449, %v447
        %453 = vst.msk [vmem:[#allocation2 + $0x18] sm:$0xff] %vm449, %v448
        %v454 = vld [vmem:[#allocation3] sm:$0xff]
        %v455 = vld [vmem:[#allocation3 + $0x8] sm:$0xff]
        %v456 = vld [vmem:[#allocation3 + $0x10] sm:$0xff]
        %v457 = vld [vmem:[#allocation3 + $0x18] sm:$0xff]
        %v458 = vmul.f32 %v398, %v398
        %v459 = vmul.f32 %v401, %v401
        %v460 = vmul.f32 %v406, %v406
        %v461 = vmul.f32 %v409, %v409
        %462 = vadd.xlane.f32.xlu0 %v458
        %v463 = vpop.xlane.xlu0 %462
        %464 = vadd.xlane.f32.xlu0 %v459
        %v465 = vpop.xlane.xlu0 %464
        %466 = vadd.xlane.f32.xlu0 %v460
        %v467 = vpop.xlane.xlu0 %466
        %468 = vadd.xlane.f32.xlu0 %v461
        %v469 = vpop.xlane.xlu0 %468
        %v470 = vadd.f32 %v454, %v463
        %v471 = vadd.f32 %v455, %v465
        %v472 = vadd.f32 %v456, %v467
        %v473 = vadd.f32 %v457, %v469
        %474 = vst.msk [vmem:[#allocation3] sm:$0xff] %vm449, %v470
        %475 = vst.msk [vmem:[#allocation3 + $0x8] sm:$0xff] %vm449, %v471
        %476 = vst.msk [vmem:[#allocation3 + $0x10] sm:$0xff] %vm449, %v472
        %477 = vst.msk [vmem:[#allocation3 + $0x18] sm:$0xff] %vm449, %v473
      $region40: #{official_discriminator_forward.7} parent=35 // pred_fallthru
        _
      %p478 = scmp.eq.s32.totalorder %s19, 1
      // Predicated region
      $region45: #{official_discriminator_forward.7} parent=35 // pred_check
        %p479 = pneg %p478
      $region46: #{official_discriminator_forward.7} parent=35 // pred_check_branch
        %481 = sbr.rel (%p479) target = $region48
      $region47: #{official_discriminator_forward.7} parent=35 // pred_region
        %p482 = scmp.eq.s32.totalorder %s20, 0
        // Predicated region
        $region49: #{official_discriminator_forward.7} parent=47 // pred_check
          %p483 = pneg %p482
        $region50: #{official_discriminator_forward.7} parent=47 // pred_check_branch
          %485 = sbr.rel (%p483) target = $region52
        $region51: #{official_discriminator_forward.7} parent=47 // pred_region
          %v486 = vld [vmem:[#allocation2] sm:$0xff]
          %v487 = vld [vmem:[#allocation2 + $0x8] sm:$0xff]
          %v488 = vld [vmem:[#allocation2 + $0x10] sm:$0xff]
          %v489 = vld [vmem:[#allocation2 + $0x18] sm:$0xff]
          %v490 = vmul.f32 %v486, 0.0078125
          %v491 = vmul.f32 %v487, 0.0078125
          %v492 = vmul.f32 %v488, 0.0078125
          %v493 = vmul.f32 %v489, 0.0078125
          %v494 = vld [vmem:[#allocation3] sm:$0xff]
          %v495 = vld [vmem:[#allocation3 + $0x8] sm:$0xff]
          %v496 = vld [vmem:[#allocation3 + $0x10] sm:$0xff]
          %v497 = vld [vmem:[#allocation3 + $0x18] sm:$0xff]
          %v498 = vmul.f32 %v494, 0.0078125
          %v499 = vmul.f32 %v495, 0.0078125
          %v500 = vmul.f32 %v496, 0.0078125
          %v501 = vmul.f32 %v497, 0.0078125
          %v502 = vmul.f32 %v490, %v490
          %v503 = vmul.f32 %v491, %v491
          %v504 = vmul.f32 %v492, %v492
          %v505 = vmul.f32 %v493, %v493
          %v506 = vsub.f32 %v498, %v502
          %v507 = vsub.f32 %v499, %v503
          %v508 = vsub.f32 %v500, %v504
          %v509 = vsub.f32 %v501, %v505
          %v510 = vmax.f32 %v506, 0.0
          %v511 = vmax.f32 %v507, 0.0
          %v512 = vmax.f32 %v508, 0.0
          %v513 = vmax.f32 %v509, 0.0
          %v514 = vld [vmem:[%s2] sm:$0xff]
          %v515 = vld [vmem:[%s2 + $0x8] sm:$0xff]
          %v516 = vld [vmem:[%s2 + $0x10] sm:$0xff]
          %v517 = vld [vmem:[%s2 + $0x18] sm:$0xff]
          %v518 = vadd.f32 %v510, 1e-05
          %v519 = vadd.f32 %v511, 1e-05
          %v520 = vadd.f32 %v512, 1e-05
          %v521 = vadd.f32 %v513, 1e-05
          %v522 = vrsqrt.pop %v518
          %v523 = vrsqrt.pop %v519
          %v524 = vrsqrt.pop %v520
          %v525 = vrsqrt.pop %v521
          %v526 = vmul.f32 %v514, %v522
          %v527 = vmul.f32 %v515, %v523
          %v528 = vmul.f32 %v516, %v524
          %v529 = vmul.f32 %v517, %v525
          %vm530 = vcmask 7168
          %531 = vst.msk [vmem:[#allocation4] sm:$0xff] %vm530, %v526
          %532 = vst.msk [vmem:[#allocation4 + $0x8] sm:$0xff] %vm530, %v527
          %533 = vst.msk [vmem:[#allocation4 + $0x10] sm:$0xff] %vm530, %v528
          %534 = vst.msk [vmem:[#allocation4 + $0x18] sm:$0xff] %vm530, %v529
          %v535 = vld [vmem:[%s3] sm:$0xff]
          %v536 = vld [vmem:[%s3 + $0x8] sm:$0xff]
          %v537 = vld [vmem:[%s3 + $0x10] sm:$0xff]
          %v538 = vld [vmem:[%s3 + $0x18] sm:$0xff]
          %v539 = vmul.f32 %v490, %v526
          %v540 = vmul.f32 %v491, %v527
          %v541 = vmul.f32 %v492, %v528
          %v542 = vmul.f32 %v493, %v529
          %v543 = vsub.f32 %v535, %v539
          %v544 = vsub.f32 %v536, %v540
          %v545 = vsub.f32 %v537, %v541
          %v546 = vsub.f32 %v538, %v542
          %547 = vst.msk [vmem:[#allocation5] sm:$0xff] %vm530, %v543
          %548 = vst.msk [vmem:[#allocation5 + $0x8] sm:$0xff] %vm530, %v544
          %549 = vst.msk [vmem:[#allocation5 + $0x10] sm:$0xff] %vm530, %v545
          %550 = vst.msk [vmem:[#allocation5 + $0x18] sm:$0xff] %vm530, %v546
        $region52: #{official_discriminator_forward.7} parent=47 // pred_fallthru
          _
        %v551 = vld [vmem:[#allocation4] sm:$0xff]
        %v552 = vld [vmem:[#allocation4 + $0x8] sm:$0xff]
        %v553 = vld [vmem:[#allocation4 + $0x10] sm:$0xff]
        %v554 = vld [vmem:[#allocation4 + $0x18] sm:$0xff]
        %556 = vset.pattern.permute.xlu0 0
        %557 = vperm.xlu0 %556, %v551
        %v558 = vpop.permute.xlu0 %557
        %561 = vset.pattern.permute.xlu0 0
        %562 = vperm.xlu0 %561, %v552
        %v563 = vpop.permute.xlu0 %562
        %566 = vset.pattern.permute.xlu0 0
        %567 = vperm.xlu0 %566, %v553
        %v568 = vpop.permute.xlu0 %567
        %571 = vset.pattern.permute.xlu0 0
        %572 = vperm.xlu0 %571, %v554
        %v573 = vpop.permute.xlu0 %572
        %v575 = vmul.f32 %v398, %v558
        %v576 = vmul.f32 %v401, %v563
        %v577 = vmul.f32 %v406, %v568
        %v578 = vmul.f32 %v409, %v573
        %v579 = vld [vmem:[#allocation5] sm:$0xff]
        %v580 = vld [vmem:[#allocation5 + $0x8] sm:$0xff]
        %v581 = vld [vmem:[#allocation5 + $0x10] sm:$0xff]
        %v582 = vld [vmem:[#allocation5 + $0x18] sm:$0xff]
        %584 = vset.pattern.permute.xlu0 0
        %585 = vperm.xlu0 %584, %v579
        %v586 = vpop.permute.xlu0 %585
        %589 = vset.pattern.permute.xlu0 0
        %590 = vperm.xlu0 %589, %v580
        %v591 = vpop.permute.xlu0 %590
        %594 = vset.pattern.permute.xlu0 0
        %595 = vperm.xlu0 %594, %v581
        %v596 = vpop.permute.xlu0 %595
        %599 = vset.pattern.permute.xlu0 0
        %600 = vperm.xlu0 %599, %v582
        %v601 = vpop.permute.xlu0 %600
        %v603 = vadd.f32 %v575, %v586
        %v604 = vadd.f32 %v576, %v591
        %v605 = vadd.f32 %v577, %v596
        %v606 = vadd.f32 %v578, %v601
        %vm607 = vcmp.gt.f32.partialorder %v603, 0.0
        %vm608 = vcmp.gt.f32.partialorder %v604, 0.0
        %vm609 = vcmp.gt.f32.partialorder %v605, 0.0
        %vm610 = vcmp.gt.f32.partialorder %v606, 0.0
        %v611 = vmul.f32 %v603, 0.2
        %v612 = vmul.f32 %v604, 0.2
        %v613 = vmul.f32 %v605, 0.2
        %v614 = vmul.f32 %v606, 0.2
        %v615 = vsel %vm607, %v603, %v611
        %v616 = vsel %vm608, %v604, %v612
        %v617 = vsel %vm609, %v605, %v613
        %v618 = vsel %vm610, %v606, %v614
        %v619 = vpack.c.bf16 %v616, %v615
        %v620 = vpack.c.bf16 %v618, %v617
        %v623 = vunpack.c.l.b16 %v619
        %v624 = vunpack.c.h.b16 %v619
        %v625 = vunpack.c.l.b16 %v620
        %v626 = vunpack.c.h.b16 %v620
        %v627 = vpack.c.b16 %v623, %v623
        %v628 = vpack.c.b16 %v624, %v624
        %v629 = vpack.c.b16 %v625, %v625
        %v630 = vpack.c.b16 %v626, %v626
        %635 = vst [vmem:[%s208] sm:$0xf] %v627
        %636 = vst [vmem:[%s208 + $0x4] sm:$0xf] %v628
        %637 = vst [vmem:[%s208 + $0x8] sm:$0xf] %v629
        %638 = vst [vmem:[%s208 + $0xc] sm:$0xf] %v630
      $region48: #{official_discriminator_forward.7} parent=35 // pred_fallthru
        _
      %s639 = smul.u32 %s20, %s19
      %p640 = scmp.lt.s32.totalorder %s639, 0
      %s641 = scalar_select %p640, %s639, 0
      %s642 = smul.addr %s641, 4
      %s643 = scalar_lea.vmem %s4, %s642
      // Predicated region
      $region53: #{official_discriminator_forward.7} parent=35 // pred_check
        %p644 = pneg %p136
      $region54: #{official_discriminator_forward.7} parent=35 // pred_check_branch
        %646 = sbr.rel (%p644) target = $region56
      $region55: #{official_discriminator_forward.7} parent=35 // pred_region
        %s647 = smul.u32 %s20, %s19
      $region56: #{official_discriminator_forward.7} parent=35 // pred_fallthru
        _
    $region36: #{official_discriminator_forward.7} parent=5 // pred_fallthru
      _
    %p648 = scmp.le.s32.totalorder 2, %s10
    // Predicated region
    $region57: #{official_discriminator_forward.7} parent=5 // pred_check
      %p649 = pneg %p648
    $region58: #{official_discriminator_forward.7} parent=5 // pred_check_branch
      %651 = sbr.rel (%p649) target = $region60
    $region59: #{official_discriminator_forward.7} parent=5 // pred_region
      %s652 = ssub.s32 %s10, 2
      // Predicated region
      $region61: #{official_discriminator_forward.7} parent=59 // pred_check
        %p653 = pneg %p142
      $region62: #{official_discriminator_forward.7} parent=59 // pred_check_branch
        %655 = sbr.rel (%p653) target = $region64
      $region63: #{official_discriminator_forward.7} parent=59 // pred_region
        %s656 = smul.u32 %s22, %s21
        %p657 = scmp.lt.s32.totalorder %s656, 0
        %s658 = scalar_select %p657, %s656, 0
        %s659 = smul.addr %s658, 4
        %s660 = scalar_lea.vmem %s4, %s659
      $region64: #{official_discriminator_forward.7} parent=59 // pred_fallthru
        _
    $region60: #{official_discriminator_forward.7} parent=5 // pred_fallthru
      _
  $region6: #{official_discriminator_forward.7} parent=0 // loop_footer
    %s14 = sadd.s32 1, %s10
  $region7: #{official_discriminator_forward.7} parent=0 // loop_footer_branch
    %9 = sbr.rel target = $region3
  $region8: #{official_discriminator_forward.7} parent=0 // loop_exit
    _

// kernel: official_discriminator_forward.8
$region0: #{official_discriminator_forward.8}
  #allocation0 [shape = 'u32[]', space=smem, size = 0x4, offset = 0x4, fixed_abs, tag = 'smem constant byte address 0x4 - core index']
  #allocation1 [shape = 'u32[144,128]{1,0:T(1,128)}', space=vmem, size = 0x12000, scoped, tag = 'internal scratch']
  #allocation2 [shape = 'f32[64,1]{1,0:T(8,128)}', space=vmem, size = 0x8000, scoped, tag = 'scratch operand']
  #allocation3 [shape = 'f32[64,1]{1,0:T(8,128)}', space=vmem, size = 0x8000, scoped, tag = 'scratch operand']
  #allocation4 [shape = 'f32[64,1]{1,0:T(8,128)}', space=vmem, size = 0x8000, scoped, tag = 'scratch operand']
  #allocation5 [shape = 'f32[64,1]{1,0:T(8,128)}', space=vmem, size = 0x8000, scoped, tag = 'scratch operand']
  %s0 = inlined_call_operand.vmem [shape: bf16[64,512], index: 0, kind: input, shape index: {}]
  %s1 = inlined_call_operand.vmem [shape: bf16[512,32], index: 1, kind: input, shape index: {}]
  %s2 = inlined_call_operand.vmem [shape: f32[64,1], index: 2, kind: input, shape index: {}]
  %s3 = inlined_call_operand.vmem [shape: f32[64,1], index: 3, kind: input, shape index: {}]
  %s4 = inlined_call_operand.vmem [shape: bf16[64,32], index: 4, kind: output, shape index: {}]
  %s5 = sld [smem:[#allocation0]]
  $region65: #{official_discriminator_forward.8} parent=0
    _
  %s7 = ssub.s32 1, %s5
  %s8 = scalar_select 0, %s7, %s5
  loop: start=0, step=1, limit=4
  $region2: #{official_discriminator_forward.8} parent=0 // loop_pre_header
    _
  $region3: #{official_discriminator_forward.8} parent=0 // loop_header
    %s10 = sphi 0, %s14
    %p11 = scmp.ge.s32.totalorder %s10, 4
    %s17 = sphi 0, %s29
    %s18 = sphi 0, %s25
    %s19 = sphi 0, %s17
    %s20 = sphi 0, %s18
    %s21 = sphi 0, %s19
    %s22 = sphi 0, %s20
    %s30 = sphi 0, %s30
    %s32 = sphi 0, %s30
    %s33 = sphi 0, %s32
    %s47 = sphi 0, %s33
    %s53 = sphi 0, %s55
    %s56 = sphi 0, %s53
    %s57 = sphi 0, %s56
    %s73 = sphi 0, %s57
    %s77 = sphi 0, %s77
    %s79 = sphi 0, %s77
    %s80 = sphi 0, %s79
    %s94 = sphi 0, %s80
    %s98 = sphi 0, %s98
    %s100 = sphi 0, %s98
    %s101 = sphi 0, %s100
    %s115 = sphi 0, %s101
    %s123 = sphi 0, %s125
    %s126 = sphi 0, %s123
    %s127 = sphi 0, %s126
    %s143 = sphi 0, %s127
  $region4: #{official_discriminator_forward.8} parent=0 // loop_header_branch
    %13 = sbr.rel (%p11) target = $region8
  $region5: #{official_discriminator_forward.8} parent=0 // loop_body
    %s15 = ssub.s32 %s10, 1
    %s16 = ssub.s32 %s10, 2
    %s23 = sadd.s32 1, %s18
    %p24 = scmp.ge.s32.totalorder %s23, 1
    %s25 = scalar_select %p24, 0, %s23
    %s26 = sadd.s32 1, %s17
    %s27 = scalar_select %p24, %s26, %s17
    %p28 = scmp.ge.s32.totalorder %s27, 2
    %s29 = scalar_select %p28, 0, %s27
    %s31 = sadd.s32 %s30, 1
    %p34 = scmp.eq.s32.totalorder %s10, 1
    %p35 = scmp.ne.s32.totalorder %s30, %s32
    %p36 = scmp.eq.s32.totalorder %s10, 0
    %p37 = por %p35, %p36
    %p38 = scmp.ne.s32.totalorder %s30, %s32
    %p39 = scmp.eq.s32.totalorder %s15, 1
    %p40 = por %p38, %p39
    %p41 = scmp.ne.s32.totalorder %s32, %s33
    %p42 = scmp.eq.s32.totalorder %s15, 0
    %p43 = por %p41, %p42
    %p44 = scmp.ne.s32.totalorder %s32, %s33
    %p45 = scmp.eq.s32.totalorder %s16, 1
    %p46 = por %p44, %p45
    %p48 = scmp.ne.s32.totalorder %s33, %s47
    %p49 = scmp.eq.s32.totalorder %s16, 0
    %p50 = por %p48, %p49
    %s51 = ssub.s32 %s18, %s25
    %p52 = scmp.eq.s32.totalorder %s51, 0
    %s54 = sadd.s32 %s53, 1
    %s55 = scalar_select %p52, %s53, %s54
    %p58 = pneg %p52
    %p59 = scmp.eq.s32.totalorder %s10, 1
    %p60 = por %p58, %p59
    %p61 = scmp.ne.s32.totalorder %s53, %s56
    %p62 = scmp.eq.s32.totalorder %s10, 0
    %p63 = por %p61, %p62
    %p64 = scmp.ne.s32.totalorder %s53, %s56
    %p65 = scmp.eq.s32.totalorder %s15, 1
    %p66 = por %p64, %p65
    %p67 = scmp.ne.s32.totalorder %s56, %s57
    %p68 = scmp.eq.s32.totalorder %s15, 0
    %p69 = por %p67, %p68
    %p70 = scmp.ne.s32.totalorder %s56, %s57
    %p71 = scmp.eq.s32.totalorder %s16, 1
    %p72 = por %p70, %p71
    %p74 = scmp.ne.s32.totalorder %s57, %s73
    %p75 = scmp.eq.s32.totalorder %s16, 0
    %p76 = por %p74, %p75
    %s78 = sadd.s32 %s77, 1
    %p81 = scmp.eq.s32.totalorder %s10, 1
    %p82 = scmp.ne.s32.totalorder %s77, %s79
    %p83 = scmp.eq.s32.totalorder %s10, 0
    %p84 = por %p82, %p83
    %p85 = scmp.ne.s32.totalorder %s77, %s79
    %p86 = scmp.eq.s32.totalorder %s15, 1
    %p87 = por %p85, %p86
    %p88 = scmp.ne.s32.totalorder %s79, %s80
    %p89 = scmp.eq.s32.totalorder %s15, 0
    %p90 = por %p88, %p89
    %p91 = scmp.ne.s32.totalorder %s79, %s80
    %p92 = scmp.eq.s32.totalorder %s16, 1
    %p93 = por %p91, %p92
    %p95 = scmp.ne.s32.totalorder %s80, %s94
    %p96 = scmp.eq.s32.totalorder %s16, 0
    %p97 = por %p95, %p96
    %s99 = sadd.s32 %s98, 1
    %p102 = scmp.eq.s32.totalorder %s10, 1
    %p103 = scmp.ne.s32.totalorder %s98, %s100
    %p104 = scmp.eq.s32.totalorder %s10, 0
    %p105 = por %p103, %p104
    %p106 = scmp.ne.s32.totalorder %s98, %s100
    %p107 = scmp.eq.s32.totalorder %s15, 1
    %p108 = por %p106, %p107
    %p109 = scmp.ne.s32.totalorder %s100, %s101
    %p110 = scmp.eq.s32.totalorder %s15, 0
    %p111 = por %p109, %p110
    %p112 = scmp.ne.s32.totalorder %s100, %s101
    %p113 = scmp.eq.s32.totalorder %s16, 1
    %p114 = por %p112, %p113
    %p116 = scmp.ne.s32.totalorder %s101, %s115
    %p117 = scmp.eq.s32.totalorder %s16, 0
    %p118 = por %p116, %p117
    %s119 = smul.u32 %s18, %s17
    %s120 = smul.u32 %s25, %s29
    %s121 = ssub.s32 %s119, %s120
    %p122 = scmp.eq.s32.totalorder %s121, 0
    %s124 = sadd.s32 %s123, 1
    %s125 = scalar_select %p122, %s123, %s124
    %p128 = pneg %p122
    %p129 = scmp.eq.s32.totalorder %s10, 1
    %p130 = por %p128, %p129
    %p131 = scmp.ne.s32.totalorder %s123, %s126
    %p132 = scmp.eq.s32.totalorder %s10, 0
    %p133 = por %p131, %p132
    %p134 = scmp.ne.s32.totalorder %s123, %s126
    %p135 = scmp.eq.s32.totalorder %s15, 1
    %p136 = por %p134, %p135
    %p137 = scmp.ne.s32.totalorder %s126, %s127
    %p138 = scmp.eq.s32.totalorder %s15, 0
    %p139 = por %p137, %p138
    %p140 = scmp.ne.s32.totalorder %s126, %s127
    %p141 = scmp.eq.s32.totalorder %s16, 1
    %p142 = por %p140, %p141
    %p144 = scmp.ne.s32.totalorder %s127, %s143
    %p145 = scmp.eq.s32.totalorder %s16, 0
    %p146 = por %p144, %p145
    %p147 = scmp.le.s32.totalorder 1, %s10
    %p148 = scmp.lt.s32.totalorder %s10, 3
    %p149 = pnand %p147, %p148
    %p150 = pneg %p149
    // Predicated region
    $region9: #{official_discriminator_forward.8} parent=5 // pred_check
      _
    $region10: #{official_discriminator_forward.8} parent=5 // pred_check_branch
      %152 = sbr.rel (%p149) target = $region12
    $region11: #{official_discriminator_forward.8} parent=5 // pred_region
      %s153 = ssub.s32 %s10, 1
      // Predicated region
      $region13: #{official_discriminator_forward.8} parent=11 // pred_check
        %p154 = pneg %p43
      $region14: #{official_discriminator_forward.8} parent=11 // pred_check_branch
        %156 = sbr.rel (%p154) target = $region16
      $region15: #{official_discriminator_forward.8} parent=11 // pred_region
        _
      $region16: #{official_discriminator_forward.8} parent=11 // pred_fallthru
        _
      // Predicated region
      $region17: #{official_discriminator_forward.8} parent=11 // pred_check
        %p157 = pneg %p69
      $region18: #{official_discriminator_forward.8} parent=11 // pred_check_branch
        %159 = sbr.rel (%p157) target = $region20
      $region19: #{official_discriminator_forward.8} parent=11 // pred_region
        %p160 = scmp.lt.s32.totalorder %s20, 0
        %s161 = scalar_select %p160, %s20, 0
        %s162 = smul.addr %s161, 4
        %s163 = scalar_lea.vmem %s1, %s162
      $region20: #{official_discriminator_forward.8} parent=11 // pred_fallthru
        _
      // Predicated region
      $region21: #{official_discriminator_forward.8} parent=11 // pred_check
        %p164 = pneg %p90
      $region22: #{official_discriminator_forward.8} parent=11 // pred_check_branch
        %166 = sbr.rel (%p164) target = $region24
      $region23: #{official_discriminator_forward.8} parent=11 // pred_region
        _
      $region24: #{official_discriminator_forward.8} parent=11 // pred_fallthru
        _
      // Predicated region
      $region25: #{official_discriminator_forward.8} parent=11 // pred_check
        %p167 = pneg %p111
      $region26: #{official_discriminator_forward.8} parent=11 // pred_check_branch
        %169 = sbr.rel (%p167) target = $region28
      $region27: #{official_discriminator_forward.8} parent=11 // pred_region
        _
      $region28: #{official_discriminator_forward.8} parent=11 // pred_fallthru
        _
    $region12: #{official_discriminator_forward.8} parent=5 // pred_fallthru
      _
    %p170 = scmp.lt.s32.totalorder %s10, 2
    // Predicated region
    $region29: #{official_discriminator_forward.8} parent=5 // pred_check
      %p171 = pneg %p170
    $region30: #{official_discriminator_forward.8} parent=5 // pred_check_branch
      %173 = sbr.rel (%p171) target = $region32
    $region31: #{official_discriminator_forward.8} parent=5 // pred_region
      _
    $region32: #{official_discriminator_forward.8} parent=5 // pred_fallthru
      _
    %p174 = scmp.le.s32.totalorder 1, %s10
    %p175 = scmp.lt.s32.totalorder %s10, 3
    %p176 = pnand %p174, %p175
    %p177 = pneg %p176
    // Predicated region
    $region33: #{official_discriminator_forward.8} parent=5 // pred_check
      _
    $region34: #{official_discriminator_forward.8} parent=5 // pred_check_branch
      %179 = sbr.rel (%p176) target = $region36
    $region35: #{official_discriminator_forward.8} parent=5 // pred_region
      %s180 = ssub.s32 %s10, 1
      %p181 = pneg %p43
      %p182 = pneg %p40
      %p183 = scmp.lt.s32.totalorder %s20, 0
      %s184 = scalar_select %p183, %s20, 0
      %s185 = smul.addr %s184, 4
      %s186 = scalar_lea.vmem %s1, %s185
      %p187 = pneg %p69
      %p188 = pneg %p66
      %p189 = pneg %p90
      %p190 = pneg %p87
      %p191 = pneg %p111
      %p192 = pneg %p108
      %p193 = pneg %p139
      %p194 = pneg %p136
      %s195 = smul.u32 %s20, %s19
      %p196 = scmp.lt.s32.totalorder %s195, 0
      %s197 = scalar_select %p196, %s195, 0
      %s198 = smul.addr %s197, 4
      %s199 = scalar_lea.vmem %s4, %s198
      %p200 = scmp.lt.s32.totalorder %s20, 0
      %s201 = scalar_select %p200, %s20, 0
      %s202 = smul.addr %s201, 4
      %s203 = scalar_lea.vmem %s1, %s202
      %s204 = smul.u32 %s20, %s19
      %p205 = scmp.lt.s32.totalorder %s204, 0
      %s206 = scalar_select %p205, %s204, 0
      %s207 = smul.addr %s206, 4
      %s208 = scalar_lea.vmem %s4, %s207
      %s209 = smul.u32 %s20, %s19
      %v211 = vld [vmem:[%s0] sm:$0xff]
      %v212 = vld [vmem:[%s0 + $0x8] sm:$0xff]
      %v213 = vld [vmem:[%s0 + $0x10] sm:$0xff]
      %v214 = vld [vmem:[%s0 + $0x18] sm:$0xff]
      %v215 = vld [vmem:[%s0 + $0x20] sm:$0xff]
      %v216 = vld [vmem:[%s0 + $0x28] sm:$0xff]
      %v217 = vld [vmem:[%s0 + $0x30] sm:$0xff]
      %v218 = vld [vmem:[%s0 + $0x38] sm:$0xff]
      %v219 = vld [vmem:[%s0 + $0x40] sm:$0xff]
      %v220 = vld [vmem:[%s0 + $0x48] sm:$0xff]
      %v221 = vld [vmem:[%s0 + $0x50] sm:$0xff]
      %v222 = vld [vmem:[%s0 + $0x58] sm:$0xff]
      %v223 = vld [vmem:[%s0 + $0x60] sm:$0xff]
      %v224 = vld [vmem:[%s0 + $0x68] sm:$0xff]
      %v225 = vld [vmem:[%s0 + $0x70] sm:$0xff]
      %v226 = vld [vmem:[%s0 + $0x78] sm:$0xff]
      %v227 = vld [vmem:[%s203] sm:$0xf]
      %v228 = vld [vmem:[%s203 + $0x4] sm:$0xf]
      %v229 = vld [vmem:[%s203 + $0x8] sm:$0xf]
      %v230 = vld [vmem:[%s203 + $0xc] sm:$0xf]
      %v231 = vld [vmem:[%s203 + $0x10] sm:$0xf]
      %v232 = vld [vmem:[%s203 + $0x14] sm:$0xf]
      %v233 = vld [vmem:[%s203 + $0x18] sm:$0xf]
      %v234 = vld [vmem:[%s203 + $0x1c] sm:$0xf]
      %v235 = vld [vmem:[%s203 + $0x20] sm:$0xf]
      %v236 = vld [vmem:[%s203 + $0x24] sm:$0xf]
      %v237 = vld [vmem:[%s203 + $0x28] sm:$0xf]
      %v238 = vld [vmem:[%s203 + $0x2c] sm:$0xf]
      %v239 = vld [vmem:[%s203 + $0x30] sm:$0xf]
      %v240 = vld [vmem:[%s203 + $0x34] sm:$0xf]
      %v241 = vld [vmem:[%s203 + $0x38] sm:$0xf]
      %v242 = vld [vmem:[%s203 + $0x3c] sm:$0xf]
      %v243 = vld [vmem:[%s203 + $0x40] sm:$0xf]
      %v244 = vld [vmem:[%s203 + $0x44] sm:$0xf]
      %v245 = vld [vmem:[%s203 + $0x48] sm:$0xf]
      %v246 = vld [vmem:[%s203 + $0x4c] sm:$0xf]
      %v247 = vld [vmem:[%s203 + $0x50] sm:$0xf]
      %v248 = vld [vmem:[%s203 + $0x54] sm:$0xf]
      %v249 = vld [vmem:[%s203 + $0x58] sm:$0xf]
      %v250 = vld [vmem:[%s203 + $0x5c] sm:$0xf]
      %v251 = vld [vmem:[%s203 + $0x60] sm:$0xf]
      %v252 = vld [vmem:[%s203 + $0x64] sm:$0xf]
      %v253 = vld [vmem:[%s203 + $0x68] sm:$0xf]
      %v254 = vld [vmem:[%s203 + $0x6c] sm:$0xf]
      %v255 = vld [vmem:[%s203 + $0x70] sm:$0xf]
      %v256 = vld [vmem:[%s203 + $0x74] sm:$0xf]
      %v257 = vld [vmem:[%s203 + $0x78] sm:$0xf]
      %v258 = vld [vmem:[%s203 + $0x7c] sm:$0xf]
      %v259 = vld [vmem:[%s203 + $0x80] sm:$0xf]
      %v260 = vld [vmem:[%s203 + $0x84] sm:$0xf]
      %v261 = vld [vmem:[%s203 + $0x88] sm:$0xf]
      %v262 = vld [vmem:[%s203 + $0x8c] sm:$0xf]
      %v263 = vld [vmem:[%s203 + $0x90] sm:$0xf]
      %v264 = vld [vmem:[%s203 + $0x94] sm:$0xf]
      %v265 = vld [vmem:[%s203 + $0x98] sm:$0xf]
      %v266 = vld [vmem:[%s203 + $0x9c] sm:$0xf]
      %v267 = vld [vmem:[%s203 + $0xa0] sm:$0xf]
      %v268 = vld [vmem:[%s203 + $0xa4] sm:$0xf]
      %v269 = vld [vmem:[%s203 + $0xa8] sm:$0xf]
      %v270 = vld [vmem:[%s203 + $0xac] sm:$0xf]
      %v271 = vld [vmem:[%s203 + $0xb0] sm:$0xf]
      %v272 = vld [vmem:[%s203 + $0xb4] sm:$0xf]
      %v273 = vld [vmem:[%s203 + $0xb8] sm:$0xf]
      %v274 = vld [vmem:[%s203 + $0xbc] sm:$0xf]
      %v275 = vld [vmem:[%s203 + $0xc0] sm:$0xf]
      %v276 = vld [vmem:[%s203 + $0xc4] sm:$0xf]
      %v277 = vld [vmem:[%s203 + $0xc8] sm:$0xf]
      %v278 = vld [vmem:[%s203 + $0xcc] sm:$0xf]
      %v279 = vld [vmem:[%s203 + $0xd0] sm:$0xf]
      %v280 = vld [vmem:[%s203 + $0xd4] sm:$0xf]
      %v281 = vld [vmem:[%s203 + $0xd8] sm:$0xf]
      %v282 = vld [vmem:[%s203 + $0xdc] sm:$0xf]
      %v283 = vld [vmem:[%s203 + $0xe0] sm:$0xf]
      %v284 = vld [vmem:[%s203 + $0xe4] sm:$0xf]
      %v285 = vld [vmem:[%s203 + $0xe8] sm:$0xf]
      %v286 = vld [vmem:[%s203 + $0xec] sm:$0xf]
      %v287 = vld [vmem:[%s203 + $0xf0] sm:$0xf]
      %v288 = vld [vmem:[%s203 + $0xf4] sm:$0xf]
      %v289 = vld [vmem:[%s203 + $0xf8] sm:$0xf]
      %v290 = vld [vmem:[%s203 + $0xfc] sm:$0xf]
      %v307 = vunpack.c.l.b16 %v211
      %v308 = vunpack.c.h.b16 %v211
      %v309 = vunpack.c.l.b16 %v212
      %v310 = vunpack.c.h.b16 %v212
      %v311 = vunpack.c.l.b16 %v213
      %v312 = vunpack.c.h.b16 %v213
      %v313 = vunpack.c.l.b16 %v214
      %v314 = vunpack.c.h.b16 %v214
      %v315 = vunpack.c.l.b16 %v215
      %v316 = vunpack.c.h.b16 %v215
      %v317 = vunpack.c.l.b16 %v216
      %v318 = vunpack.c.h.b16 %v216
      %v319 = vunpack.c.l.b16 %v217
      %v320 = vunpack.c.h.b16 %v217
      %v321 = vunpack.c.l.b16 %v218
      %v322 = vunpack.c.h.b16 %v218
      %v323 = vunpack.c.l.b16 %v219
      %v324 = vunpack.c.h.b16 %v219
      %v325 = vunpack.c.l.b16 %v220
      %v326 = vunpack.c.h.b16 %v220
      %v327 = vunpack.c.l.b16 %v221
      %v328 = vunpack.c.h.b16 %v221
      %v329 = vunpack.c.l.b16 %v222
      %v330 = vunpack.c.h.b16 %v222
      %v331 = vunpack.c.l.b16 %v223
      %v332 = vunpack.c.h.b16 %v223
      %v333 = vunpack.c.l.b16 %v224
      %v334 = vunpack.c.h.b16 %v224
      %v335 = vunpack.c.l.b16 %v225
      %v336 = vunpack.c.h.b16 %v225
      %v337 = vunpack.c.l.b16 %v226
      %v338 = vunpack.c.h.b16 %v226
      %v339 = vpack.c.b16 %v311, %v307
      %v340 = vpack.c.b16 %v312, %v308
      %v341 = vpack.c.b16 %v313, %v309
      %v342 = vpack.c.b16 %v314, %v310
      %v343 = vpack.c.b16 %v319, %v315
      %v344 = vpack.c.b16 %v320, %v316
      %v345 = vpack.c.b16 %v321, %v317
      %v346 = vpack.c.b16 %v322, %v318
      %v347 = vpack.c.b16 %v327, %v323
      %v348 = vpack.c.b16 %v328, %v324
      %v349 = vpack.c.b16 %v329, %v325
      %v350 = vpack.c.b16 %v330, %v326
      %v351 = vpack.c.b16 %v335, %v331
      %v352 = vpack.c.b16 %v336, %v332
      %v353 = vpack.c.b16 %v337, %v333
      %v354 = vpack.c.b16 %v338, %v334
      %v435 = vunpack.c.l.b16 %v227
      %v436 = vunpack.c.l.b16 %v228
      %v437 = vunpack.c.l.b16 %v229
      %v438 = vunpack.c.l.b16 %v230
      %v439 = vunpack.c.l.b16 %v231
      %v440 = vunpack.c.l.b16 %v232
      %v441 = vunpack.c.l.b16 %v233
      %v442 = vunpack.c.l.b16 %v234
      %v443 = vunpack.c.l.b16 %v235
      %v444 = vunpack.c.l.b16 %v236
      %v445 = vunpack.c.l.b16 %v237
      %v446 = vunpack.c.l.b16 %v238
      %v447 = vunpack.c.l.b16 %v239
      %v448 = vunpack.c.l.b16 %v240
      %v449 = vunpack.c.l.b16 %v241
      %v450 = vunpack.c.l.b16 %v242
      %v451 = vunpack.c.l.b16 %v243
      %v452 = vunpack.c.l.b16 %v244
      %v453 = vunpack.c.l.b16 %v245
      %v454 = vunpack.c.l.b16 %v246
      %v455 = vunpack.c.l.b16 %v247
      %v456 = vunpack.c.l.b16 %v248
      %v457 = vunpack.c.l.b16 %v249
      %v458 = vunpack.c.l.b16 %v250
      %v459 = vunpack.c.l.b16 %v251
      %v460 = vunpack.c.l.b16 %v252
      %v461 = vunpack.c.l.b16 %v253
      %v462 = vunpack.c.l.b16 %v254
      %v463 = vunpack.c.l.b16 %v255
      %v464 = vunpack.c.l.b16 %v256
      %v465 = vunpack.c.l.b16 %v257
      %v466 = vunpack.c.l.b16 %v258
      %v467 = vunpack.c.l.b16 %v259
      %v468 = vunpack.c.l.b16 %v260
      %v469 = vunpack.c.l.b16 %v261
      %v470 = vunpack.c.l.b16 %v262
      %v471 = vunpack.c.l.b16 %v263
      %v472 = vunpack.c.l.b16 %v264
      %v473 = vunpack.c.l.b16 %v265
      %v474 = vunpack.c.l.b16 %v266
      %v475 = vunpack.c.l.b16 %v267
      %v476 = vunpack.c.l.b16 %v268
      %v477 = vunpack.c.l.b16 %v269
      %v478 = vunpack.c.l.b16 %v270
      %v479 = vunpack.c.l.b16 %v271
      %v480 = vunpack.c.l.b16 %v272
      %v481 = vunpack.c.l.b16 %v273
      %v482 = vunpack.c.l.b16 %v274
      %v483 = vunpack.c.l.b16 %v275
      %v484 = vunpack.c.l.b16 %v276
      %v485 = vunpack.c.l.b16 %v277
      %v486 = vunpack.c.l.b16 %v278
      %v487 = vunpack.c.l.b16 %v279
      %v488 = vunpack.c.l.b16 %v280
      %v489 = vunpack.c.l.b16 %v281
      %v490 = vunpack.c.l.b16 %v282
      %v491 = vunpack.c.l.b16 %v283
      %v492 = vunpack.c.l.b16 %v284
      %v493 = vunpack.c.l.b16 %v285
      %v494 = vunpack.c.l.b16 %v286
      %v495 = vunpack.c.l.b16 %v287
      %v496 = vunpack.c.l.b16 %v288
      %v497 = vunpack.c.l.b16 %v289
      %v498 = vunpack.c.l.b16 %v290
      %v499 = vpack.c.b16 %v436, %v435
      %v500 = vpack.c.b16 %v438, %v437
      %v501 = vpack.c.b16 %v440, %v439
      %v502 = vpack.c.b16 %v442, %v441
      %v503 = vpack.c.b16 %v444, %v443
      %v504 = vpack.c.b16 %v446, %v445
      %v505 = vpack.c.b16 %v448, %v447
      %v506 = vpack.c.b16 %v450, %v449
      %v507 = vpack.c.b16 %v452, %v451
      %v508 = vpack.c.b16 %v454, %v453
      %v509 = vpack.c.b16 %v456, %v455
      %v510 = vpack.c.b16 %v458, %v457
      %v511 = vpack.c.b16 %v460, %v459
      %v512 = vpack.c.b16 %v462, %v461
      %v513 = vpack.c.b16 %v464, %v463
      %v514 = vpack.c.b16 %v466, %v465
      %v515 = vpack.c.b16 %v468, %v467
      %v516 = vpack.c.b16 %v470, %v469
      %v517 = vpack.c.b16 %v472, %v471
      %v518 = vpack.c.b16 %v474, %v473
      %v519 = vpack.c.b16 %v476, %v475
      %v520 = vpack.c.b16 %v478, %v477
      %v521 = vpack.c.b16 %v480, %v479
      %v522 = vpack.c.b16 %v482, %v481
      %v523 = vpack.c.b16 %v484, %v483
      %v524 = vpack.c.b16 %v486, %v485
      %v525 = vpack.c.b16 %v488, %v487
      %v526 = vpack.c.b16 %v490, %v489
      %v527 = vpack.c.b16 %v492, %v491
      %v528 = vpack.c.b16 %v494, %v493
      %v529 = vpack.c.b16 %v496, %v495
      %v530 = vpack.c.b16 %v498, %v497
      %563 = vmatprep.subr.bf16.mxu0 0
      %564 = vmatpush1.bf16.msra.mxu0 %v499
      %565 = vmatprep.subr.bf16.mxu0 0
      %566 = vmatpush1.bf16.msra.mxu0 %v500
      %567 = vmatprep.subr.bf16.mxu0 0
      %568 = vmatpush1.bf16.msra.mxu0 %v501
      %569 = vmatprep.subr.bf16.mxu0 0
      %570 = vmatpush1.bf16.msra.mxu0 %v502
      %571 = vmatprep.subr.bf16.mxu0 0
      %572 = vmatpush1.bf16.msra.mxu0 %v503
      %573 = vmatprep.subr.bf16.mxu0 0
      %574 = vmatpush1.bf16.msra.mxu0 %v504
      %575 = vmatprep.subr.bf16.mxu0 0
      %576 = vmatpush1.bf16.msra.mxu0 %v505
      %577 = vmatprep.subr.bf16.mxu0 0
      %578 = vmatpush1.bf16.msra.mxu0 %v506
      %579 = vmatprep.subr.bf16.mxu0 0
      %580 = vmatpush1.bf16.msra.mxu0 %v507
      %581 = vmatprep.subr.bf16.mxu0 0
      %582 = vmatpush1.bf16.msra.mxu0 %v508
      %583 = vmatprep.subr.bf16.mxu0 0
      %584 = vmatpush1.bf16.msra.mxu0 %v509
      %585 = vmatprep.subr.bf16.mxu0 0
      %586 = vmatpush1.bf16.msra.mxu0 %v510
      %587 = vmatprep.subr.bf16.mxu0 0
      %588 = vmatpush1.bf16.msra.mxu0 %v511
      %589 = vmatprep.subr.bf16.mxu0 0
      %590 = vmatpush1.bf16.msra.mxu0 %v512
      %591 = vmatprep.subr.bf16.mxu0 0
      %592 = vmatpush1.bf16.msra.mxu0 %v513
      %593 = vmatprep.subr.bf16.mxu0 0
      %594 = vmatpush1.bf16.msra.mxu0 %v514
      %595 = vmatprep.mubr.bf16.mxu0 %v340
      %596 = vmatmul.mubr.bf16.gmra.mrb[0].mxu0 %v339
      %v597 = vpop.f32.mrb[0].mxu0
      %v598 = vadd.f32 0.0, %v597
      %v599 = vpop.f32.mrb[0].mxu0
      %v600 = vpop.f32.mrb[0].mxu0
      %v601 = vadd.f32 0.0, %v600
      %v602 = vpop.f32.mrb[0].mxu0
      %603 = vmatprep.mubr.bf16.mxu0 %v344
      %604 = vmatmul.mubr.bf16.gmra.mrb[0].mxu0 %v343
      %v605 = vpop.f32.mrb[0].mxu0
      %v606 = vadd.f32 0.0, %v605
      %v607 = vpop.f32.mrb[0].mxu0
      %v608 = vpop.f32.mrb[0].mxu0
      %v609 = vadd.f32 0.0, %v608
      %v610 = vpop.f32.mrb[0].mxu0
      %611 = vmatprep.mubr.bf16.mxu0 %v348
      %612 = vmatmul.mubr.bf16.gmra.mrb[0].mxu0 %v347
      %v613 = vpop.f32.mrb[0].mxu0
      %v614 = vadd.f32 0.0, %v613
      %v615 = vpop.f32.mrb[0].mxu0
      %v616 = vpop.f32.mrb[0].mxu0
      %v617 = vadd.f32 0.0, %v616
      %v618 = vpop.f32.mrb[0].mxu0
      %619 = vmatprep.mubr.bf16.mxu0 %v352
      %620 = vmatmul.mubr.bf16.gmra.mrb[0].mxu0 %v351
      %v621 = vpop.f32.mrb[0].mxu0
      %v622 = vadd.f32 0.0, %v621
      %v623 = vpop.f32.mrb[0].mxu0
      %v624 = vpop.f32.mrb[0].mxu0
      %v625 = vadd.f32 0.0, %v624
      %v626 = vpop.f32.mrb[0].mxu0
      %627 = vdwg.mxu0
      %628 = vmatprep.subr.bf16.mxu0 0
      %629 = vmatpush1.bf16.msra.mxu0 %v515
      %630 = vmatprep.subr.bf16.mxu0 0
      %631 = vmatpush1.bf16.msra.mxu0 %v516
      %632 = vmatprep.subr.bf16.mxu0 0
      %633 = vmatpush1.bf16.msra.mxu0 %v517
      %634 = vmatprep.subr.bf16.mxu0 0
      %635 = vmatpush1.bf16.msra.mxu0 %v518
      %636 = vmatprep.subr.bf16.mxu0 0
      %637 = vmatpush1.bf16.msra.mxu0 %v519
      %638 = vmatprep.subr.bf16.mxu0 0
      %639 = vmatpush1.bf16.msra.mxu0 %v520
      %640 = vmatprep.subr.bf16.mxu0 0
      %641 = vmatpush1.bf16.msra.mxu0 %v521
      %642 = vmatprep.subr.bf16.mxu0 0
      %643 = vmatpush1.bf16.msra.mxu0 %v522
      %644 = vmatprep.subr.bf16.mxu0 0
      %645 = vmatpush1.bf16.msra.mxu0 %v523
      %646 = vmatprep.subr.bf16.mxu0 0
      %647 = vmatpush1.bf16.msra.mxu0 %v524
      %648 = vmatprep.subr.bf16.mxu0 0
      %649 = vmatpush1.bf16.msra.mxu0 %v525
      %650 = vmatprep.subr.bf16.mxu0 0
      %651 = vmatpush1.bf16.msra.mxu0 %v526
      %652 = vmatprep.subr.bf16.mxu0 0
      %653 = vmatpush1.bf16.msra.mxu0 %v527
      %654 = vmatprep.subr.bf16.mxu0 0
      %655 = vmatpush1.bf16.msra.mxu0 %v528
      %656 = vmatprep.subr.bf16.mxu0 0
      %657 = vmatpush1.bf16.msra.mxu0 %v529
      %658 = vmatprep.subr.bf16.mxu0 0
      %659 = vmatpush1.bf16.msra.mxu0 %v530
      %660 = vmatprep.mubr.bf16.mxu0 %v342
      %661 = vmatmul.mubr.bf16.gmra.mrb[0].mxu0 %v341
      %v662 = vpop.f32.mrb[0].mxu0
      %v663 = vadd.f32 %v598, %v662
      %v664 = vpop.f32.mrb[0].mxu0
      %v665 = vpop.f32.mrb[0].mxu0
      %v666 = vadd.f32 %v601, %v665
      %v667 = vpop.f32.mrb[0].mxu0
      %668 = vmatprep.mubr.bf16.mxu0 %v346
      %669 = vmatmul.mubr.bf16.gmra.mrb[0].mxu0 %v345
      %v670 = vpop.f32.mrb[0].mxu0
      %v671 = vadd.f32 %v606, %v670
      %v672 = vpop.f32.mrb[0].mxu0
      %v673 = vpop.f32.mrb[0].mxu0
      %v674 = vadd.f32 %v609, %v673
      %v675 = vpop.f32.mrb[0].mxu0
      %676 = vmatprep.mubr.bf16.mxu0 %v350
      %677 = vmatmul.mubr.bf16.gmra.mrb[0].mxu0 %v349
      %v678 = vpop.f32.mrb[0].mxu0
      %v679 = vadd.f32 %v614, %v678
      %v680 = vpop.f32.mrb[0].mxu0
      %v681 = vpop.f32.mrb[0].mxu0
      %v682 = vadd.f32 %v617, %v681
      %v683 = vpop.f32.mrb[0].mxu0
      %684 = vmatprep.mubr.bf16.mxu0 %v354
      %685 = vmatmul.mubr.bf16.gmra.mrb[0].mxu0 %v353
      %v686 = vpop.f32.mrb[0].mxu0
      %v687 = vadd.f32 %v622, %v686
      %v688 = vpop.f32.mrb[0].mxu0
      %v689 = vpop.f32.mrb[0].mxu0
      %v690 = vadd.f32 %v625, %v689
      %v691 = vpop.f32.mrb[0].mxu0
      %692 = vdwg.mxu0
      %p693 = scmp.eq.s32.totalorder %s19, 0
      // Predicated region
      $region37: #{official_discriminator_forward.8} parent=35 // pred_check
        %p694 = pneg %p693
      $region38: #{official_discriminator_forward.8} parent=35 // pred_check_branch
        %696 = sbr.rel (%p694) target = $region40
      $region39: #{official_discriminator_forward.8} parent=35 // pred_region
        %p697 = scmp.eq.s32.totalorder %s20, 0
        // Predicated region
        $region41: #{official_discriminator_forward.8} parent=39 // pred_check
          %p698 = pneg %p697
        $region42: #{official_discriminator_forward.8} parent=39 // pred_check_branch
          %700 = sbr.rel (%p698) target = $region44
        $region43: #{official_discriminator_forward.8} parent=39 // pred_region
          %vm701 = vcmask 7168
          %702 = vst.msk [vmem:[#allocation2] sm:$0xff] %vm701, 0.0
          %703 = vst.msk [vmem:[#allocation2 + $0x8] sm:$0xff] %vm701, 0.0
          %704 = vst.msk [vmem:[#allocation2 + $0x10] sm:$0xff] %vm701, 0.0
          %705 = vst.msk [vmem:[#allocation2 + $0x18] sm:$0xff] %vm701, 0.0
          %706 = vst.msk [vmem:[#allocation2 + $0x20] sm:$0xff] %vm701, 0.0
          %707 = vst.msk [vmem:[#allocation2 + $0x28] sm:$0xff] %vm701, 0.0
          %708 = vst.msk [vmem:[#allocation2 + $0x30] sm:$0xff] %vm701, 0.0
          %709 = vst.msk [vmem:[#allocation2 + $0x38] sm:$0xff] %vm701, 0.0
          %710 = vst.msk [vmem:[#allocation3] sm:$0xff] %vm701, 0.0
          %711 = vst.msk [vmem:[#allocation3 + $0x8] sm:$0xff] %vm701, 0.0
          %712 = vst.msk [vmem:[#allocation3 + $0x10] sm:$0xff] %vm701, 0.0
          %713 = vst.msk [vmem:[#allocation3 + $0x18] sm:$0xff] %vm701, 0.0
          %714 = vst.msk [vmem:[#allocation3 + $0x20] sm:$0xff] %vm701, 0.0
          %715 = vst.msk [vmem:[#allocation3 + $0x28] sm:$0xff] %vm701, 0.0
          %716 = vst.msk [vmem:[#allocation3 + $0x30] sm:$0xff] %vm701, 0.0
          %717 = vst.msk [vmem:[#allocation3 + $0x38] sm:$0xff] %vm701, 0.0
          %vm718 = vcmask 257024
          %719 = vst.msk [vmem:[%s208] sm:$0xf] %vm718, 0
          %720 = vst.msk [vmem:[%s208 + $0x4] sm:$0xf] %vm718, 0
          %721 = vst.msk [vmem:[%s208 + $0x8] sm:$0xf] %vm718, 0
          %722 = vst.msk [vmem:[%s208 + $0xc] sm:$0xf] %vm718, 0
          %723 = vst.msk [vmem:[%s208 + $0x10] sm:$0xf] %vm718, 0
          %724 = vst.msk [vmem:[%s208 + $0x14] sm:$0xf] %vm718, 0
          %725 = vst.msk [vmem:[%s208 + $0x18] sm:$0xf] %vm718, 0
          %726 = vst.msk [vmem:[%s208 + $0x1c] sm:$0xf] %vm718, 0
        $region44: #{official_discriminator_forward.8} parent=39 // pred_fallthru
          _
        %v727 = vld [vmem:[#allocation2] sm:$0xff]
        %v728 = vld [vmem:[#allocation2 + $0x8] sm:$0xff]
        %v729 = vld [vmem:[#allocation2 + $0x10] sm:$0xff]
        %v730 = vld [vmem:[#allocation2 + $0x18] sm:$0xff]
        %v731 = vld [vmem:[#allocation2 + $0x20] sm:$0xff]
        %v732 = vld [vmem:[#allocation2 + $0x28] sm:$0xff]
        %v733 = vld [vmem:[#allocation2 + $0x30] sm:$0xff]
        %v734 = vld [vmem:[#allocation2 + $0x38] sm:$0xff]
        %vm735 = vcmask 261120
        %v736 = vsel %vm735, %v663, 0.0
        %737 = vadd.xlane.f32.xlu0 %v736
        %v738 = vpop.xlane.xlu0 %737
        %v739 = vsel %vm735, %v666, 0.0
        %740 = vadd.xlane.f32.xlu0 %v739
        %v741 = vpop.xlane.xlu0 %740
        %v742 = vsel %vm735, %v671, 0.0
        %743 = vadd.xlane.f32.xlu0 %v742
        %v744 = vpop.xlane.xlu0 %743
        %v745 = vsel %vm735, %v674, 0.0
        %746 = vadd.xlane.f32.xlu0 %v745
        %v747 = vpop.xlane.xlu0 %746
        %v748 = vsel %vm735, %v679, 0.0
        %749 = vadd.xlane.f32.xlu0 %v748
        %v750 = vpop.xlane.xlu0 %749
        %v751 = vsel %vm735, %v682, 0.0
        %752 = vadd.xlane.f32.xlu0 %v751
        %v753 = vpop.xlane.xlu0 %752
        %v754 = vsel %vm735, %v687, 0.0
        %755 = vadd.xlane.f32.xlu0 %v754
        %v756 = vpop.xlane.xlu0 %755
        %v757 = vsel %vm735, %v690, 0.0
        %758 = vadd.xlane.f32.xlu0 %v757
        %v759 = vpop.xlane.xlu0 %758
        %v760 = vadd.f32 %v727, %v738
        %v761 = vadd.f32 %v728, %v741
        %v762 = vadd.f32 %v729, %v744
        %v763 = vadd.f32 %v730, %v747
        %v764 = vadd.f32 %v731, %v750
        %v765 = vadd.f32 %v732, %v753
        %v766 = vadd.f32 %v733, %v756
        %v767 = vadd.f32 %v734, %v759
        %vm768 = vcmask 7168
        %769 = vst.msk [vmem:[#allocation2] sm:$0xff] %vm768, %v760
        %770 = vst.msk [vmem:[#allocation2 + $0x8] sm:$0xff] %vm768, %v761
        %771 = vst.msk [vmem:[#allocation2 + $0x10] sm:$0xff] %vm768, %v762
        %772 = vst.msk [vmem:[#allocation2 + $0x18] sm:$0xff] %vm768, %v763
        %773 = vst.msk [vmem:[#allocation2 + $0x20] sm:$0xff] %vm768, %v764
        %774 = vst.msk [vmem:[#allocation2 + $0x28] sm:$0xff] %vm768, %v765
        %775 = vst.msk [vmem:[#allocation2 + $0x30] sm:$0xff] %vm768, %v766
        %776 = vst.msk [vmem:[#allocation2 + $0x38] sm:$0xff] %vm768, %v767
        %v777 = vld [vmem:[#allocation3] sm:$0xff]
        %v778 = vld [vmem:[#allocation3 + $0x8] sm:$0xff]
        %v779 = vld [vmem:[#allocation3 + $0x10] sm:$0xff]
        %v780 = vld [vmem:[#allocation3 + $0x18] sm:$0xff]
        %v781 = vld [vmem:[#allocation3 + $0x20] sm:$0xff]
        %v782 = vld [vmem:[#allocation3 + $0x28] sm:$0xff]
        %v783 = vld [vmem:[#allocation3 + $0x30] sm:$0xff]
        %v784 = vld [vmem:[#allocation3 + $0x38] sm:$0xff]
        %v785 = vmul.f32 %v663, %v663
        %v786 = vmul.f32 %v666, %v666
        %v787 = vmul.f32 %v671, %v671
        %v788 = vmul.f32 %v674, %v674
        %v789 = vmul.f32 %v679, %v679
        %v790 = vmul.f32 %v682, %v682
        %v791 = vmul.f32 %v687, %v687
        %v792 = vmul.f32 %v690, %v690
        %v793 = vsel %vm735, %v785, 0.0
        %794 = vadd.xlane.f32.xlu0 %v793
        %v795 = vpop.xlane.xlu0 %794
        %v796 = vsel %vm735, %v786, 0.0
        %797 = vadd.xlane.f32.xlu0 %v796
        %v798 = vpop.xlane.xlu0 %797
        %v799 = vsel %vm735, %v787, 0.0
        %800 = vadd.xlane.f32.xlu0 %v799
        %v801 = vpop.xlane.xlu0 %800
        %v802 = vsel %vm735, %v788, 0.0
        %803 = vadd.xlane.f32.xlu0 %v802
        %v804 = vpop.xlane.xlu0 %803
        %v805 = vsel %vm735, %v789, 0.0
        %806 = vadd.xlane.f32.xlu0 %v805
        %v807 = vpop.xlane.xlu0 %806
        %v808 = vsel %vm735, %v790, 0.0
        %809 = vadd.xlane.f32.xlu0 %v808
        %v810 = vpop.xlane.xlu0 %809
        %v811 = vsel %vm735, %v791, 0.0
        %812 = vadd.xlane.f32.xlu0 %v811
        %v813 = vpop.xlane.xlu0 %812
        %v814 = vsel %vm735, %v792, 0.0
        %815 = vadd.xlane.f32.xlu0 %v814
        %v816 = vpop.xlane.xlu0 %815
        %v817 = vadd.f32 %v777, %v795
        %v818 = vadd.f32 %v778, %v798
        %v819 = vadd.f32 %v779, %v801
        %v820 = vadd.f32 %v780, %v804
        %v821 = vadd.f32 %v781, %v807
        %v822 = vadd.f32 %v782, %v810
        %v823 = vadd.f32 %v783, %v813
        %v824 = vadd.f32 %v784, %v816
        %825 = vst.msk [vmem:[#allocation3] sm:$0xff] %vm768, %v817
        %826 = vst.msk [vmem:[#allocation3 + $0x8] sm:$0xff] %vm768, %v818
        %827 = vst.msk [vmem:[#allocation3 + $0x10] sm:$0xff] %vm768, %v819
        %828 = vst.msk [vmem:[#allocation3 + $0x18] sm:$0xff] %vm768, %v820
        %829 = vst.msk [vmem:[#allocation3 + $0x20] sm:$0xff] %vm768, %v821
        %830 = vst.msk [vmem:[#allocation3 + $0x28] sm:$0xff] %vm768, %v822
        %831 = vst.msk [vmem:[#allocation3 + $0x30] sm:$0xff] %vm768, %v823
        %832 = vst.msk [vmem:[#allocation3 + $0x38] sm:$0xff] %vm768, %v824
      $region40: #{official_discriminator_forward.8} parent=35 // pred_fallthru
        _
      %p833 = scmp.eq.s32.totalorder %s19, 1
      // Predicated region
      $region45: #{official_discriminator_forward.8} parent=35 // pred_check
        %p834 = pneg %p833
      $region46: #{official_discriminator_forward.8} parent=35 // pred_check_branch
        %836 = sbr.rel (%p834) target = $region48
      $region47: #{official_discriminator_forward.8} parent=35 // pred_region
        %p837 = scmp.eq.s32.totalorder %s20, 0
        // Predicated region
        $region49: #{official_discriminator_forward.8} parent=47 // pred_check
          %p838 = pneg %p837
        $region50: #{official_discriminator_forward.8} parent=47 // pred_check_branch
          %840 = sbr.rel (%p838) target = $region52
        $region51: #{official_discriminator_forward.8} parent=47 // pred_region
          %v841 = vld [vmem:[#allocation2] sm:$0xff]
          %v842 = vld [vmem:[#allocation2 + $0x8] sm:$0xff]
          %v843 = vld [vmem:[#allocation2 + $0x10] sm:$0xff]
          %v844 = vld [vmem:[#allocation2 + $0x18] sm:$0xff]
          %v845 = vld [vmem:[#allocation2 + $0x20] sm:$0xff]
          %v846 = vld [vmem:[#allocation2 + $0x28] sm:$0xff]
          %v847 = vld [vmem:[#allocation2 + $0x30] sm:$0xff]
          %v848 = vld [vmem:[#allocation2 + $0x38] sm:$0xff]
          %v849 = vmul.f32 %v841, 0.03125
          %v850 = vmul.f32 %v842, 0.03125
          %v851 = vmul.f32 %v843, 0.03125
          %v852 = vmul.f32 %v844, 0.03125
          %v853 = vmul.f32 %v845, 0.03125
          %v854 = vmul.f32 %v846, 0.03125
          %v855 = vmul.f32 %v847, 0.03125
          %v856 = vmul.f32 %v848, 0.03125
          %v857 = vld [vmem:[#allocation3] sm:$0xff]
          %v858 = vld [vmem:[#allocation3 + $0x8] sm:$0xff]
          %v859 = vld [vmem:[#allocation3 + $0x10] sm:$0xff]
          %v860 = vld [vmem:[#allocation3 + $0x18] sm:$0xff]
          %v861 = vld [vmem:[#allocation3 + $0x20] sm:$0xff]
          %v862 = vld [vmem:[#allocation3 + $0x28] sm:$0xff]
          %v863 = vld [vmem:[#allocation3 + $0x30] sm:$0xff]
          %v864 = vld [vmem:[#allocation3 + $0x38] sm:$0xff]
          %v865 = vmul.f32 %v857, 0.03125
          %v866 = vmul.f32 %v858, 0.03125
          %v867 = vmul.f32 %v859, 0.03125
          %v868 = vmul.f32 %v860, 0.03125
          %v869 = vmul.f32 %v861, 0.03125
          %v870 = vmul.f32 %v862, 0.03125
          %v871 = vmul.f32 %v863, 0.03125
          %v872 = vmul.f32 %v864, 0.03125
          %v873 = vmul.f32 %v849, %v849
          %v874 = vmul.f32 %v850, %v850
          %v875 = vmul.f32 %v851, %v851
          %v876 = vmul.f32 %v852, %v852
          %v877 = vmul.f32 %v853, %v853
          %v878 = vmul.f32 %v854, %v854
          %v879 = vmul.f32 %v855, %v855
          %v880 = vmul.f32 %v856, %v856
          %v881 = vsub.f32 %v865, %v873
          %v882 = vsub.f32 %v866, %v874
          %v883 = vsub.f32 %v867, %v875
          %v884 = vsub.f32 %v868, %v876
          %v885 = vsub.f32 %v869, %v877
          %v886 = vsub.f32 %v870, %v878
          %v887 = vsub.f32 %v871, %v879
          %v888 = vsub.f32 %v872, %v880
          %v889 = vmax.f32 %v881, 0.0
          %v890 = vmax.f32 %v882, 0.0
          %v891 = vmax.f32 %v883, 0.0
          %v892 = vmax.f32 %v884, 0.0
          %v893 = vmax.f32 %v885, 0.0
          %v894 = vmax.f32 %v886, 0.0
          %v895 = vmax.f32 %v887, 0.0
          %v896 = vmax.f32 %v888, 0.0
          %v897 = vld [vmem:[%s2] sm:$0xff]
          %v898 = vld [vmem:[%s2 + $0x8] sm:$0xff]
          %v899 = vld [vmem:[%s2 + $0x10] sm:$0xff]
          %v900 = vld [vmem:[%s2 + $0x18] sm:$0xff]
          %v901 = vld [vmem:[%s2 + $0x20] sm:$0xff]
          %v902 = vld [vmem:[%s2 + $0x28] sm:$0xff]
          %v903 = vld [vmem:[%s2 + $0x30] sm:$0xff]
          %v904 = vld [vmem:[%s2 + $0x38] sm:$0xff]
          %v905 = vadd.f32 %v889, 1e-05
          %v906 = vadd.f32 %v890, 1e-05
          %v907 = vadd.f32 %v891, 1e-05
          %v908 = vadd.f32 %v892, 1e-05
          %v909 = vadd.f32 %v893, 1e-05
          %v910 = vadd.f32 %v894, 1e-05
          %v911 = vadd.f32 %v895, 1e-05
          %v912 = vadd.f32 %v896, 1e-05
          %v913 = vrsqrt.pop %v905
          %v914 = vrsqrt.pop %v906
          %v915 = vrsqrt.pop %v907
          %v916 = vrsqrt.pop %v908
          %v917 = vrsqrt.pop %v909
          %v918 = vrsqrt.pop %v910
          %v919 = vrsqrt.pop %v911
          %v920 = vrsqrt.pop %v912
          %v921 = vmul.f32 %v897, %v913
          %v922 = vmul.f32 %v898, %v914
          %v923 = vmul.f32 %v899, %v915
          %v924 = vmul.f32 %v900, %v916
          %v925 = vmul.f32 %v901, %v917
          %v926 = vmul.f32 %v902, %v918
          %v927 = vmul.f32 %v903, %v919
          %v928 = vmul.f32 %v904, %v920
          %vm929 = vcmask 7168
          %930 = vst.msk [vmem:[#allocation4] sm:$0xff] %vm929, %v921
          %931 = vst.msk [vmem:[#allocation4 + $0x8] sm:$0xff] %vm929, %v922
          %932 = vst.msk [vmem:[#allocation4 + $0x10] sm:$0xff] %vm929, %v923
          %933 = vst.msk [vmem:[#allocation4 + $0x18] sm:$0xff] %vm929, %v924
          %934 = vst.msk [vmem:[#allocation4 + $0x20] sm:$0xff] %vm929, %v925
          %935 = vst.msk [vmem:[#allocation4 + $0x28] sm:$0xff] %vm929, %v926
          %936 = vst.msk [vmem:[#allocation4 + $0x30] sm:$0xff] %vm929, %v927
          %937 = vst.msk [vmem:[#allocation4 + $0x38] sm:$0xff] %vm929, %v928
          %v938 = vld [vmem:[%s3] sm:$0xff]
          %v939 = vld [vmem:[%s3 + $0x8] sm:$0xff]
          %v940 = vld [vmem:[%s3 + $0x10] sm:$0xff]
          %v941 = vld [vmem:[%s3 + $0x18] sm:$0xff]
          %v942 = vld [vmem:[%s3 + $0x20] sm:$0xff]
          %v943 = vld [vmem:[%s3 + $0x28] sm:$0xff]
          %v944 = vld [vmem:[%s3 + $0x30] sm:$0xff]
          %v945 = vld [vmem:[%s3 + $0x38] sm:$0xff]
          %v946 = vmul.f32 %v849, %v921
          %v947 = vmul.f32 %v850, %v922
          %v948 = vmul.f32 %v851, %v923
          %v949 = vmul.f32 %v852, %v924
          %v950 = vmul.f32 %v853, %v925
          %v951 = vmul.f32 %v854, %v926
          %v952 = vmul.f32 %v855, %v927
          %v953 = vmul.f32 %v856, %v928
          %v954 = vsub.f32 %v938, %v946
          %v955 = vsub.f32 %v939, %v947
          %v956 = vsub.f32 %v940, %v948
          %v957 = vsub.f32 %v941, %v949
          %v958 = vsub.f32 %v942, %v950
          %v959 = vsub.f32 %v943, %v951
          %v960 = vsub.f32 %v944, %v952
          %v961 = vsub.f32 %v945, %v953
          %962 = vst.msk [vmem:[#allocation5] sm:$0xff] %vm929, %v954
          %963 = vst.msk [vmem:[#allocation5 + $0x8] sm:$0xff] %vm929, %v955
          %964 = vst.msk [vmem:[#allocation5 + $0x10] sm:$0xff] %vm929, %v956
          %965 = vst.msk [vmem:[#allocation5 + $0x18] sm:$0xff] %vm929, %v957
          %966 = vst.msk [vmem:[#allocation5 + $0x20] sm:$0xff] %vm929, %v958
          %967 = vst.msk [vmem:[#allocation5 + $0x28] sm:$0xff] %vm929, %v959
          %968 = vst.msk [vmem:[#allocation5 + $0x30] sm:$0xff] %vm929, %v960
          %969 = vst.msk [vmem:[#allocation5 + $0x38] sm:$0xff] %vm929, %v961
        $region52: #{official_discriminator_forward.8} parent=47 // pred_fallthru
          _
        %v970 = vld [vmem:[#allocation4] sm:$0xff]
        %v971 = vld [vmem:[#allocation4 + $0x8] sm:$0xff]
        %v972 = vld [vmem:[#allocation4 + $0x10] sm:$0xff]
        %v973 = vld [vmem:[#allocation4 + $0x18] sm:$0xff]
        %v974 = vld [vmem:[#allocation4 + $0x20] sm:$0xff]
        %v975 = vld [vmem:[#allocation4 + $0x28] sm:$0xff]
        %v976 = vld [vmem:[#allocation4 + $0x30] sm:$0xff]
        %v977 = vld [vmem:[#allocation4 + $0x38] sm:$0xff]
        %979 = vset.pattern.permute.xlu0 0
        %980 = vperm.xlu0 %979, %v970
        %v981 = vpop.permute.xlu0 %980
        %984 = vset.pattern.permute.xlu0 0
        %985 = vperm.xlu0 %984, %v971
        %v986 = vpop.permute.xlu0 %985
        %989 = vset.pattern.permute.xlu0 0
        %990 = vperm.xlu0 %989, %v972
        %v991 = vpop.permute.xlu0 %990
        %994 = vset.pattern.permute.xlu0 0
        %995 = vperm.xlu0 %994, %v973
        %v996 = vpop.permute.xlu0 %995
        %999 = vset.pattern.permute.xlu0 0
        %1000 = vperm.xlu0 %999, %v974
        %v1001 = vpop.permute.xlu0 %1000
        %1004 = vset.pattern.permute.xlu0 0
        %1005 = vperm.xlu0 %1004, %v975
        %v1006 = vpop.permute.xlu0 %1005
        %1009 = vset.pattern.permute.xlu0 0
        %1010 = vperm.xlu0 %1009, %v976
        %v1011 = vpop.permute.xlu0 %1010
        %1014 = vset.pattern.permute.xlu0 0
        %1015 = vperm.xlu0 %1014, %v977
        %v1016 = vpop.permute.xlu0 %1015
        %v1018 = vmul.f32 %v663, %v981
        %v1019 = vmul.f32 %v666, %v986
        %v1020 = vmul.f32 %v671, %v991
        %v1021 = vmul.f32 %v674, %v996
        %v1022 = vmul.f32 %v679, %v1001
        %v1023 = vmul.f32 %v682, %v1006
        %v1024 = vmul.f32 %v687, %v1011
        %v1025 = vmul.f32 %v690, %v1016
        %v1026 = vld [vmem:[#allocation5] sm:$0xff]
        %v1027 = vld [vmem:[#allocation5 + $0x8] sm:$0xff]
        %v1028 = vld [vmem:[#allocation5 + $0x10] sm:$0xff]
        %v1029 = vld [vmem:[#allocation5 + $0x18] sm:$0xff]
        %v1030 = vld [vmem:[#allocation5 + $0x20] sm:$0xff]
        %v1031 = vld [vmem:[#allocation5 + $0x28] sm:$0xff]
        %v1032 = vld [vmem:[#allocation5 + $0x30] sm:$0xff]
        %v1033 = vld [vmem:[#allocation5 + $0x38] sm:$0xff]
        %1035 = vset.pattern.permute.xlu0 0
        %1036 = vperm.xlu0 %1035, %v1026
        %v1037 = vpop.permute.xlu0 %1036
        %1040 = vset.pattern.permute.xlu0 0
        %1041 = vperm.xlu0 %1040, %v1027
        %v1042 = vpop.permute.xlu0 %1041
        %1045 = vset.pattern.permute.xlu0 0
        %1046 = vperm.xlu0 %1045, %v1028
        %v1047 = vpop.permute.xlu0 %1046
        %1050 = vset.pattern.permute.xlu0 0
        %1051 = vperm.xlu0 %1050, %v1029
        %v1052 = vpop.permute.xlu0 %1051
        %1055 = vset.pattern.permute.xlu0 0
        %1056 = vperm.xlu0 %1055, %v1030
        %v1057 = vpop.permute.xlu0 %1056
        %1060 = vset.pattern.permute.xlu0 0
        %1061 = vperm.xlu0 %1060, %v1031
        %v1062 = vpop.permute.xlu0 %1061
        %1065 = vset.pattern.permute.xlu0 0
        %1066 = vperm.xlu0 %1065, %v1032
        %v1067 = vpop.permute.xlu0 %1066
        %1070 = vset.pattern.permute.xlu0 0
        %1071 = vperm.xlu0 %1070, %v1033
        %v1072 = vpop.permute.xlu0 %1071
        %v1074 = vadd.f32 %v1018, %v1037
        %v1075 = vadd.f32 %v1019, %v1042
        %v1076 = vadd.f32 %v1020, %v1047
        %v1077 = vadd.f32 %v1021, %v1052
        %v1078 = vadd.f32 %v1022, %v1057
        %v1079 = vadd.f32 %v1023, %v1062
        %v1080 = vadd.f32 %v1024, %v1067
        %v1081 = vadd.f32 %v1025, %v1072
        %vm1082 = vcmp.gt.f32.partialorder %v1074, 0.0
        %vm1083 = vcmp.gt.f32.partialorder %v1075, 0.0
        %vm1084 = vcmp.gt.f32.partialorder %v1076, 0.0
        %vm1085 = vcmp.gt.f32.partialorder %v1077, 0.0
        %vm1086 = vcmp.gt.f32.partialorder %v1078, 0.0
        %vm1087 = vcmp.gt.f32.partialorder %v1079, 0.0
        %vm1088 = vcmp.gt.f32.partialorder %v1080, 0.0
        %vm1089 = vcmp.gt.f32.partialorder %v1081, 0.0
        %v1090 = vmul.f32 %v1074, 0.2
        %v1091 = vmul.f32 %v1075, 0.2
        %v1092 = vmul.f32 %v1076, 0.2
        %v1093 = vmul.f32 %v1077, 0.2
        %v1094 = vmul.f32 %v1078, 0.2
        %v1095 = vmul.f32 %v1079, 0.2
        %v1096 = vmul.f32 %v1080, 0.2
        %v1097 = vmul.f32 %v1081, 0.2
        %v1098 = vsel %vm1082, %v1074, %v1090
        %v1099 = vsel %vm1083, %v1075, %v1091
        %v1100 = vsel %vm1084, %v1076, %v1092
        %v1101 = vsel %vm1085, %v1077, %v1093
        %v1102 = vsel %vm1086, %v1078, %v1094
        %v1103 = vsel %vm1087, %v1079, %v1095
        %v1104 = vsel %vm1088, %v1080, %v1096
        %v1105 = vsel %vm1089, %v1081, %v1097
        %v1106 = vpack.c.bf16 %v1099, %v1098
        %v1107 = vpack.c.bf16 %v1101, %v1100
        %v1108 = vpack.c.bf16 %v1103, %v1102
        %v1109 = vpack.c.bf16 %v1105, %v1104
        %v1114 = vunpack.c.l.b16 %v1106
        %v1115 = vunpack.c.h.b16 %v1106
        %v1116 = vunpack.c.l.b16 %v1107
        %v1117 = vunpack.c.h.b16 %v1107
        %v1118 = vunpack.c.l.b16 %v1108
        %v1119 = vunpack.c.h.b16 %v1108
        %v1120 = vunpack.c.l.b16 %v1109
        %v1121 = vunpack.c.h.b16 %v1109
        %v1122 = vpack.c.b16 %v1114, %v1114
        %v1123 = vpack.c.b16 %v1115, %v1115
        %v1124 = vpack.c.b16 %v1116, %v1116
        %v1125 = vpack.c.b16 %v1117, %v1117
        %v1126 = vpack.c.b16 %v1118, %v1118
        %v1127 = vpack.c.b16 %v1119, %v1119
        %v1128 = vpack.c.b16 %v1120, %v1120
        %v1129 = vpack.c.b16 %v1121, %v1121
        %vm1138 = vcmask 257024
        %1139 = vst.msk [vmem:[%s208] sm:$0xf] %vm1138, %v1122
        %1140 = vst.msk [vmem:[%s208 + $0x4] sm:$0xf] %vm1138, %v1123
        %1141 = vst.msk [vmem:[%s208 + $0x8] sm:$0xf] %vm1138, %v1124
        %1142 = vst.msk [vmem:[%s208 + $0xc] sm:$0xf] %vm1138, %v1125
        %1143 = vst.msk [vmem:[%s208 + $0x10] sm:$0xf] %vm1138, %v1126
        %1144 = vst.msk [vmem:[%s208 + $0x14] sm:$0xf] %vm1138, %v1127
        %1145 = vst.msk [vmem:[%s208 + $0x18] sm:$0xf] %vm1138, %v1128
        %1146 = vst.msk [vmem:[%s208 + $0x1c] sm:$0xf] %vm1138, %v1129
      $region48: #{official_discriminator_forward.8} parent=35 // pred_fallthru
        _
      %s1147 = smul.u32 %s20, %s19
      %p1148 = scmp.lt.s32.totalorder %s1147, 0
      %s1149 = scalar_select %p1148, %s1147, 0
      %s1150 = smul.addr %s1149, 4
      %s1151 = scalar_lea.vmem %s4, %s1150
      // Predicated region
      $region53: #{official_discriminator_forward.8} parent=35 // pred_check
        %p1152 = pneg %p136
      $region54: #{official_discriminator_forward.8} parent=35 // pred_check_branch
        %1154 = sbr.rel (%p1152) target = $region56
      $region55: #{official_discriminator_forward.8} parent=35 // pred_region
        %s1155 = smul.u32 %s20, %s19
      $region56: #{official_discriminator_forward.8} parent=35 // pred_fallthru
        _
    $region36: #{official_discriminator_forward.8} parent=5 // pred_fallthru
      _
    %p1156 = scmp.le.s32.totalorder 2, %s10
    // Predicated region
    $region57: #{official_discriminator_forward.8} parent=5 // pred_check
      %p1157 = pneg %p1156
    $region58: #{official_discriminator_forward.8} parent=5 // pred_check_branch
      %1159 = sbr.rel (%p1157) target = $region60
    $region59: #{official_discriminator_forward.8} parent=5 // pred_region
      %s1160 = ssub.s32 %s10, 2
      // Predicated region
      $region61: #{official_discriminator_forward.8} parent=59 // pred_check
        %p1161 = pneg %p142
      $region62: #{official_discriminator_forward.8} parent=59 // pred_check_branch
        %1163 = sbr.rel (%p1161) target = $region64
      $region63: #{official_discriminator_forward.8} parent=59 // pred_region
        %s1164 = smul.u32 %s22, %s21
        %p1165 = scmp.lt.s32.totalorder %s1164, 0
        %s1166 = scalar_select %p1165, %s1164, 0
        %s1167 = smul.addr %s1166, 4
        %s1168 = scalar_lea.vmem %s4, %s1167
      $region64: #{official_discriminator_forward.8} parent=59 // pred_fallthru
        _
    $region60: #{official_discriminator_forward.8} parent=5 // pred_fallthru
      _
  $region6: #{official_discriminator_forward.8} parent=0 // loop_footer
    %s14 = sadd.s32 1, %s10
  $region7: #{official_discriminator_forward.8} parent=0 // loop_footer_branch
    %9 = sbr.rel target = $region3
  $region8: #{official_discriminator_forward.8} parent=0 // loop_exit
    _

// kernel: official_discriminator_forward.9
$region0: #{official_discriminator_forward.9}
  #allocation0 [shape = 'u32[]', space=smem, size = 0x4, offset = 0x4, fixed_abs, tag = 'smem constant byte address 0x4 - core index']
  #allocation1 [shape = 'u32[144,128]{1,0:T(1,128)}', space=vmem, size = 0x12000, scoped, tag = 'internal scratch']
  %s0 = inlined_call_operand.vmem [shape: bf16[1,1024], index: 0, kind: input, shape index: {}]
  %s1 = inlined_call_operand.vmem [shape: bf16[1024,2], index: 1, kind: input, shape index: {}]
  %s2 = inlined_call_operand.hbm [shape: f32[1,2], index: 2, kind: output, shape index: {}]
  %s3 = sld [smem:[#allocation0]]
  $region18: #{official_discriminator_forward.9} parent=0
    _
  %s5 = ssub.s32 1, %s3
  %s6 = scalar_select 0, %s5, %s3
  $region1: #{official_discriminator_forward.9} parent=0
    #allocation2 [shape = 'u8[512]{0}', space=vmem, size = 0x400, scoped, tag = 'output window, operand 0, single buffered']
    #allocation3 [shape = 's32[1]{0}', space=sflag, size = 0x4, scoped, tag = 'scoped memory for official_discriminator_forward.9']
    %7 = vsyncpa [#allocation3], 0
    // Predicated region
    $region2: #{official_discriminator_forward.9} parent=1 // pred_check
      _
    $region3: #{official_discriminator_forward.9} parent=1 // pred_check_branch
      %9 = sbr.rel (0) target = $region5
    $region4: #{official_discriminator_forward.9} parent=1 // pred_region
      _
    $region5: #{official_discriminator_forward.9} parent=1 // pred_fallthru
      _
    // Predicated region
    $region6: #{official_discriminator_forward.9} parent=1 // pred_check
      _
    $region7: #{official_discriminator_forward.9} parent=1 // pred_check_branch
      %11 = sbr.rel (0) target = $region9
    $region8: #{official_discriminator_forward.9} parent=1 // pred_region
      _
    $region9: #{official_discriminator_forward.9} parent=1 // pred_fallthru
      _
    %v13 = vld [vmem:[%s0] sm:$0xff]
    %v14 = vld [vmem:[%s1] sm:$0xf]
    %v15 = vld [vmem:[%s1 + $0x4] sm:$0xf]
    %v16 = vld [vmem:[%s1 + $0x8] sm:$0xf]
    %v17 = vld [vmem:[%s1 + $0xc] sm:$0xf]
    %v18 = vld [vmem:[%s1 + $0x10] sm:$0xf]
    %v19 = vld [vmem:[%s1 + $0x14] sm:$0xf]
    %v20 = vld [vmem:[%s1 + $0x18] sm:$0xf]
    %v21 = vld [vmem:[%s1 + $0x1c] sm:$0xf]
    %v22 = vld [vmem:[%s1 + $0x20] sm:$0xf]
    %v23 = vld [vmem:[%s1 + $0x24] sm:$0xf]
    %v24 = vld [vmem:[%s1 + $0x28] sm:$0xf]
    %v25 = vld [vmem:[%s1 + $0x2c] sm:$0xf]
    %v26 = vld [vmem:[%s1 + $0x30] sm:$0xf]
    %v27 = vld [vmem:[%s1 + $0x34] sm:$0xf]
    %v28 = vld [vmem:[%s1 + $0x38] sm:$0xf]
    %v29 = vld [vmem:[%s1 + $0x3c] sm:$0xf]
    %v30 = vld [vmem:[%s1 + $0x40] sm:$0xf]
    %v31 = vld [vmem:[%s1 + $0x44] sm:$0xf]
    %v32 = vld [vmem:[%s1 + $0x48] sm:$0xf]
    %v33 = vld [vmem:[%s1 + $0x4c] sm:$0xf]
    %v34 = vld [vmem:[%s1 + $0x50] sm:$0xf]
    %v35 = vld [vmem:[%s1 + $0x54] sm:$0xf]
    %v36 = vld [vmem:[%s1 + $0x58] sm:$0xf]
    %v37 = vld [vmem:[%s1 + $0x5c] sm:$0xf]
    %v38 = vld [vmem:[%s1 + $0x60] sm:$0xf]
    %v39 = vld [vmem:[%s1 + $0x64] sm:$0xf]
    %v40 = vld [vmem:[%s1 + $0x68] sm:$0xf]
    %v41 = vld [vmem:[%s1 + $0x6c] sm:$0xf]
    %v42 = vld [vmem:[%s1 + $0x70] sm:$0xf]
    %v43 = vld [vmem:[%s1 + $0x74] sm:$0xf]
    %v44 = vld [vmem:[%s1 + $0x78] sm:$0xf]
    %v45 = vld [vmem:[%s1 + $0x7c] sm:$0xf]
    %v46 = vld [vmem:[%s1 + $0x80] sm:$0xf]
    %v47 = vld [vmem:[%s1 + $0x84] sm:$0xf]
    %v48 = vld [vmem:[%s1 + $0x88] sm:$0xf]
    %v49 = vld [vmem:[%s1 + $0x8c] sm:$0xf]
    %v50 = vld [vmem:[%s1 + $0x90] sm:$0xf]
    %v51 = vld [vmem:[%s1 + $0x94] sm:$0xf]
    %v52 = vld [vmem:[%s1 + $0x98] sm:$0xf]
    %v53 = vld [vmem:[%s1 + $0x9c] sm:$0xf]
    %v54 = vld [vmem:[%s1 + $0xa0] sm:$0xf]
    %v55 = vld [vmem:[%s1 + $0xa4] sm:$0xf]
    %v56 = vld [vmem:[%s1 + $0xa8] sm:$0xf]
    %v57 = vld [vmem:[%s1 + $0xac] sm:$0xf]
    %v58 = vld [vmem:[%s1 + $0xb0] sm:$0xf]
    %v59 = vld [vmem:[%s1 + $0xb4] sm:$0xf]
    %v60 = vld [vmem:[%s1 + $0xb8] sm:$0xf]
    %v61 = vld [vmem:[%s1 + $0xbc] sm:$0xf]
    %v62 = vld [vmem:[%s1 + $0xc0] sm:$0xf]
    %v63 = vld [vmem:[%s1 + $0xc4] sm:$0xf]
    %v64 = vld [vmem:[%s1 + $0xc8] sm:$0xf]
    %v65 = vld [vmem:[%s1 + $0xcc] sm:$0xf]
    %v66 = vld [vmem:[%s1 + $0xd0] sm:$0xf]
    %v67 = vld [vmem:[%s1 + $0xd4] sm:$0xf]
    %v68 = vld [vmem:[%s1 + $0xd8] sm:$0xf]
    %v69 = vld [vmem:[%s1 + $0xdc] sm:$0xf]
    %v70 = vld [vmem:[%s1 + $0xe0] sm:$0xf]
    %v71 = vld [vmem:[%s1 + $0xe4] sm:$0xf]
    %v72 = vld [vmem:[%s1 + $0xe8] sm:$0xf]
    %v73 = vld [vmem:[%s1 + $0xec] sm:$0xf]
    %v74 = vld [vmem:[%s1 + $0xf0] sm:$0xf]
    %v75 = vld [vmem:[%s1 + $0xf4] sm:$0xf]
    %v76 = vld [vmem:[%s1 + $0xf8] sm:$0xf]
    %v77 = vld [vmem:[%s1 + $0xfc] sm:$0xf]
    %v78 = vld [vmem:[%s1 + $0x100] sm:$0xf]
    %v79 = vld [vmem:[%s1 + $0x104] sm:$0xf]
    %v80 = vld [vmem:[%s1 + $0x108] sm:$0xf]
    %v81 = vld [vmem:[%s1 + $0x10c] sm:$0xf]
    %v82 = vld [vmem:[%s1 + $0x110] sm:$0xf]
    %v83 = vld [vmem:[%s1 + $0x114] sm:$0xf]
    %v84 = vld [vmem:[%s1 + $0x118] sm:$0xf]
    %v85 = vld [vmem:[%s1 + $0x11c] sm:$0xf]
    %v86 = vld [vmem:[%s1 + $0x120] sm:$0xf]
    %v87 = vld [vmem:[%s1 + $0x124] sm:$0xf]
    %v88 = vld [vmem:[%s1 + $0x128] sm:$0xf]
    %v89 = vld [vmem:[%s1 + $0x12c] sm:$0xf]
    %v90 = vld [vmem:[%s1 + $0x130] sm:$0xf]
    %v91 = vld [vmem:[%s1 + $0x134] sm:$0xf]
    %v92 = vld [vmem:[%s1 + $0x138] sm:$0xf]
    %v93 = vld [vmem:[%s1 + $0x13c] sm:$0xf]
    %v94 = vld [vmem:[%s1 + $0x140] sm:$0xf]
    %v95 = vld [vmem:[%s1 + $0x144] sm:$0xf]
    %v96 = vld [vmem:[%s1 + $0x148] sm:$0xf]
    %v97 = vld [vmem:[%s1 + $0x14c] sm:$0xf]
    %v98 = vld [vmem:[%s1 + $0x150] sm:$0xf]
    %v99 = vld [vmem:[%s1 + $0x154] sm:$0xf]
    %v100 = vld [vmem:[%s1 + $0x158] sm:$0xf]
    %v101 = vld [vmem:[%s1 + $0x15c] sm:$0xf]
    %v102 = vld [vmem:[%s1 + $0x160] sm:$0xf]
    %v103 = vld [vmem:[%s1 + $0x164] sm:$0xf]
    %v104 = vld [vmem:[%s1 + $0x168] sm:$0xf]
    %v105 = vld [vmem:[%s1 + $0x16c] sm:$0xf]
    %v106 = vld [vmem:[%s1 + $0x170] sm:$0xf]
    %v107 = vld [vmem:[%s1 + $0x174] sm:$0xf]
    %v108 = vld [vmem:[%s1 + $0x178] sm:$0xf]
    %v109 = vld [vmem:[%s1 + $0x17c] sm:$0xf]
    %v110 = vld [vmem:[%s1 + $0x180] sm:$0xf]
    %v111 = vld [vmem:[%s1 + $0x184] sm:$0xf]
    %v112 = vld [vmem:[%s1 + $0x188] sm:$0xf]
    %v113 = vld [vmem:[%s1 + $0x18c] sm:$0xf]
    %v114 = vld [vmem:[%s1 + $0x190] sm:$0xf]
    %v115 = vld [vmem:[%s1 + $0x194] sm:$0xf]
    %v116 = vld [vmem:[%s1 + $0x198] sm:$0xf]
    %v117 = vld [vmem:[%s1 + $0x19c] sm:$0xf]
    %v118 = vld [vmem:[%s1 + $0x1a0] sm:$0xf]
    %v119 = vld [vmem:[%s1 + $0x1a4] sm:$0xf]
    %v120 = vld [vmem:[%s1 + $0x1a8] sm:$0xf]
    %v121 = vld [vmem:[%s1 + $0x1ac] sm:$0xf]
    %v122 = vld [vmem:[%s1 + $0x1b0] sm:$0xf]
    %v123 = vld [vmem:[%s1 + $0x1b4] sm:$0xf]
    %v124 = vld [vmem:[%s1 + $0x1b8] sm:$0xf]
    %v125 = vld [vmem:[%s1 + $0x1bc] sm:$0xf]
    %v126 = vld [vmem:[%s1 + $0x1c0] sm:$0xf]
    %v127 = vld [vmem:[%s1 + $0x1c4] sm:$0xf]
    %v128 = vld [vmem:[%s1 + $0x1c8] sm:$0xf]
    %v129 = vld [vmem:[%s1 + $0x1cc] sm:$0xf]
    %v130 = vld [vmem:[%s1 + $0x1d0] sm:$0xf]
    %v131 = vld [vmem:[%s1 + $0x1d4] sm:$0xf]
    %v132 = vld [vmem:[%s1 + $0x1d8] sm:$0xf]
    %v133 = vld [vmem:[%s1 + $0x1dc] sm:$0xf]
    %v134 = vld [vmem:[%s1 + $0x1e0] sm:$0xf]
    %v135 = vld [vmem:[%s1 + $0x1e4] sm:$0xf]
    %v136 = vld [vmem:[%s1 + $0x1e8] sm:$0xf]
    %v137 = vld [vmem:[%s1 + $0x1ec] sm:$0xf]
    %v138 = vld [vmem:[%s1 + $0x1f0] sm:$0xf]
    %v139 = vld [vmem:[%s1 + $0x1f4] sm:$0xf]
    %v140 = vld [vmem:[%s1 + $0x1f8] sm:$0xf]
    %v141 = vld [vmem:[%s1 + $0x1fc] sm:$0xf]
    %v143 = vcombine.high %v13, %v13
    %v145 = vunpack.c.l.s4 1966171168
    %v146 = vunpack.c.0.s8 %v145
    %v147 = vlaneseq
    %v148 = vshrl.u32 %v147, 7
    %v149 = vsub.s32 %v146, %v148
    %v150 = vrot.slane %v13, %v149
    %v152 = vunpack.c.l.s4 1966171168
    %v153 = vunpack.c.0.s8 %v152
    %v154 = vlaneseq
    %v155 = vshrl.u32 %v154, 7
    %v156 = vsub.s32 %v153, %v155
    %v157 = vrot.slane %v143, %v156
    %v158 = vcombine.high %v150, %v150
    %v159 = vcombine.high %v157, %v157
    %v161 = vunpack.c.l.s4 1966171168
    %v162 = vunpack.c.0.s8 %v161
    %v163 = vlaneseq
    %v164 = vshrl.u32 %v163, 7
    %v165 = vsub.s32 %v162, %v164
    %v166 = vrot.slane %v150, %v165
    %v168 = vunpack.c.l.s4 1966171168
    %v169 = vunpack.c.0.s8 %v168
    %v170 = vlaneseq
    %v171 = vshrl.u32 %v170, 7
    %v172 = vsub.s32 %v169, %v171
    %v173 = vrot.slane %v157, %v172
    %v175 = vunpack.c.l.s4 1966171168
    %v176 = vunpack.c.0.s8 %v175
    %v177 = vlaneseq
    %v178 = vshrl.u32 %v177, 7
    %v179 = vsub.s32 %v176, %v178
    %v180 = vrot.slane %v158, %v179
    %v182 = vunpack.c.l.s4 1966171168
    %v183 = vunpack.c.0.s8 %v182
    %v184 = vlaneseq
    %v185 = vshrl.u32 %v184, 7
    %v186 = vsub.s32 %v183, %v185
    %v187 = vrot.slane %v159, %v186
    %v188 = vcombine.high %v166, %v166
    %v189 = vcombine.high %v173, %v173
    %v190 = vcombine.high %v180, %v180
    %v191 = vcombine.high %v187, %v187
    %v328 = vunpack.c.l.b16 %v14
    %v329 = vunpack.c.l.b16 %v15
    %v330 = vunpack.c.l.b16 %v16
    %v331 = vunpack.c.l.b16 %v17
    %v332 = vunpack.c.l.b16 %v18
    %v333 = vunpack.c.l.b16 %v19
    %v334 = vunpack.c.l.b16 %v20
    %v335 = vunpack.c.l.b16 %v21
    %v336 = vunpack.c.l.b16 %v22
    %v337 = vunpack.c.l.b16 %v23
    %v338 = vunpack.c.l.b16 %v24
    %v339 = vunpack.c.l.b16 %v25
    %v340 = vunpack.c.l.b16 %v26
    %v341 = vunpack.c.l.b16 %v27
    %v342 = vunpack.c.l.b16 %v28
    %v343 = vunpack.c.l.b16 %v29
    %v344 = vunpack.c.l.b16 %v30
    %v345 = vunpack.c.l.b16 %v31
    %v346 = vunpack.c.l.b16 %v32
    %v347 = vunpack.c.l.b16 %v33
    %v348 = vunpack.c.l.b16 %v34
    %v349 = vunpack.c.l.b16 %v35
    %v350 = vunpack.c.l.b16 %v36
    %v351 = vunpack.c.l.b16 %v37
    %v352 = vunpack.c.l.b16 %v38
    %v353 = vunpack.c.l.b16 %v39
    %v354 = vunpack.c.l.b16 %v40
    %v355 = vunpack.c.l.b16 %v41
    %v356 = vunpack.c.l.b16 %v42
    %v357 = vunpack.c.l.b16 %v43
    %v358 = vunpack.c.l.b16 %v44
    %v359 = vunpack.c.l.b16 %v45
    %v360 = vunpack.c.l.b16 %v46
    %v361 = vunpack.c.l.b16 %v47
    %v362 = vunpack.c.l.b16 %v48
    %v363 = vunpack.c.l.b16 %v49
    %v364 = vunpack.c.l.b16 %v50
    %v365 = vunpack.c.l.b16 %v51
    %v366 = vunpack.c.l.b16 %v52
    %v367 = vunpack.c.l.b16 %v53
    %v368 = vunpack.c.l.b16 %v54
    %v369 = vunpack.c.l.b16 %v55
    %v370 = vunpack.c.l.b16 %v56
    %v371 = vunpack.c.l.b16 %v57
    %v372 = vunpack.c.l.b16 %v58
    %v373 = vunpack.c.l.b16 %v59
    %v374 = vunpack.c.l.b16 %v60
    %v375 = vunpack.c.l.b16 %v61
    %v376 = vunpack.c.l.b16 %v62
    %v377 = vunpack.c.l.b16 %v63
    %v378 = vunpack.c.l.b16 %v64
    %v379 = vunpack.c.l.b16 %v65
    %v380 = vunpack.c.l.b16 %v66
    %v381 = vunpack.c.l.b16 %v67
    %v382 = vunpack.c.l.b16 %v68
    %v383 = vunpack.c.l.b16 %v69
    %v384 = vunpack.c.l.b16 %v70
    %v385 = vunpack.c.l.b16 %v71
    %v386 = vunpack.c.l.b16 %v72
    %v387 = vunpack.c.l.b16 %v73
    %v388 = vunpack.c.l.b16 %v74
    %v389 = vunpack.c.l.b16 %v75
    %v390 = vunpack.c.l.b16 %v76
    %v391 = vunpack.c.l.b16 %v77
    %v392 = vunpack.c.l.b16 %v78
    %v393 = vunpack.c.l.b16 %v79
    %v394 = vunpack.c.l.b16 %v80
    %v395 = vunpack.c.l.b16 %v81
    %v396 = vunpack.c.l.b16 %v82
    %v397 = vunpack.c.l.b16 %v83
    %v398 = vunpack.c.l.b16 %v84
    %v399 = vunpack.c.l.b16 %v85
    %v400 = vunpack.c.l.b16 %v86
    %v401 = vunpack.c.l.b16 %v87
    %v402 = vunpack.c.l.b16 %v88
    %v403 = vunpack.c.l.b16 %v89
    %v404 = vunpack.c.l.b16 %v90
    %v405 = vunpack.c.l.b16 %v91
    %v406 = vunpack.c.l.b16 %v92
    %v407 = vunpack.c.l.b16 %v93
    %v408 = vunpack.c.l.b16 %v94
    %v409 = vunpack.c.l.b16 %v95
    %v410 = vunpack.c.l.b16 %v96
    %v411 = vunpack.c.l.b16 %v97
    %v412 = vunpack.c.l.b16 %v98
    %v413 = vunpack.c.l.b16 %v99
    %v414 = vunpack.c.l.b16 %v100
    %v415 = vunpack.c.l.b16 %v101
    %v416 = vunpack.c.l.b16 %v102
    %v417 = vunpack.c.l.b16 %v103
    %v418 = vunpack.c.l.b16 %v104
    %v419 = vunpack.c.l.b16 %v105
    %v420 = vunpack.c.l.b16 %v106
    %v421 = vunpack.c.l.b16 %v107
    %v422 = vunpack.c.l.b16 %v108
    %v423 = vunpack.c.l.b16 %v109
    %v424 = vunpack.c.l.b16 %v110
    %v425 = vunpack.c.l.b16 %v111
    %v426 = vunpack.c.l.b16 %v112
    %v427 = vunpack.c.l.b16 %v113
    %v428 = vunpack.c.l.b16 %v114
    %v429 = vunpack.c.l.b16 %v115
    %v430 = vunpack.c.l.b16 %v116
    %v431 = vunpack.c.l.b16 %v117
    %v432 = vunpack.c.l.b16 %v118
    %v433 = vunpack.c.l.b16 %v119
    %v434 = vunpack.c.l.b16 %v120
    %v435 = vunpack.c.l.b16 %v121
    %v436 = vunpack.c.l.b16 %v122
    %v437 = vunpack.c.l.b16 %v123
    %v438 = vunpack.c.l.b16 %v124
    %v439 = vunpack.c.l.b16 %v125
    %v440 = vunpack.c.l.b16 %v126
    %v441 = vunpack.c.l.b16 %v127
    %v442 = vunpack.c.l.b16 %v128
    %v443 = vunpack.c.l.b16 %v129
    %v444 = vunpack.c.l.b16 %v130
    %v445 = vunpack.c.l.b16 %v131
    %v446 = vunpack.c.l.b16 %v132
    %v447 = vunpack.c.l.b16 %v133
    %v448 = vunpack.c.l.b16 %v134
    %v449 = vunpack.c.l.b16 %v135
    %v450 = vunpack.c.l.b16 %v136
    %v451 = vunpack.c.l.b16 %v137
    %v452 = vunpack.c.l.b16 %v138
    %v453 = vunpack.c.l.b16 %v139
    %v454 = vunpack.c.l.b16 %v140
    %v455 = vunpack.c.l.b16 %v141
    %v456 = vpack.c.b16 %v329, %v328
    %v457 = vpack.c.b16 %v331, %v330
    %v458 = vpack.c.b16 %v333, %v332
    %v459 = vpack.c.b16 %v335, %v334
    %v460 = vpack.c.b16 %v337, %v336
    %v461 = vpack.c.b16 %v339, %v338
    %v462 = vpack.c.b16 %v341, %v340
    %v463 = vpack.c.b16 %v343, %v342
    %v464 = vpack.c.b16 %v345, %v344
    %v465 = vpack.c.b16 %v347, %v346
    %v466 = vpack.c.b16 %v349, %v348
    %v467 = vpack.c.b16 %v351, %v350
    %v468 = vpack.c.b16 %v353, %v352
    %v469 = vpack.c.b16 %v355, %v354
    %v470 = vpack.c.b16 %v357, %v356
    %v471 = vpack.c.b16 %v359, %v358
    %v472 = vpack.c.b16 %v361, %v360
    %v473 = vpack.c.b16 %v363, %v362
    %v474 = vpack.c.b16 %v365, %v364
    %v475 = vpack.c.b16 %v367, %v366
    %v476 = vpack.c.b16 %v369, %v368
    %v477 = vpack.c.b16 %v371, %v370
    %v478 = vpack.c.b16 %v373, %v372
    %v479 = vpack.c.b16 %v375, %v374
    %v480 = vpack.c.b16 %v377, %v376
    %v481 = vpack.c.b16 %v379, %v378
    %v482 = vpack.c.b16 %v381, %v380
    %v483 = vpack.c.b16 %v383, %v382
    %v484 = vpack.c.b16 %v385, %v384
    %v485 = vpack.c.b16 %v387, %v386
    %v486 = vpack.c.b16 %v389, %v388
    %v487 = vpack.c.b16 %v391, %v390
    %v488 = vpack.c.b16 %v393, %v392
    %v489 = vpack.c.b16 %v395, %v394
    %v490 = vpack.c.b16 %v397, %v396
    %v491 = vpack.c.b16 %v399, %v398
    %v492 = vpack.c.b16 %v401, %v400
    %v493 = vpack.c.b16 %v403, %v402
    %v494 = vpack.c.b16 %v405, %v404
    %v495 = vpack.c.b16 %v407, %v406
    %v496 = vpack.c.b16 %v409, %v408
    %v497 = vpack.c.b16 %v411, %v410
    %v498 = vpack.c.b16 %v413, %v412
    %v499 = vpack.c.b16 %v415, %v414
    %v500 = vpack.c.b16 %v417, %v416
    %v501 = vpack.c.b16 %v419, %v418
    %v502 = vpack.c.b16 %v421, %v420
    %v503 = vpack.c.b16 %v423, %v422
    %v504 = vpack.c.b16 %v425, %v424
    %v505 = vpack.c.b16 %v427, %v426
    %v506 = vpack.c.b16 %v429, %v428
    %v507 = vpack.c.b16 %v431, %v430
    %v508 = vpack.c.b16 %v433, %v432
    %v509 = vpack.c.b16 %v435, %v434
    %v510 = vpack.c.b16 %v437, %v436
    %v511 = vpack.c.b16 %v439, %v438
    %v512 = vpack.c.b16 %v441, %v440
    %v513 = vpack.c.b16 %v443, %v442
    %v514 = vpack.c.b16 %v445, %v444
    %v515 = vpack.c.b16 %v447, %v446
    %v516 = vpack.c.b16 %v449, %v448
    %v517 = vpack.c.b16 %v451, %v450
    %v518 = vpack.c.b16 %v453, %v452
    %v519 = vpack.c.b16 %v455, %v454
    %584 = vmatprep.subr.bf16.mxu0 0
    %585 = vmatpush1.bf16.msra.mxu0 %v456
    %586 = vmatprep.subr.bf16.mxu0 0
    %587 = vmatpush1.bf16.msra.mxu0 %v457
    %588 = vmatprep.subr.bf16.mxu0 0
    %589 = vmatpush1.bf16.msra.mxu0 %v458
    %590 = vmatprep.subr.bf16.mxu0 0
    %591 = vmatpush1.bf16.msra.mxu0 %v459
    %592 = vmatprep.subr.bf16.mxu0 0
    %593 = vmatpush1.bf16.msra.mxu0 %v460
    %594 = vmatprep.subr.bf16.mxu0 0
    %595 = vmatpush1.bf16.msra.mxu0 %v461
    %596 = vmatprep.subr.bf16.mxu0 0
    %597 = vmatpush1.bf16.msra.mxu0 %v462
    %598 = vmatprep.subr.bf16.mxu0 0
    %599 = vmatpush1.bf16.msra.mxu0 %v463
    %600 = vmatprep.subr.bf16.mxu0 0
    %601 = vmatpush1.bf16.msra.mxu0 %v464
    %602 = vmatprep.subr.bf16.mxu0 0
    %603 = vmatpush1.bf16.msra.mxu0 %v465
    %604 = vmatprep.subr.bf16.mxu0 0
    %605 = vmatpush1.bf16.msra.mxu0 %v466
    %606 = vmatprep.subr.bf16.mxu0 0
    %607 = vmatpush1.bf16.msra.mxu0 %v467
    %608 = vmatprep.subr.bf16.mxu0 0
    %609 = vmatpush1.bf16.msra.mxu0 %v468
    %610 = vmatprep.subr.bf16.mxu0 0
    %611 = vmatpush1.bf16.msra.mxu0 %v469
    %612 = vmatprep.subr.bf16.mxu0 0
    %613 = vmatpush1.bf16.msra.mxu0 %v470
    %614 = vmatprep.subr.bf16.mxu0 0
    %615 = vmatpush1.bf16.msra.mxu0 %v471
    %616 = vmatprep.mubr.bf16.mxu0 %v180
    %617 = vmatmul.mubr.bf16.gmra.mrb[0].mxu0 %v166
    %v618 = vpop.f32.mrb[0].mxu0
    %v619 = vadd.f32 0.0, %v618
    %v620 = vpop.f32.mrb[0].mxu0
    %v621 = vpop.f32.mrb[0].mxu0
    %v622 = vpop.f32.mrb[0].mxu0
    %623 = vdwg.mxu0
    %624 = vmatprep.subr.bf16.mxu0 0
    %625 = vmatpush1.bf16.msra.mxu0 %v472
    %626 = vmatprep.subr.bf16.mxu0 0
    %627 = vmatpush1.bf16.msra.mxu0 %v473
    %628 = vmatprep.subr.bf16.mxu0 0
    %629 = vmatpush1.bf16.msra.mxu0 %v474
    %630 = vmatprep.subr.bf16.mxu0 0
    %631 = vmatpush1.bf16.msra.mxu0 %v475
    %632 = vmatprep.subr.bf16.mxu0 0
    %633 = vmatpush1.bf16.msra.mxu0 %v476
    %634 = vmatprep.subr.bf16.mxu0 0
    %635 = vmatpush1.bf16.msra.mxu0 %v477
    %636 = vmatprep.subr.bf16.mxu0 0
    %637 = vmatpush1.bf16.msra.mxu0 %v478
    %638 = vmatprep.subr.bf16.mxu0 0
    %639 = vmatpush1.bf16.msra.mxu0 %v479
    %640 = vmatprep.subr.bf16.mxu0 0
    %641 = vmatpush1.bf16.msra.mxu0 %v480
    %642 = vmatprep.subr.bf16.mxu0 0
    %643 = vmatpush1.bf16.msra.mxu0 %v481
    %644 = vmatprep.subr.bf16.mxu0 0
    %645 = vmatpush1.bf16.msra.mxu0 %v482
    %646 = vmatprep.subr.bf16.mxu0 0
    %647 = vmatpush1.bf16.msra.mxu0 %v483
    %648 = vmatprep.subr.bf16.mxu0 0
    %649 = vmatpush1.bf16.msra.mxu0 %v484
    %650 = vmatprep.subr.bf16.mxu0 0
    %651 = vmatpush1.bf16.msra.mxu0 %v485
    %652 = vmatprep.subr.bf16.mxu0 0
    %653 = vmatpush1.bf16.msra.mxu0 %v486
    %654 = vmatprep.subr.bf16.mxu0 0
    %655 = vmatpush1.bf16.msra.mxu0 %v487
    %656 = vmatprep.mubr.bf16.mxu0 %v190
    %657 = vmatmul.mubr.bf16.gmra.mrb[0].mxu0 %v188
    %v658 = vpop.f32.mrb[0].mxu0
    %v659 = vadd.f32 %v619, %v658
    %v660 = vpop.f32.mrb[0].mxu0
    %v661 = vpop.f32.mrb[0].mxu0
    %v662 = vpop.f32.mrb[0].mxu0
    %663 = vdwg.mxu0
    %664 = vmatprep.subr.bf16.mxu0 0
    %665 = vmatpush1.bf16.msra.mxu0 %v488
    %666 = vmatprep.subr.bf16.mxu0 0
    %667 = vmatpush1.bf16.msra.mxu0 %v489
    %668 = vmatprep.subr.bf16.mxu0 0
    %669 = vmatpush1.bf16.msra.mxu0 %v490
    %670 = vmatprep.subr.bf16.mxu0 0
    %671 = vmatpush1.bf16.msra.mxu0 %v491
    %672 = vmatprep.subr.bf16.mxu0 0
    %673 = vmatpush1.bf16.msra.mxu0 %v492
    %674 = vmatprep.subr.bf16.mxu0 0
    %675 = vmatpush1.bf16.msra.mxu0 %v493
    %676 = vmatprep.subr.bf16.mxu0 0
    %677 = vmatpush1.bf16.msra.mxu0 %v494
    %678 = vmatprep.subr.bf16.mxu0 0
    %679 = vmatpush1.bf16.msra.mxu0 %v495
    %680 = vmatprep.subr.bf16.mxu0 0
    %681 = vmatpush1.bf16.msra.mxu0 %v496
    %682 = vmatprep.subr.bf16.mxu0 0
    %683 = vmatpush1.bf16.msra.mxu0 %v497
    %684 = vmatprep.subr.bf16.mxu0 0
    %685 = vmatpush1.bf16.msra.mxu0 %v498
    %686 = vmatprep.subr.bf16.mxu0 0
    %687 = vmatpush1.bf16.msra.mxu0 %v499
    %688 = vmatprep.subr.bf16.mxu0 0
    %689 = vmatpush1.bf16.msra.mxu0 %v500
    %690 = vmatprep.subr.bf16.mxu0 0
    %691 = vmatpush1.bf16.msra.mxu0 %v501
    %692 = vmatprep.subr.bf16.mxu0 0
    %693 = vmatpush1.bf16.msra.mxu0 %v502
    %694 = vmatprep.subr.bf16.mxu0 0
    %695 = vmatpush1.bf16.msra.mxu0 %v503
    %696 = vmatprep.mubr.bf16.mxu0 %v187
    %697 = vmatmul.mubr.bf16.gmra.mrb[0].mxu0 %v173
    %v698 = vpop.f32.mrb[0].mxu0
    %v699 = vadd.f32 %v659, %v698
    %v700 = vpop.f32.mrb[0].mxu0
    %v701 = vpop.f32.mrb[0].mxu0
    %v702 = vpop.f32.mrb[0].mxu0
    %703 = vdwg.mxu0
    %704 = vmatprep.subr.bf16.mxu0 0
    %705 = vmatpush1.bf16.msra.mxu0 %v504
    %706 = vmatprep.subr.bf16.mxu0 0
    %707 = vmatpush1.bf16.msra.mxu0 %v505
    %708 = vmatprep.subr.bf16.mxu0 0
    %709 = vmatpush1.bf16.msra.mxu0 %v506
    %710 = vmatprep.subr.bf16.mxu0 0
    %711 = vmatpush1.bf16.msra.mxu0 %v507
    %712 = vmatprep.subr.bf16.mxu0 0
    %713 = vmatpush1.bf16.msra.mxu0 %v508
    %714 = vmatprep.subr.bf16.mxu0 0
    %715 = vmatpush1.bf16.msra.mxu0 %v509
    %716 = vmatprep.subr.bf16.mxu0 0
    %717 = vmatpush1.bf16.msra.mxu0 %v510
    %718 = vmatprep.subr.bf16.mxu0 0
    %719 = vmatpush1.bf16.msra.mxu0 %v511
    %720 = vmatprep.subr.bf16.mxu0 0
    %721 = vmatpush1.bf16.msra.mxu0 %v512
    %722 = vmatprep.subr.bf16.mxu0 0
    %723 = vmatpush1.bf16.msra.mxu0 %v513
    %724 = vmatprep.subr.bf16.mxu0 0
    %725 = vmatpush1.bf16.msra.mxu0 %v514
    %726 = vmatprep.subr.bf16.mxu0 0
    %727 = vmatpush1.bf16.msra.mxu0 %v515
    %728 = vmatprep.subr.bf16.mxu0 0
    %729 = vmatpush1.bf16.msra.mxu0 %v516
    %730 = vmatprep.subr.bf16.mxu0 0
    %731 = vmatpush1.bf16.msra.mxu0 %v517
    %732 = vmatprep.subr.bf16.mxu0 0
    %733 = vmatpush1.bf16.msra.mxu0 %v518
    %734 = vmatprep.subr.bf16.mxu0 0
    %735 = vmatpush1.bf16.msra.mxu0 %v519
    %736 = vmatprep.mubr.bf16.mxu0 %v191
    %737 = vmatmul.mubr.bf16.gmra.mrb[0].mxu0 %v189
    %v738 = vpop.f32.mrb[0].mxu0
    %v739 = vadd.f32 %v699, %v738
    %v740 = vpop.f32.mrb[0].mxu0
    %v741 = vpop.f32.mrb[0].mxu0
    %v742 = vpop.f32.mrb[0].mxu0
    %743 = vdwg.mxu0
    %v744 = vsub.f32 0.0, %v739
    %v745 = vmul.f32 %v744, 1.442695
    %v746 = vpow.pop %v745
    %v747 = vadd.f32 %v746, 1.0
    %v748 = vrcp.pop %v747
    %v749 = vmul.f32 1.0, %v748
    %vm750 = vcmask 8192
    %751 = vst.msk [vmem:[#allocation2] sm:$0x1] %vm750, %v749
    // Predicated region
    $region10: #{official_discriminator_forward.9} parent=1 // pred_check
      _
    $region11: #{official_discriminator_forward.9} parent=1 // pred_check_branch
      %753 = sbr.rel (0) target = $region13
    $region12: #{official_discriminator_forward.9} parent=1 // pred_region
      %s755 = ssub.s32 16, 16
      %756 = vsyncadd [#allocation3], %s755
      %s758 = sshll.u32 [#allocation2], 4
      %s759 = int_to_ptr.vmem [resolvable:$true] %s758
      %761 = dma.vmem_to_hbm [thread:$0]  %s759, 16, %s2, [#allocation3]
    $region13: #{official_discriminator_forward.9} parent=1 // pred_fallthru
      _
    // Predicated region
    $region14: #{official_discriminator_forward.9} parent=1 // pred_check
      _
    $region15: #{official_discriminator_forward.9} parent=1 // pred_check_branch
      %763 = sbr.rel (0) target = $region17
    $region16: #{official_discriminator_forward.9} parent=1 // pred_region
      %764 = dma.done [#allocation3], 16
    $region17: #{official_discriminator_forward.9} parent=1 // pred_fallthru
      _
    %765 = vsyncpa [#allocation3], 1

</llo_original>
